<compile_context>
chip_gen: v6e
topology: v6e:2x2x1
jax: 0.10.0
libtpu: 0.0.40
codegen_flags: <defaults>
</compile_context>

<pallas_src>
import functools

import jax
import jax.numpy as jnp
from jax import lax
from jax.experimental import pallas as pl
from jax.experimental.pallas import tpu as pltpu

EPS = 1e-5


def _silu(v):
    return v * jax.nn.sigmoid(v)


def ema_pro_kernel(x_ref, w1_ref, b1_ref, w2_ref, b2_ref, gng_ref, gnb_ref,
                   j_ref, shw_ref, bh_ref, mask_ref, o_ref, *,
                   shifts, h, taps_bf16):
    f32 = jnp.float32
    x = x_ref[...]                      # (R, HW)  R = bt*gc rows, lane-dense
    w1 = w1_ref[...]                    # (R, R)   block-diag 1x1 conv (BN folded)
    j_mat = j_ref[...]                  # (R, R)   block-diag ones (per-slice sums)
    mask = mask_ref[...]                # (9, HW)  3x3 tap validity masks

    # ---- directional pooling + conv_reduce (1x1 conv + BN + SiLU) ----------
    # pool_h / pool_w fused into ONE matmul against [S_h | S_w]; one 1x1-conv
    # matmul on the concatenated result; static lane slice for the two gates.
    pooled = jnp.dot(x, shw_ref[...], preferred_element_type=f32)     # (R, H+W)
    z = jnp.dot(w1, pooled, preferred_element_type=f32) + b1_ref[...]  # (R, H+W)
    sg = jax.nn.sigmoid(_silu(z))
    # PyTorch broadcast quirk: both gates index the row dim (requires H==W).
    gate = sg[:, :h] * sg[:, h:]                                       # (R, H)
    gate_flat = jnp.dot(gate, bh_ref[...], preferred_element_type=f32)  # (R, HW)

    sa = x * gate_flat
    # GroupNorm(gc, gc) == per-(slice, channel) instance norm == per-row norm.
    # Single-pass statistics: var = E[x^2] - mu^2 (one fewer (R, HW) pass).
    mu = jnp.mean(sa, axis=1, keepdims=True)
    var = jnp.mean(sa * sa, axis=1, keepdims=True) - mu * mu
    sa = (sa - mu) * lax.rsqrt(var + EPS)
    sa = sa * gng_ref[...] + gnb_ref[...]

    # ---- conv_spatial: 3x3 conv (pad=1) + BN + SiLU -------------------------
    # 9 taps built in-register with lane rolls + destination-index edge masks
    # (masks zero every wrapped-in lane, which is what makes the roll trick
    # correct), then fused into a single bf16 MXU matmul.
    taps = []
    for k in range(9):
        rolled = x if shifts[k] == 0 else pltpu.roll(x, shifts[k], axis=1)
        if taps_bf16:
            # bf16 VPU (v6e/v7x): mask multiply + patch build in bf16 halves
            # VALU slots and vreg/VMEM pressure; rolls stay f32.
            taps.append(rolled.astype(jnp.bfloat16) * mask[k:k + 1])
        else:
            # v5e: no bf16 VPU -> multiply in f32, cast once.
            taps.append((rolled * mask[k:k + 1]).astype(jnp.bfloat16))
    patch = jnp.concatenate(taps, axis=0)                              # (9R, HW)
    conv = jnp.dot(w2_ref[...], patch, preferred_element_type=f32)     # (R, HW)
    conv = _silu(conv + b2_ref[...])

    # ---- channel attention: softmax over channels of the global avg pool ----
    def chan_attn(t):                                                  # (R, HW)
        m = jnp.mean(t, axis=1, keepdims=True)                         # (R, 1)
        # softmax is shift-invariant per slice; a shared max keeps exp() safe
        # for arbitrary (trained) weights at negligible cost.
        e = jnp.exp(m - jnp.max(m, axis=0, keepdims=True))             # (R, 1)
        num = jnp.dot(j_mat, e * t, preferred_element_type=f32)        # (R, HW)
        den = jnp.dot(j_mat, e, preferred_element_type=f32)            # (R, 1)
        return num * pl.reciprocal(den, approx=True)

    attn = jax.nn.sigmoid(chan_attn(sa) + chan_attn(conv))             # (R, HW)

    # out = group_x * attn, plus residual identity (same rows) => x*(attn+1)
    o_ref[...] = (x * attn + x).astype(o_ref.dtype)


def make_params(key, channels, factor):
    """Deterministic parameter init mirroring EMA_pro._init_weights (eval BN)."""
    gc = channels // factor
    k1, k2 = jax.random.split(key)
    # kaiming_normal_(mode='fan_out', nonlinearity='relu'): std = sqrt(2/fan_out)
    w1 = jax.random.normal(k1, (gc, gc, 1, 1), jnp.float32) * jnp.sqrt(2.0 / gc)
    w2 = jax.random.normal(k2, (gc, gc, 3, 3), jnp.float32) * jnp.sqrt(2.0 / (gc * 9))
    # BatchNorm2d eval mode with default stats: scale = 1/sqrt(1+eps), bias = 0
    bn_scale = 1.0 / jnp.sqrt(1.0 + EPS)
    return dict(
        w1=(w1[:, :, 0, 0] * bn_scale).astype(jnp.float32),   # (gc, gc)
        b1=jnp.zeros((gc, 1), jnp.float32),
        w2=(w2 * bn_scale).astype(jnp.float32),                # (gc, gc, 3, 3) OIHW
        b2=jnp.zeros((gc, 1), jnp.float32),
        gn_g=jnp.ones((gc, 1), jnp.float32),
        gn_b=jnp.zeros((gc, 1), jnp.float32),
    )


def _device_kind():
    try:
        return jax.devices()[0].device_kind.lower()
    except Exception:
        return ""


@functools.partial(jax.jit, static_argnames=("groups",))
def ema_pro_forward(x, params, groups):
    b, C, H, W = x.shape
    assert H == W, "EMA_pro's gate broadcast requires square inputs"
    gc = C // groups
    bg = b * groups
    HW = H * W

    kind = _device_kind()
    # bf16 tap construction only where the VPU has bf16 (v6e / v7x).
    taps_bf16 = ("v6" in kind) or ("v7" in kind)
    # Grid split only maps to real parallel hardware on v7x (2 TensorCores per
    # chip). On v5e/v6e the grid is a serial loop, so splitting just halves
    # MXU row fill and adds per-step overhead -> keep one block there.
    num_tc = 2 if "v7" in kind else 1

    num_blocks = num_tc if bg % num_tc == 0 else 1
    bt = bg // num_blocks
    if num_blocks > 1 and (bt * gc) % 8 != 0:
        num_blocks, bt = 1, bg
    R = bt * gc
    # TODO(synk): for scaled configs, pack slices until R is a multiple of the
    # MXU row count (128 on v5e, 256 on v6e/v7x), chunk the (9R, HW) bf16 patch
    # along HW if it exceeds VMEM (64 MiB on v7x), and pass the constant
    # operands with pipeline_mode=pl.Buffered(1) to drop their second buffer.

    x2d = x.reshape(bg * gc, HW).astype(jnp.float32)       # lane-dense (rows, H*W)

    eye_bt = jnp.eye(bt, dtype=jnp.float32)
    w1_bd = jnp.kron(eye_bt, params["w1"])                     # (R, R)
    j_bd = jnp.kron(eye_bt, jnp.ones((gc, gc), jnp.float32))   # (R, R)
    b1_bd = jnp.tile(params["b1"], (bt, 1))                    # (R, 1)
    b2_bd = jnp.tile(params["b2"], (bt, 1))
    gng_bd = jnp.tile(params["gn_g"], (bt, 1))
    gnb_bd = jnp.tile(params["gn_b"], (bt, 1))

    # Fixed pooling / broadcast matrices on the flat spatial index p = h*W + w.
    p_idx = jnp.arange(HW)
    row = p_idx // W
    col = p_idx % W
    s_h = (row[:, None] == jnp.arange(H)[None, :]).astype(jnp.float32) / W  # (HW, H)
    s_w = (col[:, None] == jnp.arange(W)[None, :]).astype(jnp.float32) / H  # (HW, W)
    shw = jnp.concatenate([s_h, s_w], axis=1)                               # (HW, H+W)
    b_h = (jnp.arange(H)[:, None] == row[None, :]).astype(jnp.float32)      # (H, HW)

    # 3x3 conv: per-tap block-diagonal weights, lane-roll shifts, edge masks.
    w2 = params["w2"]                                          # (gc, gc, 3, 3) OIHW
    tap_blocks, tap_masks, shifts = [], [], []
    for kh in range(3):
        for kw in range(3):
            di, dj = kh - 1, kw - 1
            tap_blocks.append(jnp.kron(eye_bt, w2[:, :, kh, kw]))
            ok = ((row + di >= 0) & (row + di < H) &
                  (col + dj >= 0) & (col + dj < W))
            tap_masks.append(ok)
            # patch[p] = x[p + di*W + dj]  ==  roll(x, -(di*W + dj))
            shifts.append(int((-(di * W + dj)) % HW))
    w2_big = jnp.concatenate(tap_blocks, axis=1).astype(jnp.bfloat16)  # (R, 9R)
    mask_dtype = jnp.bfloat16 if taps_bf16 else jnp.float32
    masks = jnp.stack(tap_masks).astype(mask_dtype)                    # (9, HW)

    kernel = functools.partial(ema_pro_kernel, shifts=tuple(shifts), h=H,
                               taps_bf16=taps_bf16)
    const = lambda a: pl.BlockSpec(a.shape, lambda i: (0,) * a.ndim)

    out2d = pl.pallas_call(
        kernel,
        out_shape=jax.ShapeDtypeStruct((bg * gc, HW), x.dtype),
        grid=(num_blocks,),
        in_specs=[
            pl.BlockSpec((R, HW), lambda i: (i, 0)),   # x block: bt whole slices
            const(w1_bd), const(b1_bd), const(w2_big), const(b2_bd),
            const(gng_bd), const(gnb_bd), const(j_bd),
            const(shw), const(b_h), const(masks),
        ],
        out_specs=pl.BlockSpec((R, HW), lambda i: (i, 0)),
        compiler_params=pltpu.CompilerParams(
            dimension_semantics=("parallel",),
            vmem_limit_bytes=32 * 1024 * 1024),
    )(x2d, w1_bd, b1_bd, w2_big, b2_bd, gng_bd, gnb_bd, j_bd, shw, b_h, masks)
    return out2d.reshape(b, C, H, W)


def ema_pro_reference(x, params, groups):
    """Pure-JAX reference of the PyTorch forward (eval-mode BN), f32 HIGHEST."""
    b, C, H, W = x.shape
    gc = C // groups
    bg = b * groups
    hi = lax.Precision.HIGHEST
    gx = x.reshape(bg, gc, H, W).astype(jnp.float32)
    w1, b1 = params["w1"], params["b1"]
    w2, b2 = params["w2"], params["b2"]
    gn_g, gn_b = params["gn_g"], params["gn_b"]
    silu = lambda v: v * jax.nn.sigmoid(v)

    pool_h = gx.mean(axis=3)                              # (bg, gc, H)
    pool_w = gx.mean(axis=2)                              # (bg, gc, W)
    x_h = silu(jnp.einsum("oc,bch->boh", w1, pool_h, precision=hi) + b1[None])
    x_w = silu(jnp.einsum("oc,bcw->bow", w1, pool_w, precision=hi) + b1[None])

    gate = jax.nn.sigmoid(x_h) * jax.nn.sigmoid(x_w)      # (bg, gc, H), H == W
    sa = gx * gate[:, :, :, None]
    mu = sa.mean(axis=(2, 3), keepdims=True)
    var = ((sa - mu) ** 2).mean(axis=(2, 3), keepdims=True)
    sa = (sa - mu) / jnp.sqrt(var + EPS)
    sa = sa * gn_g.reshape(1, gc, 1, 1) + gn_b.reshape(1, gc, 1, 1)

    conv = lax.conv_general_dilated(
        gx, w2, window_strides=(1, 1), padding="SAME",
        dimension_numbers=("NCHW", "OIHW", "NCHW"), precision=hi)
    conv = silu(conv + b2.reshape(1, gc, 1, 1))

    def chan_attn(t):
        m = t.mean(axis=(2, 3))
        p = jax.nn.softmax(m, axis=1)
        return jnp.einsum("bc,bchw->bhw", p, t, precision=hi)[:, None]

    attn = jax.nn.sigmoid(chan_attn(sa) + chan_attn(conv))
    out = (gx * attn).reshape(b, C, H, W)
    return out + x


if __name__ == "__main__":
    B, C, H, W = 2, 32, 16, 16       # square input; channels % factor == 0
    factor = 4                        # groups; group_channels = 8 (fills sublanes)

    key = jax.random.PRNGKey(0)
    kx, kp = jax.random.split(key)
    x = jax.random.normal(kx, (B, C, H, W), jnp.float32)
    params = make_params(kp, C, factor)

    out = ema_pro_forward(x, params, factor)
    jax.block_until_ready(out)

    ref = ema_pro_reference(x, params, factor)
    assert out.shape == (B, C, H, W)
    max_err = float(jnp.max(jnp.abs(out - ref)))
    # Kernel matmuls use default MXU precision / bf16 operands for the 3x3-conv
    # matmul; the reference runs f32 HIGHEST, so allow small drift.
    assert max_err < 3e-2, f"mismatch vs reference: max abs diff = {max_err}"
    print("KERNEL_OK")
</pallas_src>

<mosaic_0001>
module attributes {stable_mosaic.version = 11 : i64} {
  func.func @ema_pro_kernel(%arg0: i32, %arg1: memref<64x256xf32, #tpu.memory_space<vmem>>, %arg2: memref<64x64xf32, #tpu.memory_space<vmem>>, %arg3: memref<64x1xf32, #tpu.memory_space<vmem>>, %arg4: memref<64x576xbf16, #tpu.memory_space<vmem>>, %arg5: memref<64x1xf32, #tpu.memory_space<vmem>>, %arg6: memref<64x1xf32, #tpu.memory_space<vmem>>, %arg7: memref<64x1xf32, #tpu.memory_space<vmem>>, %arg8: memref<64x64xf32, #tpu.memory_space<vmem>>, %arg9: memref<256x32xf32, #tpu.memory_space<vmem>>, %arg10: memref<16x256xf32, #tpu.memory_space<vmem>>, %arg11: memref<9x256xf32, #tpu.memory_space<vmem>>, %arg12: memref<64x256xf32, #tpu.memory_space<vmem>>) attributes {dimension_semantics = [#tpu.dimension_semantics<parallel>], iteration_bounds = array<i64: 1>, scalar_prefetch = 0 : i64, scratch_operands = 0 : i64, tpu.core_type = #tpu.core_type<tc>, window_params = [{transform_indices = @transform_0, window_bounds = array<i64: 64, 256>}, {pipeline_mode = #tpu.pipeline_mode<synchronous>, transform_indices = @transform_1, window_bounds = array<i64: 64, 64>}, {pipeline_mode = #tpu.pipeline_mode<synchronous>, transform_indices = @transform_2, window_bounds = array<i64: 64, 1>}, {pipeline_mode = #tpu.pipeline_mode<synchronous>, transform_indices = @transform_3, window_bounds = array<i64: 64, 576>}, {pipeline_mode = #tpu.pipeline_mode<synchronous>, transform_indices = @transform_4, window_bounds = array<i64: 64, 1>}, {pipeline_mode = #tpu.pipeline_mode<synchronous>, transform_indices = @transform_5, window_bounds = array<i64: 64, 1>}, {pipeline_mode = #tpu.pipeline_mode<synchronous>, transform_indices = @transform_6, window_bounds = array<i64: 64, 1>}, {pipeline_mode = #tpu.pipeline_mode<synchronous>, transform_indices = @transform_7, window_bounds = array<i64: 64, 64>}, {pipeline_mode = #tpu.pipeline_mode<synchronous>, transform_indices = @transform_8, window_bounds = array<i64: 256, 32>}, {pipeline_mode = #tpu.pipeline_mode<synchronous>, transform_indices = @transform_9, window_bounds = array<i64: 16, 256>}, {pipeline_mode = #tpu.pipeline_mode<synchronous>, transform_indices = @transform_10, window_bounds = array<i64: 9, 256>}, {transform_indices = @transform_11, window_bounds = array<i64: 64, 256>}]} {
    %c0 = arith.constant 0 : index
    %c0_0 = arith.constant 0 : index
    %0 = vector.load %arg1[%c0, %c0_0] : memref<64x256xf32, #tpu.memory_space<vmem>>, vector<64x256xf32>
    %c0_1 = arith.constant 0 : index
    %c0_2 = arith.constant 0 : index
    %1 = vector.load %arg2[%c0_1, %c0_2] : memref<64x64xf32, #tpu.memory_space<vmem>>, vector<64x64xf32>
    %c0_3 = arith.constant 0 : index
    %c0_4 = arith.constant 0 : index
    %2 = vector.load %arg8[%c0_3, %c0_4] : memref<64x64xf32, #tpu.memory_space<vmem>>, vector<64x64xf32>
    %c0_5 = arith.constant 0 : index
    %c0_6 = arith.constant 0 : index
    %3 = vector.load %arg11[%c0_5, %c0_6] : memref<9x256xf32, #tpu.memory_space<vmem>>, vector<9x256xf32>
    %c0_7 = arith.constant 0 : index
    %c0_8 = arith.constant 0 : index
    %4 = vector.load %arg9[%c0_7, %c0_8] : memref<256x32xf32, #tpu.memory_space<vmem>>, vector<256x32xf32>
    %cst = arith.constant dense<0.000000e+00> : vector<64x32xf32>
    %5 = tpu.matmul %0, %4, %cst {dimension_numbers = #tpu.dot_dimension_numbers<[1], [0], [0], [1], [0, 0, 1, 1], [], []>} : vector<64x256xf32>, vector<256x32xf32>, vector<64x32xf32> -> vector<64x32xf32>
    %cst_9 = arith.constant dense<0.000000e+00> : vector<64x32xf32>
    %6 = tpu.matmul %1, %5, %cst_9 {dimension_numbers = #tpu.dot_dimension_numbers<[1], [0], [0], [1], [0, 0, 1, 1], [], []>} : vector<64x64xf32>, vector<64x32xf32>, vector<64x32xf32> -> vector<64x32xf32>
    %c0_10 = arith.constant 0 : index
    %c0_11 = arith.constant 0 : index
    %7 = vector.load %arg3[%c0_10, %c0_11] : memref<64x1xf32, #tpu.memory_space<vmem>>, vector<64x1xf32>
    %8 = vector.broadcast %7 : vector<64x1xf32> to vector<64x32xf32>
    %9 = arith.addf %6, %8 : vector<64x32xf32>
    %10 = arith.negf %9 : vector<64x32xf32>
    %11 = math.exp %10 : vector<64x32xf32>
    %cst_12 = arith.constant 1.000000e+00 : f32
    %12 = vector.broadcast %cst_12 : f32 to vector<64x32xf32>
    %13 = arith.addf %12, %11 : vector<64x32xf32>
    %14 = arith.divf %12, %13 : vector<64x32xf32>
    %15 = arith.mulf %9, %14 : vector<64x32xf32>
    %16 = arith.negf %15 : vector<64x32xf32>
    %17 = math.exp %16 : vector<64x32xf32>
    %cst_13 = arith.constant 1.000000e+00 : f32
    %18 = vector.broadcast %cst_13 : f32 to vector<64x32xf32>
    %19 = arith.addf %18, %17 : vector<64x32xf32>
    %20 = arith.divf %18, %19 : vector<64x32xf32>
    %21 = vector.extract_strided_slice %20 {offsets = [0, 0], sizes = [64, 16], strides = [1, 1]} : vector<64x32xf32> to vector<64x16xf32>
    %22 = vector.extract_strided_slice %20 {offsets = [0, 16], sizes = [64, 16], strides = [1, 1]} : vector<64x32xf32> to vector<64x16xf32>
    %23 = arith.mulf %21, %22 : vector<64x16xf32>
    %c0_14 = arith.constant 0 : index
    %c0_15 = arith.constant 0 : index
    %24 = vector.load %arg10[%c0_14, %c0_15] : memref<16x256xf32, #tpu.memory_space<vmem>>, vector<16x256xf32>
    %cst_16 = arith.constant dense<0.000000e+00> : vector<64x256xf32>
    %25 = tpu.matmul %23, %24, %cst_16 {dimension_numbers = #tpu.dot_dimension_numbers<[1], [0], [0], [1], [0, 0, 1, 1], [], []>} : vector<64x16xf32>, vector<16x256xf32>, vector<64x256xf32> -> vector<64x256xf32>
    %26 = arith.mulf %0, %25 : vector<64x256xf32>
    %cst_17 = arith.constant dense<0.000000e+00> : vector<64xf32>
    %27 = vector.multi_reduction <add>, %26, %cst_17 [1] : vector<64x256xf32> to vector<64xf32>
    %28 = vector.shape_cast %27 : vector<64xf32> to vector<64x1xf32>
    %cst_18 = arith.constant 2.560000e+02 : f32
    %29 = vector.broadcast %cst_18 : f32 to vector<64x1xf32>
    %30 = arith.divf %28, %29 : vector<64x1xf32>
    %31 = arith.mulf %26, %26 : vector<64x256xf32>
    %cst_19 = arith.constant dense<0.000000e+00> : vector<64xf32>
    %32 = vector.multi_reduction <add>, %31, %cst_19 [1] : vector<64x256xf32> to vector<64xf32>
    %33 = vector.shape_cast %32 : vector<64xf32> to vector<64x1xf32>
    %cst_20 = arith.constant 2.560000e+02 : f32
    %34 = vector.broadcast %cst_20 : f32 to vector<64x1xf32>
    %35 = arith.divf %33, %34 : vector<64x1xf32>
    %36 = arith.mulf %30, %30 : vector<64x1xf32>
    %37 = arith.subf %35, %36 : vector<64x1xf32>
    %38 = vector.broadcast %30 : vector<64x1xf32> to vector<64x256xf32>
    %39 = arith.subf %26, %38 : vector<64x256xf32>
    %cst_21 = arith.constant 9.99999974E-6 : f32
    %40 = vector.broadcast %cst_21 : f32 to vector<64x1xf32>
    %41 = arith.addf %37, %40 : vector<64x1xf32>
    %42 = math.rsqrt %41 : vector<64x1xf32>
    %43 = vector.broadcast %42 : vector<64x1xf32> to vector<64x256xf32>
    %44 = arith.mulf %39, %43 : vector<64x256xf32>
    %c0_22 = arith.constant 0 : index
    %c0_23 = arith.constant 0 : index
    %45 = vector.load %arg6[%c0_22, %c0_23] : memref<64x1xf32, #tpu.memory_space<vmem>>, vector<64x1xf32>
    %46 = vector.broadcast %45 : vector<64x1xf32> to vector<64x256xf32>
    %47 = arith.mulf %44, %46 : vector<64x256xf32>
    %c0_24 = arith.constant 0 : index
    %c0_25 = arith.constant 0 : index
    %48 = vector.load %arg7[%c0_24, %c0_25] : memref<64x1xf32, #tpu.memory_space<vmem>>, vector<64x1xf32>
    %49 = vector.broadcast %48 : vector<64x1xf32> to vector<64x256xf32>
    %50 = arith.addf %47, %49 : vector<64x256xf32>
    %c17_i32 = arith.constant 17 : i32
    %51 = tpu.dynamic_rotate %0 by %c17_i32 dim 1 : vector<64x256xf32>, i32 -> vector<64x256xf32>
    %52 = vector.extract_strided_slice %3 {offsets = [0, 0], sizes = [1, 256], strides = [1, 1]} : vector<9x256xf32> to vector<1x256xf32>
    %53 = vector.broadcast %52 : vector<1x256xf32> to vector<64x256xf32>
    %54 = arith.mulf %51, %53 : vector<64x256xf32>
    %55 = arith.truncf %54 : vector<64x256xf32> to vector<64x256xbf16>
    %c16_i32 = arith.constant 16 : i32
    %56 = tpu.dynamic_rotate %0 by %c16_i32 dim 1 : vector<64x256xf32>, i32 -> vector<64x256xf32>
    %57 = vector.extract_strided_slice %3 {offsets = [1, 0], sizes = [1, 256], strides = [1, 1]} : vector<9x256xf32> to vector<1x256xf32>
    %58 = vector.broadcast %57 : vector<1x256xf32> to vector<64x256xf32>
    %59 = arith.mulf %56, %58 : vector<64x256xf32>
    %60 = arith.truncf %59 : vector<64x256xf32> to vector<64x256xbf16>
    %c15_i32 = arith.constant 15 : i32
    %61 = tpu.dynamic_rotate %0 by %c15_i32 dim 1 : vector<64x256xf32>, i32 -> vector<64x256xf32>
    %62 = vector.extract_strided_slice %3 {offsets = [2, 0], sizes = [1, 256], strides = [1, 1]} : vector<9x256xf32> to vector<1x256xf32>
    %63 = vector.broadcast %62 : vector<1x256xf32> to vector<64x256xf32>
    %64 = arith.mulf %61, %63 : vector<64x256xf32>
    %65 = arith.truncf %64 : vector<64x256xf32> to vector<64x256xbf16>
    %c1_i32 = arith.constant 1 : i32
    %66 = tpu.dynamic_rotate %0 by %c1_i32 dim 1 : vector<64x256xf32>, i32 -> vector<64x256xf32>
    %67 = vector.extract_strided_slice %3 {offsets = [3, 0], sizes = [1, 256], strides = [1, 1]} : vector<9x256xf32> to vector<1x256xf32>
    %68 = vector.broadcast %67 : vector<1x256xf32> to vector<64x256xf32>
    %69 = arith.mulf %66, %68 : vector<64x256xf32>
    %70 = arith.truncf %69 : vector<64x256xf32> to vector<64x256xbf16>
    %71 = vector.extract_strided_slice %3 {offsets = [4, 0], sizes = [1, 256], strides = [1, 1]} : vector<9x256xf32> to vector<1x256xf32>
    %72 = vector.broadcast %71 : vector<1x256xf32> to vector<64x256xf32>
    %73 = arith.mulf %0, %72 : vector<64x256xf32>
    %74 = arith.truncf %73 : vector<64x256xf32> to vector<64x256xbf16>
    %c255_i32 = arith.constant 255 : i32
    %75 = tpu.dynamic_rotate %0 by %c255_i32 dim 1 : vector<64x256xf32>, i32 -> vector<64x256xf32>
    %76 = vector.extract_strided_slice %3 {offsets = [5, 0], sizes = [1, 256], strides = [1, 1]} : vector<9x256xf32> to vector<1x256xf32>
    %77 = vector.broadcast %76 : vector<1x256xf32> to vector<64x256xf32>
    %78 = arith.mulf %75, %77 : vector<64x256xf32>
    %79 = arith.truncf %78 : vector<64x256xf32> to vector<64x256xbf16>
    %c241_i32 = arith.constant 241 : i32
    %80 = tpu.dynamic_rotate %0 by %c241_i32 dim 1 : vector<64x256xf32>, i32 -> vector<64x256xf32>
    %81 = vector.extract_strided_slice %3 {offsets = [6, 0], sizes = [1, 256], strides = [1, 1]} : vector<9x256xf32> to vector<1x256xf32>
    %82 = vector.broadcast %81 : vector<1x256xf32> to vector<64x256xf32>
    %83 = arith.mulf %80, %82 : vector<64x256xf32>
    %84 = arith.truncf %83 : vector<64x256xf32> to vector<64x256xbf16>
    %c240_i32 = arith.constant 240 : i32
    %85 = tpu.dynamic_rotate %0 by %c240_i32 dim 1 : vector<64x256xf32>, i32 -> vector<64x256xf32>
    %86 = vector.extract_strided_slice %3 {offsets = [7, 0], sizes = [1, 256], strides = [1, 1]} : vector<9x256xf32> to vector<1x256xf32>
    %87 = vector.broadcast %86 : vector<1x256xf32> to vector<64x256xf32>
    %88 = arith.mulf %85, %87 : vector<64x256xf32>
    %89 = arith.truncf %88 : vector<64x256xf32> to vector<64x256xbf16>
    %c239_i32 = arith.constant 239 : i32
    %90 = tpu.dynamic_rotate %0 by %c239_i32 dim 1 : vector<64x256xf32>, i32 -> vector<64x256xf32>
    %91 = vector.extract_strided_slice %3 {offsets = [8, 0], sizes = [1, 256], strides = [1, 1]} : vector<9x256xf32> to vector<1x256xf32>
    %92 = vector.broadcast %91 : vector<1x256xf32> to vector<64x256xf32>
    %93 = arith.mulf %90, %92 : vector<64x256xf32>
    %94 = arith.truncf %93 : vector<64x256xf32> to vector<64x256xbf16>
    %95 = tpu.concatenate %55, %60, %65, %70, %74, %79, %84, %89, %94 in 0 : vector<64x256xbf16>, vector<64x256xbf16>, vector<64x256xbf16>, vector<64x256xbf16>, vector<64x256xbf16>, vector<64x256xbf16>, vector<64x256xbf16>, vector<64x256xbf16>, vector<64x256xbf16> -> vector<576x256xbf16>
    %c0_26 = arith.constant 0 : index
    %c0_27 = arith.constant 0 : index
    %96 = vector.load %arg4[%c0_26, %c0_27] : memref<64x576xbf16, #tpu.memory_space<vmem>>, vector<64x576xbf16>
    %cst_28 = arith.constant dense<0.000000e+00> : vector<64x256xf32>
    %97 = tpu.matmul %96, %95, %cst_28 {dimension_numbers = #tpu.dot_dimension_numbers<[1], [0], [0], [1], [0, 0, 1, 1], [], []>} : vector<64x576xbf16>, vector<576x256xbf16>, vector<64x256xf32> -> vector<64x256xf32>
    %c0_29 = arith.constant 0 : index
    %c0_30 = arith.constant 0 : index
    %98 = vector.load %arg5[%c0_29, %c0_30] : memref<64x1xf32, #tpu.memory_space<vmem>>, vector<64x1xf32>
    %99 = vector.broadcast %98 : vector<64x1xf32> to vector<64x256xf32>
    %100 = arith.addf %97, %99 : vector<64x256xf32>
    %101 = arith.negf %100 : vector<64x256xf32>
    %102 = math.exp %101 : vector<64x256xf32>
    %cst_31 = arith.constant 1.000000e+00 : f32
    %103 = vector.broadcast %cst_31 : f32 to vector<64x256xf32>
    %104 = arith.addf %103, %102 : vector<64x256xf32>
    %105 = arith.divf %103, %104 : vector<64x256xf32>
    %106 = arith.mulf %100, %105 : vector<64x256xf32>
    %cst_32 = arith.constant dense<0.000000e+00> : vector<64xf32>
    %107 = vector.multi_reduction <add>, %50, %cst_32 [1] : vector<64x256xf32> to vector<64xf32>
    %108 = vector.shape_cast %107 : vector<64xf32> to vector<64x1xf32>
    %cst_33 = arith.constant 2.560000e+02 : f32
    %109 = vector.broadcast %cst_33 : f32 to vector<64x1xf32>
    %110 = arith.divf %108, %109 : vector<64x1xf32>
    %cst_34 = arith.constant dense<0xFF800000> : vector<1xf32>
    %111 = vector.multi_reduction <maximumf>, %110, %cst_34 [0] : vector<64x1xf32> to vector<1xf32>
    %112 = vector.shape_cast %111 : vector<1xf32> to vector<1x1xf32>
    %113 = vector.broadcast %112 : vector<1x1xf32> to vector<64x1xf32>
    %114 = arith.subf %110, %113 : vector<64x1xf32>
    %115 = math.exp %114 : vector<64x1xf32>
    %116 = vector.broadcast %115 : vector<64x1xf32> to vector<64x256xf32>
    %117 = arith.mulf %116, %50 : vector<64x256xf32>
    %cst_35 = arith.constant dense<0.000000e+00> : vector<64x256xf32>
    %118 = tpu.matmul %2, %117, %cst_35 {dimension_numbers = #tpu.dot_dimension_numbers<[1], [0], [0], [1], [0, 0, 1, 1], [], []>} : vector<64x64xf32>, vector<64x256xf32>, vector<64x256xf32> -> vector<64x256xf32>
    %cst_36 = arith.constant dense<0.000000e+00> : vector<64x1xf32>
    %119 = tpu.matmul %2, %115, %cst_36 {dimension_numbers = #tpu.dot_dimension_numbers<[1], [0], [0], [1], [0, 0, 1, 1], [], []>} : vector<64x64xf32>, vector<64x1xf32>, vector<64x1xf32> -> vector<64x1xf32>
    %120 = tpu.reciprocal %119 {approx = true} : vector<64x1xf32> -> vector<64x1xf32>
    %121 = vector.broadcast %120 : vector<64x1xf32> to vector<64x256xf32>
    %122 = arith.mulf %118, %121 : vector<64x256xf32>
    %cst_37 = arith.constant dense<0.000000e+00> : vector<64xf32>
    %123 = vector.multi_reduction <add>, %106, %cst_37 [1] : vector<64x256xf32> to vector<64xf32>
    %124 = vector.shape_cast %123 : vector<64xf32> to vector<64x1xf32>
    %cst_38 = arith.constant 2.560000e+02 : f32
    %125 = vector.broadcast %cst_38 : f32 to vector<64x1xf32>
    %126 = arith.divf %124, %125 : vector<64x1xf32>
    %cst_39 = arith.constant dense<0xFF800000> : vector<1xf32>
    %127 = vector.multi_reduction <maximumf>, %126, %cst_39 [0] : vector<64x1xf32> to vector<1xf32>
    %128 = vector.shape_cast %127 : vector<1xf32> to vector<1x1xf32>
    %129 = vector.broadcast %128 : vector<1x1xf32> to vector<64x1xf32>
    %130 = arith.subf %126, %129 : vector<64x1xf32>
    %131 = math.exp %130 : vector<64x1xf32>
    %132 = vector.broadcast %131 : vector<64x1xf32> to vector<64x256xf32>
    %133 = arith.mulf %132, %106 : vector<64x256xf32>
    %cst_40 = arith.constant dense<0.000000e+00> : vector<64x256xf32>
    %134 = tpu.matmul %2, %133, %cst_40 {dimension_numbers = #tpu.dot_dimension_numbers<[1], [0], [0], [1], [0, 0, 1, 1], [], []>} : vector<64x64xf32>, vector<64x256xf32>, vector<64x256xf32> -> vector<64x256xf32>
    %cst_41 = arith.constant dense<0.000000e+00> : vector<64x1xf32>
    %135 = tpu.matmul %2, %131, %cst_41 {dimension_numbers = #tpu.dot_dimension_numbers<[1], [0], [0], [1], [0, 0, 1, 1], [], []>} : vector<64x64xf32>, vector<64x1xf32>, vector<64x1xf32> -> vector<64x1xf32>
    %136 = tpu.reciprocal %135 {approx = true} : vector<64x1xf32> -> vector<64x1xf32>
    %137 = vector.broadcast %136 : vector<64x1xf32> to vector<64x256xf32>
    %138 = arith.mulf %134, %137 : vector<64x256xf32>
    %139 = arith.addf %122, %138 : vector<64x256xf32>
    %140 = arith.negf %139 : vector<64x256xf32>
    %141 = math.exp %140 : vector<64x256xf32>
    %cst_42 = arith.constant 1.000000e+00 : f32
    %142 = vector.broadcast %cst_42 : f32 to vector<64x256xf32>
    %143 = arith.addf %142, %141 : vector<64x256xf32>
    %144 = arith.divf %142, %143 : vector<64x256xf32>
    %145 = arith.mulf %0, %144 : vector<64x256xf32>
    %146 = arith.addf %145, %0 : vector<64x256xf32>
    %c0_43 = arith.constant 0 : index
    %c0_44 = arith.constant 0 : index
    %147 = vector.load %arg12[%c0_43, %c0_44] : memref<64x256xf32, #tpu.memory_space<vmem>>, vector<64x256xf32>
    tpu.vector_store %arg12[%c0_43, %c0_44], %146 {strides = array<i32>} : memref<64x256xf32, #tpu.memory_space<vmem>>, vector<64x256xf32>,
    return
  }
  func.func @transform_0(%arg0: i32) -> (i32, i32) {
    %c0_i32 = arith.constant 0 : i32
    %c0_i32_0 = arith.constant 0 : i32
    return %arg0, %c0_i32 : i32, i32
  }
  func.func @transform_1(%arg0: i32) -> (i32, i32) {
    %c0_i32 = arith.constant 0 : i32
    %c0_i32_0 = arith.constant 0 : i32
    %c0_i32_1 = arith.constant 0 : i32
    return %c0_i32, %c0_i32_0 : i32, i32
  }
  func.func @transform_2(%arg0: i32) -> (i32, i32) {
    %c0_i32 = arith.constant 0 : i32
    %c0_i32_0 = arith.constant 0 : i32
    %c0_i32_1 = arith.constant 0 : i32
    return %c0_i32, %c0_i32_0 : i32, i32
  }
  func.func @transform_3(%arg0: i32) -> (i32, i32) {
    %c0_i32 = arith.constant 0 : i32
    %c0_i32_0 = arith.constant 0 : i32
    %c0_i32_1 = arith.constant 0 : i32
    return %c0_i32, %c0_i32_0 : i32, i32
  }
  func.func @transform_4(%arg0: i32) -> (i32, i32) {
    %c0_i32 = arith.constant 0 : i32
    %c0_i32_0 = arith.constant 0 : i32
    %c0_i32_1 = arith.constant 0 : i32
    return %c0_i32, %c0_i32_0 : i32, i32
  }
  func.func @transform_5(%arg0: i32) -> (i32, i32) {
    %c0_i32 = arith.constant 0 : i32
    %c0_i32_0 = arith.constant 0 : i32
    %c0_i32_1 = arith.constant 0 : i32
    return %c0_i32, %c0_i32_0 : i32, i32
  }
  func.func @transform_6(%arg0: i32) -> (i32, i32) {
    %c0_i32 = arith.constant 0 : i32
    %c0_i32_0 = arith.constant 0 : i32
    %c0_i32_1 = arith.constant 0 : i32
    return %c0_i32, %c0_i32_0 : i32, i32
  }
  func.func @transform_7(%arg0: i32) -> (i32, i32) {
    %c0_i32 = arith.constant 0 : i32
    %c0_i32_0 = arith.constant 0 : i32
    %c0_i32_1 = arith.constant 0 : i32
    return %c0_i32, %c0_i32_0 : i32, i32
  }
  func.func @transform_8(%arg0: i32) -> (i32, i32) {
    %c0_i32 = arith.constant 0 : i32
    %c0_i32_0 = arith.constant 0 : i32
    %c0_i32_1 = arith.constant 0 : i32
    return %c0_i32, %c0_i32_0 : i32, i32
  }
  func.func @transform_9(%arg0: i32) -> (i32, i32) {
    %c0_i32 = arith.constant 0 : i32
    %c0_i32_0 = arith.constant 0 : i32
    %c0_i32_1 = arith.constant 0 : i32
    return %c0_i32, %c0_i32_0 : i32, i32
  }
  func.func @transform_10(%arg0: i32) -> (i32, i32) {
    %c0_i32 = arith.constant 0 : i32
    %c0_i32_0 = arith.constant 0 : i32
    %c0_i32_1 = arith.constant 0 : i32
    return %c0_i32, %c0_i32_0 : i32, i32
  }
  func.func @transform_11(%arg0: i32) -> (i32, i32) {
    %c0_i32 = arith.constant 0 : i32
    %c0_i32_0 = arith.constant 0 : i32
    return %arg0, %c0_i32 : i32, i32
  }
}

</mosaic_0001>

<llo_original>
// kernel: ema_pro_forward.1
$region0: #{ema_pro_forward.1}
  #allocation0 [shape = 'u32[]', space=smem, size = 0x4, offset = 0x4, fixed_abs, tag = 'smem constant byte address 0x4 - core index']
  #allocation1 [shape = 'u32[144,128]{1,0:T(1,128)}', space=vmem, size = 0x12000, scoped, tag = 'internal scratch']
  %s0 = inlined_call_operand.vmem [shape: f32[64,256], index: 0, kind: input, shape index: {}]
  %s1 = inlined_call_operand.vmem [shape: f32[64,64], index: 1, kind: input, shape index: {}]
  %s2 = inlined_call_operand.vmem [shape: f32[64,1], index: 2, kind: input, shape index: {}]
  %s3 = inlined_call_operand.vmem [shape: bf16[64,576], index: 3, kind: input, shape index: {}]
  %s4 = inlined_call_operand.vmem [shape: f32[64,1], index: 4, kind: input, shape index: {}]
  %s5 = inlined_call_operand.vmem [shape: f32[64,1], index: 5, kind: input, shape index: {}]
  %s6 = inlined_call_operand.vmem [shape: f32[64,1], index: 6, kind: input, shape index: {}]
  %s7 = inlined_call_operand.vmem [shape: f32[64,64], index: 7, kind: input, shape index: {}]
  %s8 = inlined_call_operand.vmem [shape: f32[256,32], index: 8, kind: input, shape index: {}]
  %s9 = inlined_call_operand.vmem [shape: f32[16,256], index: 9, kind: input, shape index: {}]
  %s10 = inlined_call_operand.vmem [shape: f32[9,256], index: 10, kind: input, shape index: {}]
  %s11 = inlined_call_operand.vmem [shape: f32[64,256], index: 11, kind: output, shape index: {}]
  %s12 = sld [smem:[#allocation0]]
  $region54: #{ema_pro_forward.1} parent=0
    _
  %s14 = ssub.s32 1, %s12
  %s15 = scalar_select 0, %s14, %s12
  // Predicated region
  $region2: #{ema_pro_forward.1} parent=0 // pred_check
    _
  $region3: #{ema_pro_forward.1} parent=0 // pred_check_branch
    %17 = sbr.rel (0) target = $region5
  $region4: #{ema_pro_forward.1} parent=0 // pred_region
    _
  $region5: #{ema_pro_forward.1} parent=0 // pred_fallthru
    _
  // Predicated region
  $region6: #{ema_pro_forward.1} parent=0 // pred_check
    _
  $region7: #{ema_pro_forward.1} parent=0 // pred_check_branch
    %19 = sbr.rel (0) target = $region9
  $region8: #{ema_pro_forward.1} parent=0 // pred_region
    _
  $region9: #{ema_pro_forward.1} parent=0 // pred_fallthru
    _
  // Predicated region
  $region10: #{ema_pro_forward.1} parent=0 // pred_check
    _
  $region11: #{ema_pro_forward.1} parent=0 // pred_check_branch
    %21 = sbr.rel (0) target = $region13
  $region12: #{ema_pro_forward.1} parent=0 // pred_region
    _
  $region13: #{ema_pro_forward.1} parent=0 // pred_fallthru
    _
  // Predicated region
  $region14: #{ema_pro_forward.1} parent=0 // pred_check
    _
  $region15: #{ema_pro_forward.1} parent=0 // pred_check_branch
    %23 = sbr.rel (0) target = $region17
  $region16: #{ema_pro_forward.1} parent=0 // pred_region
    _
  $region17: #{ema_pro_forward.1} parent=0 // pred_fallthru
    _
  // Predicated region
  $region18: #{ema_pro_forward.1} parent=0 // pred_check
    _
  $region19: #{ema_pro_forward.1} parent=0 // pred_check_branch
    %25 = sbr.rel (0) target = $region21
  $region20: #{ema_pro_forward.1} parent=0 // pred_region
    _
  $region21: #{ema_pro_forward.1} parent=0 // pred_fallthru
    _
  // Predicated region
  $region22: #{ema_pro_forward.1} parent=0 // pred_check
    _
  $region23: #{ema_pro_forward.1} parent=0 // pred_check_branch
    %27 = sbr.rel (0) target = $region25
  $region24: #{ema_pro_forward.1} parent=0 // pred_region
    _
  $region25: #{ema_pro_forward.1} parent=0 // pred_fallthru
    _
  // Predicated region
  $region26: #{ema_pro_forward.1} parent=0 // pred_check
    _
  $region27: #{ema_pro_forward.1} parent=0 // pred_check_branch
    %29 = sbr.rel (0) target = $region29
  $region28: #{ema_pro_forward.1} parent=0 // pred_region
    _
  $region29: #{ema_pro_forward.1} parent=0 // pred_fallthru
    _
  // Predicated region
  $region30: #{ema_pro_forward.1} parent=0 // pred_check
    _
  $region31: #{ema_pro_forward.1} parent=0 // pred_check_branch
    %31 = sbr.rel (0) target = $region33
  $region32: #{ema_pro_forward.1} parent=0 // pred_region
    _
  $region33: #{ema_pro_forward.1} parent=0 // pred_fallthru
    _
  // Predicated region
  $region34: #{ema_pro_forward.1} parent=0 // pred_check
    _
  $region35: #{ema_pro_forward.1} parent=0 // pred_check_branch
    %33 = sbr.rel (0) target = $region37
  $region36: #{ema_pro_forward.1} parent=0 // pred_region
    _
  $region37: #{ema_pro_forward.1} parent=0 // pred_fallthru
    _
  // Predicated region
  $region38: #{ema_pro_forward.1} parent=0 // pred_check
    _
  $region39: #{ema_pro_forward.1} parent=0 // pred_check_branch
    %35 = sbr.rel (0) target = $region41
  $region40: #{ema_pro_forward.1} parent=0 // pred_region
    _
  $region41: #{ema_pro_forward.1} parent=0 // pred_fallthru
    _
  // Predicated region
  $region42: #{ema_pro_forward.1} parent=0 // pred_check
    _
  $region43: #{ema_pro_forward.1} parent=0 // pred_check_branch
    %37 = sbr.rel (0) target = $region45
  $region44: #{ema_pro_forward.1} parent=0 // pred_region
    _
  $region45: #{ema_pro_forward.1} parent=0 // pred_fallthru
    _
  %v39 = vld [vmem:[%s0] sm:$0xff]
  %v40 = vld [vmem:[%s0 + $0x8] sm:$0xff]
  %v41 = vld [vmem:[%s0 + $0x10] sm:$0xff]
  %v42 = vld [vmem:[%s0 + $0x18] sm:$0xff]
  %v43 = vld [vmem:[%s0 + $0x20] sm:$0xff]
  %v44 = vld [vmem:[%s0 + $0x28] sm:$0xff]
  %v45 = vld [vmem:[%s0 + $0x30] sm:$0xff]
  %v46 = vld [vmem:[%s0 + $0x38] sm:$0xff]
  %v47 = vld [vmem:[%s0 + $0x40] sm:$0xff]
  %v48 = vld [vmem:[%s0 + $0x48] sm:$0xff]
  %v49 = vld [vmem:[%s0 + $0x50] sm:$0xff]
  %v50 = vld [vmem:[%s0 + $0x58] sm:$0xff]
  %v51 = vld [vmem:[%s0 + $0x60] sm:$0xff]
  %v52 = vld [vmem:[%s0 + $0x68] sm:$0xff]
  %v53 = vld [vmem:[%s0 + $0x70] sm:$0xff]
  %v54 = vld [vmem:[%s0 + $0x78] sm:$0xff]
  %v55 = vld [vmem:[%s1] sm:$0xff]
  %v56 = vld [vmem:[%s1 + $0x8] sm:$0xff]
  %v57 = vld [vmem:[%s1 + $0x10] sm:$0xff]
  %v58 = vld [vmem:[%s1 + $0x18] sm:$0xff]
  %v59 = vld [vmem:[%s1 + $0x20] sm:$0xff]
  %v60 = vld [vmem:[%s1 + $0x28] sm:$0xff]
  %v61 = vld [vmem:[%s1 + $0x30] sm:$0xff]
  %v62 = vld [vmem:[%s1 + $0x38] sm:$0xff]
  %v63 = vld [vmem:[%s7] sm:$0xff]
  %v64 = vld [vmem:[%s7 + $0x8] sm:$0xff]
  %v65 = vld [vmem:[%s7 + $0x10] sm:$0xff]
  %v66 = vld [vmem:[%s7 + $0x18] sm:$0xff]
  %v67 = vld [vmem:[%s7 + $0x20] sm:$0xff]
  %v68 = vld [vmem:[%s7 + $0x28] sm:$0xff]
  %v69 = vld [vmem:[%s7 + $0x30] sm:$0xff]
  %v70 = vld [vmem:[%s7 + $0x38] sm:$0xff]
  %v71 = vld [vmem:[%s10] sm:$0xff]
  %v72 = vld [vmem:[%s10 + $0x8] sm:$0xff]
  %v73 = vld [vmem:[%s10 + $0x10] sm:$0x1]
  %v74 = vld [vmem:[%s10 + $0x18] sm:$0x1]
  %v75 = vld [vmem:[%s8] sm:$0xff]
  %v76 = vld [vmem:[%s8 + $0x8] sm:$0xff]
  %v77 = vld [vmem:[%s8 + $0x10] sm:$0xff]
  %v78 = vld [vmem:[%s8 + $0x18] sm:$0xff]
  %v79 = vld [vmem:[%s8 + $0x20] sm:$0xff]
  %v80 = vld [vmem:[%s8 + $0x28] sm:$0xff]
  %v81 = vld [vmem:[%s8 + $0x30] sm:$0xff]
  %v82 = vld [vmem:[%s8 + $0x38] sm:$0xff]
  %v83 = vld [vmem:[%s8 + $0x40] sm:$0xff]
  %v84 = vld [vmem:[%s8 + $0x48] sm:$0xff]
  %v85 = vld [vmem:[%s8 + $0x50] sm:$0xff]
  %v86 = vld [vmem:[%s8 + $0x58] sm:$0xff]
  %v87 = vld [vmem:[%s8 + $0x60] sm:$0xff]
  %v88 = vld [vmem:[%s8 + $0x68] sm:$0xff]
  %v89 = vld [vmem:[%s8 + $0x70] sm:$0xff]
  %v90 = vld [vmem:[%s8 + $0x78] sm:$0xff]
  %v91 = vld [vmem:[%s8 + $0x80] sm:$0xff]
  %v92 = vld [vmem:[%s8 + $0x88] sm:$0xff]
  %v93 = vld [vmem:[%s8 + $0x90] sm:$0xff]
  %v94 = vld [vmem:[%s8 + $0x98] sm:$0xff]
  %v95 = vld [vmem:[%s8 + $0xa0] sm:$0xff]
  %v96 = vld [vmem:[%s8 + $0xa8] sm:$0xff]
  %v97 = vld [vmem:[%s8 + $0xb0] sm:$0xff]
  %v98 = vld [vmem:[%s8 + $0xb8] sm:$0xff]
  %v99 = vld [vmem:[%s8 + $0xc0] sm:$0xff]
  %v100 = vld [vmem:[%s8 + $0xc8] sm:$0xff]
  %v101 = vld [vmem:[%s8 + $0xd0] sm:$0xff]
  %v102 = vld [vmem:[%s8 + $0xd8] sm:$0xff]
  %v103 = vld [vmem:[%s8 + $0xe0] sm:$0xff]
  %v104 = vld [vmem:[%s8 + $0xe8] sm:$0xff]
  %v105 = vld [vmem:[%s8 + $0xf0] sm:$0xff]
  %v106 = vld [vmem:[%s8 + $0xf8] sm:$0xff]
  %107 = vmatprep.subr.mxu0 0.0
  %108 = vmatpush1.msra.mxu0 %v90
  %109 = vmatprep.subr.mxu0 0.0
  %110 = vmatpush1.msra.mxu0 %v89
  %111 = vmatprep.subr.mxu0 0.0
  %112 = vmatpush1.msra.mxu0 %v88
  %113 = vmatprep.subr.mxu0 0.0
  %114 = vmatpush1.msra.mxu0 %v87
  %115 = vmatprep.subr.mxu0 0.0
  %116 = vmatpush1.msra.mxu0 %v86
  %117 = vmatprep.subr.mxu0 0.0
  %118 = vmatpush1.msra.mxu0 %v85
  %119 = vmatprep.subr.mxu0 0.0
  %120 = vmatpush1.msra.mxu0 %v84
  %121 = vmatprep.subr.mxu0 0.0
  %122 = vmatpush1.msra.mxu0 %v83
  %123 = vmatprep.subr.mxu0 0.0
  %124 = vmatpush1.msra.mxu0 %v82
  %125 = vmatprep.subr.mxu0 0.0
  %126 = vmatpush1.msra.mxu0 %v81
  %127 = vmatprep.subr.mxu0 0.0
  %128 = vmatpush1.msra.mxu0 %v80
  %129 = vmatprep.subr.mxu0 0.0
  %130 = vmatpush1.msra.mxu0 %v79
  %131 = vmatprep.subr.mxu0 0.0
  %132 = vmatpush1.msra.mxu0 %v78
  %133 = vmatprep.subr.mxu0 0.0
  %134 = vmatpush1.msra.mxu0 %v77
  %135 = vmatprep.subr.mxu0 0.0
  %136 = vmatpush1.msra.mxu0 %v76
  %137 = vmatprep.subr.mxu0 0.0
  %138 = vmatpush1.msra.mxu0 %v75
  %139 = vmatprep.subr.mxu0 0.0
  %140 = vmatpush2.msra.mxu0 %v106
  %141 = vmatprep.subr.mxu0 0.0
  %142 = vmatpush2.msra.mxu0 %v105
  %143 = vmatprep.subr.mxu0 0.0
  %144 = vmatpush2.msra.mxu0 %v104
  %145 = vmatprep.subr.mxu0 0.0
  %146 = vmatpush2.msra.mxu0 %v103
  %147 = vmatprep.subr.mxu0 0.0
  %148 = vmatpush2.msra.mxu0 %v102
  %149 = vmatprep.subr.mxu0 0.0
  %150 = vmatpush2.msra.mxu0 %v101
  %151 = vmatprep.subr.mxu0 0.0
  %152 = vmatpush2.msra.mxu0 %v100
  %153 = vmatprep.subr.mxu0 0.0
  %154 = vmatpush2.msra.mxu0 %v99
  %155 = vmatprep.subr.mxu0 0.0
  %156 = vmatpush2.msra.mxu0 %v98
  %157 = vmatprep.subr.mxu0 0.0
  %158 = vmatpush2.msra.mxu0 %v97
  %159 = vmatprep.subr.mxu0 0.0
  %160 = vmatpush2.msra.mxu0 %v96
  %161 = vmatprep.subr.mxu0 0.0
  %162 = vmatpush2.msra.mxu0 %v95
  %163 = vmatprep.subr.mxu0 0.0
  %164 = vmatpush2.msra.mxu0 %v94
  %165 = vmatprep.subr.mxu0 0.0
  %166 = vmatpush2.msra.mxu0 %v93
  %167 = vmatprep.subr.mxu0 0.0
  %168 = vmatpush2.msra.mxu0 %v92
  %169 = vmatprep.subr.mxu0 0.0
  %170 = vmatpush2.msra.mxu0 %v91
  %171 = vmatprep.mubr.f32.mxu0 %v40
  %172 = vmatmul.mubr.f32.gmra.mxu0 %v39
  %v173 = vpop.f32.mrf.mxu0
  %v174 = vadd.f32 0.0, %v173
  %v175 = vpop.f32.mrf.mxu0
  %176 = vmatprep.mubr.f32.mxu0 %v42
  %177 = vmatmul.mubr.f32.gmra.mxu0 %v41
  %v178 = vpop.f32.mrf.mxu0
  %v179 = vadd.f32 0.0, %v178
  %v180 = vpop.f32.mrf.mxu0
  %181 = vmatprep.mubr.f32.mxu0 %v44
  %182 = vmatmul.mubr.f32.gmra.mxu0 %v43
  %v183 = vpop.f32.mrf.mxu0
  %v184 = vadd.f32 0.0, %v183
  %v185 = vpop.f32.mrf.mxu0
  %186 = vmatprep.mubr.f32.mxu0 %v46
  %187 = vmatmul.mubr.f32.gmra.mxu0 %v45
  %v188 = vpop.f32.mrf.mxu0
  %v189 = vadd.f32 0.0, %v188
  %v190 = vpop.f32.mrf.mxu0
  %191 = vmatprep.mubr.f32.mxu0 %v48
  %192 = vmatmul.mubr.f32.gmra.mxu0 %v47
  %v193 = vpop.f32.mrf.mxu0
  %v194 = vadd.f32 0.0, %v193
  %v195 = vpop.f32.mrf.mxu0
  %196 = vmatprep.mubr.f32.mxu0 %v50
  %197 = vmatmul.mubr.f32.gmra.mxu0 %v49
  %v198 = vpop.f32.mrf.mxu0
  %v199 = vadd.f32 0.0, %v198
  %v200 = vpop.f32.mrf.mxu0
  %201 = vmatprep.mubr.f32.mxu0 %v52
  %202 = vmatmul.mubr.f32.gmra.mxu0 %v51
  %v203 = vpop.f32.mrf.mxu0
  %v204 = vadd.f32 0.0, %v203
  %v205 = vpop.f32.mrf.mxu0
  %206 = vmatprep.mubr.f32.mxu0 %v54
  %207 = vmatmul.mubr.f32.gmra.mxu0 %v53
  %v208 = vpop.f32.mrf.mxu0
  %v209 = vadd.f32 0.0, %v208
  %v210 = vpop.f32.mrf.mxu0
  %211 = vdwg.mxu0
  %v212 = vld [vmem:[%s2] sm:$0xff]
  %v213 = vld [vmem:[%s2 + $0x8] sm:$0xff]
  %v214 = vld [vmem:[%s2 + $0x10] sm:$0xff]
  %v215 = vld [vmem:[%s2 + $0x18] sm:$0xff]
  %v216 = vld [vmem:[%s2 + $0x20] sm:$0xff]
  %v217 = vld [vmem:[%s2 + $0x28] sm:$0xff]
  %v218 = vld [vmem:[%s2 + $0x30] sm:$0xff]
  %v219 = vld [vmem:[%s2 + $0x38] sm:$0xff]
  %221 = vset.pattern.permute.xlu0 0
  %222 = vperm.xlu0 %221, %v212
  %v223 = vpop.permute.xlu0 %222
  %226 = vset.pattern.permute.xlu0 0
  %227 = vperm.xlu0 %226, %v213
  %v228 = vpop.permute.xlu0 %227
  %231 = vset.pattern.permute.xlu0 0
  %232 = vperm.xlu0 %231, %v214
  %v233 = vpop.permute.xlu0 %232
  %236 = vset.pattern.permute.xlu0 0
  %237 = vperm.xlu0 %236, %v215
  %v238 = vpop.permute.xlu0 %237
  %241 = vset.pattern.permute.xlu0 0
  %242 = vperm.xlu0 %241, %v216
  %v243 = vpop.permute.xlu0 %242
  %246 = vset.pattern.permute.xlu0 0
  %247 = vperm.xlu0 %246, %v217
  %v248 = vpop.permute.xlu0 %247
  %251 = vset.pattern.permute.xlu0 0
  %252 = vperm.xlu0 %251, %v218
  %v253 = vpop.permute.xlu0 %252
  %256 = vset.pattern.permute.xlu0 0
  %257 = vperm.xlu0 %256, %v219
  %v258 = vpop.permute.xlu0 %257
  %vm260 = vcmask 523264
  %v262 = vsel %vm260, %v55, 0
  %v265 = vsel %vm260, %v56, 0
  %v268 = vsel %vm260, %v57, 0
  %v271 = vsel %vm260, %v58, 0
  %v274 = vsel %vm260, %v59, 0
  %v277 = vsel %vm260, %v60, 0
  %v280 = vsel %vm260, %v61, 0
  %v283 = vsel %vm260, %v62, 0
  %285 = vmatprep.subr.mxu0 0.0
  %286 = vmatpush1.msra.mxu0 0.0
  %287 = vmatprep.subr.mxu0 0.0
  %288 = vmatpush1.msra.mxu0 0.0
  %289 = vmatprep.subr.mxu0 0.0
  %290 = vmatpush1.msra.mxu0 0.0
  %291 = vmatprep.subr.mxu0 0.0
  %292 = vmatpush1.msra.mxu0 0.0
  %293 = vmatprep.subr.mxu0 0.0
  %294 = vmatpush1.msra.mxu0 0.0
  %295 = vmatprep.subr.mxu0 0.0
  %296 = vmatpush1.msra.mxu0 0.0
  %297 = vmatprep.subr.mxu0 0.0
  %298 = vmatpush1.msra.mxu0 0.0
  %299 = vmatprep.subr.mxu0 0.0
  %300 = vmatpush1.msra.mxu0 0.0
  %301 = vmatprep.subr.mxu0 0.0
  %302 = vmatpush1.msra.mxu0 %v209
  %303 = vmatprep.subr.mxu0 0.0
  %304 = vmatpush1.msra.mxu0 %v204
  %305 = vmatprep.subr.mxu0 0.0
  %306 = vmatpush1.msra.mxu0 %v199
  %307 = vmatprep.subr.mxu0 0.0
  %308 = vmatpush1.msra.mxu0 %v194
  %309 = vmatprep.subr.mxu0 0.0
  %310 = vmatpush1.msra.mxu0 %v189
  %311 = vmatprep.subr.mxu0 0.0
  %312 = vmatpush1.msra.mxu0 %v184
  %313 = vmatprep.subr.mxu0 0.0
  %314 = vmatpush1.msra.mxu0 %v179
  %315 = vmatprep.subr.mxu0 0.0
  %316 = vmatpush1.msra.mxu0 %v174
  %317 = vmatprep.subr.mxu0 0.0
  %318 = vmatpush2.msra.mxu0 0.0
  %319 = vmatprep.subr.mxu0 0.0
  %320 = vmatpush2.msra.mxu0 0.0
  %321 = vmatprep.subr.mxu0 0.0
  %322 = vmatpush2.msra.mxu0 0.0
  %323 = vmatprep.subr.mxu0 0.0
  %324 = vmatpush2.msra.mxu0 0.0
  %325 = vmatprep.subr.mxu0 0.0
  %326 = vmatpush2.msra.mxu0 0.0
  %327 = vmatprep.subr.mxu0 0.0
  %328 = vmatpush2.msra.mxu0 0.0
  %329 = vmatprep.subr.mxu0 0.0
  %330 = vmatpush2.msra.mxu0 0.0
  %331 = vmatprep.subr.mxu0 0.0
  %332 = vmatpush2.msra.mxu0 0.0
  %333 = vmatprep.subr.mxu0 0.0
  %334 = vmatpush2.msra.mxu0 0.0
  %335 = vmatprep.subr.mxu0 0.0
  %336 = vmatpush2.msra.mxu0 0.0
  %337 = vmatprep.subr.mxu0 0.0
  %338 = vmatpush2.msra.mxu0 0.0
  %339 = vmatprep.subr.mxu0 0.0
  %340 = vmatpush2.msra.mxu0 0.0
  %341 = vmatprep.subr.mxu0 0.0
  %342 = vmatpush2.msra.mxu0 0.0
  %343 = vmatprep.subr.mxu0 0.0
  %344 = vmatpush2.msra.mxu0 0.0
  %345 = vmatprep.subr.mxu0 0.0
  %346 = vmatpush2.msra.mxu0 0.0
  %347 = vmatprep.subr.mxu0 0.0
  %348 = vmatpush2.msra.mxu0 0.0
  %349 = vmatprep.mubr.f32.mxu0 0.0
  %350 = vmatmul.mubr.f32.gmra.mxu0 %v262
  %v351 = vpop.f32.mrf.mxu0
  %v352 = vadd.f32 %v223, %v351
  %v353 = vpop.f32.mrf.mxu0
  %354 = vmatprep.mubr.f32.mxu0 0.0
  %355 = vmatmul.mubr.f32.gmra.mxu0 %v265
  %v356 = vpop.f32.mrf.mxu0
  %v357 = vadd.f32 %v228, %v356
  %v358 = vpop.f32.mrf.mxu0
  %359 = vmatprep.mubr.f32.mxu0 0.0
  %360 = vmatmul.mubr.f32.gmra.mxu0 %v268
  %v361 = vpop.f32.mrf.mxu0
  %v362 = vadd.f32 %v233, %v361
  %v363 = vpop.f32.mrf.mxu0
  %364 = vmatprep.mubr.f32.mxu0 0.0
  %365 = vmatmul.mubr.f32.gmra.mxu0 %v271
  %v366 = vpop.f32.mrf.mxu0
  %v367 = vadd.f32 %v238, %v366
  %v368 = vpop.f32.mrf.mxu0
  %369 = vmatprep.mubr.f32.mxu0 0.0
  %370 = vmatmul.mubr.f32.gmra.mxu0 %v274
  %v371 = vpop.f32.mrf.mxu0
  %v372 = vadd.f32 %v243, %v371
  %v373 = vpop.f32.mrf.mxu0
  %374 = vmatprep.mubr.f32.mxu0 0.0
  %375 = vmatmul.mubr.f32.gmra.mxu0 %v277
  %v376 = vpop.f32.mrf.mxu0
  %v377 = vadd.f32 %v248, %v376
  %v378 = vpop.f32.mrf.mxu0
  %379 = vmatprep.mubr.f32.mxu0 0.0
  %380 = vmatmul.mubr.f32.gmra.mxu0 %v280
  %v381 = vpop.f32.mrf.mxu0
  %v382 = vadd.f32 %v253, %v381
  %v383 = vpop.f32.mrf.mxu0
  %384 = vmatprep.mubr.f32.mxu0 0.0
  %385 = vmatmul.mubr.f32.gmra.mxu0 %v283
  %v386 = vpop.f32.mrf.mxu0
  %v387 = vadd.f32 %v258, %v386
  %v388 = vpop.f32.mrf.mxu0
  %389 = vdwg.mxu0
  %v390 = vxor.u32 %v352, 2147483648
  %v391 = vxor.u32 %v357, 2147483648
  %v392 = vxor.u32 %v362, 2147483648
  %v393 = vxor.u32 %v367, 2147483648
  %v394 = vxor.u32 %v372, 2147483648
  %v395 = vxor.u32 %v377, 2147483648
  %v396 = vxor.u32 %v382, 2147483648
  %v397 = vxor.u32 %v387, 2147483648
  %v398 = vmul.f32 %v390, 1.442695
  %v399 = vpow.pop %v398
  %v400 = vmul.f32 %v391, 1.442695
  %v401 = vpow.pop %v400
  %v402 = vmul.f32 %v392, 1.442695
  %v403 = vpow.pop %v402
  %v404 = vmul.f32 %v393, 1.442695
  %v405 = vpow.pop %v404
  %v406 = vmul.f32 %v394, 1.442695
  %v407 = vpow.pop %v406
  %v408 = vmul.f32 %v395, 1.442695
  %v409 = vpow.pop %v408
  %v410 = vmul.f32 %v396, 1.442695
  %v411 = vpow.pop %v410
  %v412 = vmul.f32 %v397, 1.442695
  %v413 = vpow.pop %v412
  %v414 = vadd.f32 %v399, 1.0
  %v415 = vadd.f32 %v401, 1.0
  %v416 = vadd.f32 %v403, 1.0
  %v417 = vadd.f32 %v405, 1.0
  %v418 = vadd.f32 %v407, 1.0
  %v419 = vadd.f32 %v409, 1.0
  %v420 = vadd.f32 %v411, 1.0
  %v421 = vadd.f32 %v413, 1.0
  %v422 = vrcp.pop %v414
  %v423 = vmul.f32 1.0, %v422
  %v424 = vrcp.pop %v415
  %v425 = vmul.f32 1.0, %v424
  %v426 = vrcp.pop %v416
  %v427 = vmul.f32 1.0, %v426
  %v428 = vrcp.pop %v417
  %v429 = vmul.f32 1.0, %v428
  %v430 = vrcp.pop %v418
  %v431 = vmul.f32 1.0, %v430
  %v432 = vrcp.pop %v419
  %v433 = vmul.f32 1.0, %v432
  %v434 = vrcp.pop %v420
  %v435 = vmul.f32 1.0, %v434
  %v436 = vrcp.pop %v421
  %v437 = vmul.f32 1.0, %v436
  %v438 = vmul.f32 %v352, %v423
  %v439 = vmul.f32 %v357, %v425
  %v440 = vmul.f32 %v362, %v427
  %v441 = vmul.f32 %v367, %v429
  %v442 = vmul.f32 %v372, %v431
  %v443 = vmul.f32 %v377, %v433
  %v444 = vmul.f32 %v382, %v435
  %v445 = vmul.f32 %v387, %v437
  %v446 = vxor.u32 %v438, 2147483648
  %v447 = vxor.u32 %v439, 2147483648
  %v448 = vxor.u32 %v440, 2147483648
  %v449 = vxor.u32 %v441, 2147483648
  %v450 = vxor.u32 %v442, 2147483648
  %v451 = vxor.u32 %v443, 2147483648
  %v452 = vxor.u32 %v444, 2147483648
  %v453 = vxor.u32 %v445, 2147483648
  %v454 = vmul.f32 %v446, 1.442695
  %v455 = vpow.pop %v454
  %v456 = vmul.f32 %v447, 1.442695
  %v457 = vpow.pop %v456
  %v458 = vmul.f32 %v448, 1.442695
  %v459 = vpow.pop %v458
  %v460 = vmul.f32 %v449, 1.442695
  %v461 = vpow.pop %v460
  %v462 = vmul.f32 %v450, 1.442695
  %v463 = vpow.pop %v462
  %v464 = vmul.f32 %v451, 1.442695
  %v465 = vpow.pop %v464
  %v466 = vmul.f32 %v452, 1.442695
  %v467 = vpow.pop %v466
  %v468 = vmul.f32 %v453, 1.442695
  %v469 = vpow.pop %v468
  %v470 = vadd.f32 %v455, 1.0
  %v471 = vadd.f32 %v457, 1.0
  %v472 = vadd.f32 %v459, 1.0
  %v473 = vadd.f32 %v461, 1.0
  %v474 = vadd.f32 %v463, 1.0
  %v475 = vadd.f32 %v465, 1.0
  %v476 = vadd.f32 %v467, 1.0
  %v477 = vadd.f32 %v469, 1.0
  %v478 = vrcp.pop %v470
  %v479 = vmul.f32 1.0, %v478
  %v480 = vrcp.pop %v471
  %v481 = vmul.f32 1.0, %v480
  %v482 = vrcp.pop %v472
  %v483 = vmul.f32 1.0, %v482
  %v484 = vrcp.pop %v473
  %v485 = vmul.f32 1.0, %v484
  %v486 = vrcp.pop %v474
  %v487 = vmul.f32 1.0, %v486
  %v488 = vrcp.pop %v475
  %v489 = vmul.f32 1.0, %v488
  %v490 = vrcp.pop %v476
  %v491 = vmul.f32 1.0, %v490
  %v492 = vrcp.pop %v477
  %v493 = vmul.f32 1.0, %v492
  %502 = vrot.lane.b32.xlu0 %v479, 112
  %v503 = vpop.permute.xlu0 %502
  %504 = vrot.lane.b32.xlu0 %v481, 112
  %v505 = vpop.permute.xlu0 %504
  %506 = vrot.lane.b32.xlu0 %v483, 112
  %v507 = vpop.permute.xlu0 %506
  %508 = vrot.lane.b32.xlu0 %v485, 112
  %v509 = vpop.permute.xlu0 %508
  %510 = vrot.lane.b32.xlu0 %v487, 112
  %v511 = vpop.permute.xlu0 %510
  %512 = vrot.lane.b32.xlu0 %v489, 112
  %v513 = vpop.permute.xlu0 %512
  %514 = vrot.lane.b32.xlu0 %v491, 112
  %v515 = vpop.permute.xlu0 %514
  %516 = vrot.lane.b32.xlu0 %v493, 112
  %v517 = vpop.permute.xlu0 %516
  %v526 = vmul.f32 %v479, %v503
  %v527 = vmul.f32 %v481, %v505
  %v528 = vmul.f32 %v483, %v507
  %v529 = vmul.f32 %v485, %v509
  %v530 = vmul.f32 %v487, %v511
  %v531 = vmul.f32 %v489, %v513
  %v532 = vmul.f32 %v491, %v515
  %v533 = vmul.f32 %v493, %v517
  %v534 = vld [vmem:[%s9] sm:$0xff]
  %v535 = vld [vmem:[%s9 + $0x8] sm:$0xff]
  %v536 = vld [vmem:[%s9 + $0x10] sm:$0xff]
  %v537 = vld [vmem:[%s9 + $0x18] sm:$0xff]
  %vm538 = vcmask 130048
  %v540 = vsel %vm538, %v526, 0
  %v543 = vsel %vm538, %v527, 0
  %v546 = vsel %vm538, %v528, 0
  %v549 = vsel %vm538, %v529, 0
  %v552 = vsel %vm538, %v530, 0
  %v555 = vsel %vm538, %v531, 0
  %v558 = vsel %vm538, %v532, 0
  %v561 = vsel %vm538, %v533, 0
  %563 = vmatprep.subr.mxu0 0.0
  %564 = vmatpush1.msra.mxu0 0.0
  %565 = vmatprep.subr.mxu0 0.0
  %566 = vmatpush1.msra.mxu0 0.0
  %567 = vmatprep.subr.mxu0 0.0
  %568 = vmatpush1.msra.mxu0 0.0
  %569 = vmatprep.subr.mxu0 0.0
  %570 = vmatpush1.msra.mxu0 0.0
  %571 = vmatprep.subr.mxu0 0.0
  %572 = vmatpush1.msra.mxu0 0.0
  %573 = vmatprep.subr.mxu0 0.0
  %574 = vmatpush1.msra.mxu0 0.0
  %575 = vmatprep.subr.mxu0 0.0
  %576 = vmatpush1.msra.mxu0 0.0
  %577 = vmatprep.subr.mxu0 0.0
  %578 = vmatpush1.msra.mxu0 0.0
  %579 = vmatprep.subr.mxu0 0.0
  %580 = vmatpush1.msra.mxu0 0.0
  %581 = vmatprep.subr.mxu0 0.0
  %582 = vmatpush1.msra.mxu0 0.0
  %583 = vmatprep.subr.mxu0 0.0
  %584 = vmatpush1.msra.mxu0 0.0
  %585 = vmatprep.subr.mxu0 0.0
  %586 = vmatpush1.msra.mxu0 0.0
  %587 = vmatprep.subr.mxu0 0.0
  %588 = vmatpush1.msra.mxu0 0.0
  %589 = vmatprep.subr.mxu0 0.0
  %590 = vmatpush1.msra.mxu0 0.0
  %591 = vmatprep.subr.mxu0 %v537
  %592 = vmatpush1.msra.mxu0 %v536
  %593 = vmatprep.subr.mxu0 %v535
  %594 = vmatpush1.msra.mxu0 %v534
  %595 = vmatprep.subr.mxu0 0.0
  %596 = vmatpush2.msra.mxu0 0.0
  %597 = vmatprep.subr.mxu0 0.0
  %598 = vmatpush2.msra.mxu0 0.0
  %599 = vmatprep.subr.mxu0 0.0
  %600 = vmatpush2.msra.mxu0 0.0
  %601 = vmatprep.subr.mxu0 0.0
  %602 = vmatpush2.msra.mxu0 0.0
  %603 = vmatprep.subr.mxu0 0.0
  %604 = vmatpush2.msra.mxu0 0.0
  %605 = vmatprep.subr.mxu0 0.0
  %606 = vmatpush2.msra.mxu0 0.0
  %607 = vmatprep.subr.mxu0 0.0
  %608 = vmatpush2.msra.mxu0 0.0
  %609 = vmatprep.subr.mxu0 0.0
  %610 = vmatpush2.msra.mxu0 0.0
  %611 = vmatprep.subr.mxu0 0.0
  %612 = vmatpush2.msra.mxu0 0.0
  %613 = vmatprep.subr.mxu0 0.0
  %614 = vmatpush2.msra.mxu0 0.0
  %615 = vmatprep.subr.mxu0 0.0
  %616 = vmatpush2.msra.mxu0 0.0
  %617 = vmatprep.subr.mxu0 0.0
  %618 = vmatpush2.msra.mxu0 0.0
  %619 = vmatprep.subr.mxu0 0.0
  %620 = vmatpush2.msra.mxu0 0.0
  %621 = vmatprep.subr.mxu0 0.0
  %622 = vmatpush2.msra.mxu0 0.0
  %623 = vmatprep.subr.mxu0 0.0
  %624 = vmatpush2.msra.mxu0 0.0
  %625 = vmatprep.subr.mxu0 0.0
  %626 = vmatpush2.msra.mxu0 0.0
  %627 = vmatprep.mubr.f32.mxu0 0.0
  %628 = vmatmul.mubr.f32.gmra.mxu0 %v540
  %v629 = vpop.f32.mrf.mxu0
  %v630 = vadd.f32 0.0, %v629
  %v631 = vpop.f32.mrf.mxu0
  %v632 = vadd.f32 0.0, %v631
  %633 = vmatprep.mubr.f32.mxu0 0.0
  %634 = vmatmul.mubr.f32.gmra.mxu0 %v543
  %v635 = vpop.f32.mrf.mxu0
  %v636 = vadd.f32 0.0, %v635
  %v637 = vpop.f32.mrf.mxu0
  %v638 = vadd.f32 0.0, %v637
  %639 = vmatprep.mubr.f32.mxu0 0.0
  %640 = vmatmul.mubr.f32.gmra.mxu0 %v546
  %v641 = vpop.f32.mrf.mxu0
  %v642 = vadd.f32 0.0, %v641
  %v643 = vpop.f32.mrf.mxu0
  %v644 = vadd.f32 0.0, %v643
  %645 = vmatprep.mubr.f32.mxu0 0.0
  %646 = vmatmul.mubr.f32.gmra.mxu0 %v549
  %v647 = vpop.f32.mrf.mxu0
  %v648 = vadd.f32 0.0, %v647
  %v649 = vpop.f32.mrf.mxu0
  %v650 = vadd.f32 0.0, %v649
  %651 = vmatprep.mubr.f32.mxu0 0.0
  %652 = vmatmul.mubr.f32.gmra.mxu0 %v552
  %v653 = vpop.f32.mrf.mxu0
  %v654 = vadd.f32 0.0, %v653
  %v655 = vpop.f32.mrf.mxu0
  %v656 = vadd.f32 0.0, %v655
  %657 = vmatprep.mubr.f32.mxu0 0.0
  %658 = vmatmul.mubr.f32.gmra.mxu0 %v555
  %v659 = vpop.f32.mrf.mxu0
  %v660 = vadd.f32 0.0, %v659
  %v661 = vpop.f32.mrf.mxu0
  %v662 = vadd.f32 0.0, %v661
  %663 = vmatprep.mubr.f32.mxu0 0.0
  %664 = vmatmul.mubr.f32.gmra.mxu0 %v558
  %v665 = vpop.f32.mrf.mxu0
  %v666 = vadd.f32 0.0, %v665
  %v667 = vpop.f32.mrf.mxu0
  %v668 = vadd.f32 0.0, %v667
  %669 = vmatprep.mubr.f32.mxu0 0.0
  %670 = vmatmul.mubr.f32.gmra.mxu0 %v561
  %v671 = vpop.f32.mrf.mxu0
  %v672 = vadd.f32 0.0, %v671
  %v673 = vpop.f32.mrf.mxu0
  %v674 = vadd.f32 0.0, %v673
  %675 = vdwg.mxu0
  %v676 = vmul.f32 %v39, %v630
  %v677 = vmul.f32 %v40, %v632
  %v678 = vmul.f32 %v41, %v636
  %v679 = vmul.f32 %v42, %v638
  %v680 = vmul.f32 %v43, %v642
  %v681 = vmul.f32 %v44, %v644
  %v682 = vmul.f32 %v45, %v648
  %v683 = vmul.f32 %v46, %v650
  %v684 = vmul.f32 %v47, %v654
  %v685 = vmul.f32 %v48, %v656
  %v686 = vmul.f32 %v49, %v660
  %v687 = vmul.f32 %v50, %v662
  %v688 = vmul.f32 %v51, %v666
  %v689 = vmul.f32 %v52, %v668
  %v690 = vmul.f32 %v53, %v672
  %v691 = vmul.f32 %v54, %v674
  %v692 = vadd.f32 %v676, %v677
  %693 = vadd.xlane.f32.xlu0 %v692
  %v694 = vpop.xlane.xlu0 %693
  %v695 = vadd.f32 %v678, %v679
  %696 = vadd.xlane.f32.xlu0 %v695
  %v697 = vpop.xlane.xlu0 %696
  %v698 = vadd.f32 %v680, %v681
  %699 = vadd.xlane.f32.xlu0 %v698
  %v700 = vpop.xlane.xlu0 %699
  %v701 = vadd.f32 %v682, %v683
  %702 = vadd.xlane.f32.xlu0 %v701
  %v703 = vpop.xlane.xlu0 %702
  %v704 = vadd.f32 %v684, %v685
  %705 = vadd.xlane.f32.xlu0 %v704
  %v706 = vpop.xlane.xlu0 %705
  %v707 = vadd.f32 %v686, %v687
  %708 = vadd.xlane.f32.xlu0 %v707
  %v709 = vpop.xlane.xlu0 %708
  %v710 = vadd.f32 %v688, %v689
  %711 = vadd.xlane.f32.xlu0 %v710
  %v712 = vpop.xlane.xlu0 %711
  %v713 = vadd.f32 %v690, %v691
  %714 = vadd.xlane.f32.xlu0 %v713
  %v715 = vpop.xlane.xlu0 %714
  %v716 = vrcp.pop 256.0
  %v717 = vmul.f32 %v694, %v716
  %v718 = vmul.f32 %v697, %v716
  %v719 = vmul.f32 %v700, %v716
  %v720 = vmul.f32 %v703, %v716
  %v721 = vmul.f32 %v706, %v716
  %v722 = vmul.f32 %v709, %v716
  %v723 = vmul.f32 %v712, %v716
  %v724 = vmul.f32 %v715, %v716
  %v725 = vmul.f32 %v676, %v676
  %v726 = vmul.f32 %v677, %v677
  %v727 = vmul.f32 %v678, %v678
  %v728 = vmul.f32 %v679, %v679
  %v729 = vmul.f32 %v680, %v680
  %v730 = vmul.f32 %v681, %v681
  %v731 = vmul.f32 %v682, %v682
  %v732 = vmul.f32 %v683, %v683
  %v733 = vmul.f32 %v684, %v684
  %v734 = vmul.f32 %v685, %v685
  %v735 = vmul.f32 %v686, %v686
  %v736 = vmul.f32 %v687, %v687
  %v737 = vmul.f32 %v688, %v688
  %v738 = vmul.f32 %v689, %v689
  %v739 = vmul.f32 %v690, %v690
  %v740 = vmul.f32 %v691, %v691
  %v741 = vadd.f32 %v725, %v726
  %742 = vadd.xlane.f32.xlu0 %v741
  %v743 = vpop.xlane.xlu0 %742
  %v744 = vadd.f32 %v727, %v728
  %745 = vadd.xlane.f32.xlu0 %v744
  %v746 = vpop.xlane.xlu0 %745
  %v747 = vadd.f32 %v729, %v730
  %748 = vadd.xlane.f32.xlu0 %v747
  %v749 = vpop.xlane.xlu0 %748
  %v750 = vadd.f32 %v731, %v732
  %751 = vadd.xlane.f32.xlu0 %v750
  %v752 = vpop.xlane.xlu0 %751
  %v753 = vadd.f32 %v733, %v734
  %754 = vadd.xlane.f32.xlu0 %v753
  %v755 = vpop.xlane.xlu0 %754
  %v756 = vadd.f32 %v735, %v736
  %757 = vadd.xlane.f32.xlu0 %v756
  %v758 = vpop.xlane.xlu0 %757
  %v759 = vadd.f32 %v737, %v738
  %760 = vadd.xlane.f32.xlu0 %v759
  %v761 = vpop.xlane.xlu0 %760
  %v762 = vadd.f32 %v739, %v740
  %763 = vadd.xlane.f32.xlu0 %v762
  %v764 = vpop.xlane.xlu0 %763
  %v765 = vmul.f32 %v743, %v716
  %v766 = vmul.f32 %v746, %v716
  %v767 = vmul.f32 %v749, %v716
  %v768 = vmul.f32 %v752, %v716
  %v769 = vmul.f32 %v755, %v716
  %v770 = vmul.f32 %v758, %v716
  %v771 = vmul.f32 %v761, %v716
  %v772 = vmul.f32 %v764, %v716
  %v773 = vmul.f32 %v717, %v717
  %v774 = vmul.f32 %v718, %v718
  %v775 = vmul.f32 %v719, %v719
  %v776 = vmul.f32 %v720, %v720
  %v777 = vmul.f32 %v721, %v721
  %v778 = vmul.f32 %v722, %v722
  %v779 = vmul.f32 %v723, %v723
  %v780 = vmul.f32 %v724, %v724
  %v781 = vsub.f32 %v765, %v773
  %v782 = vsub.f32 %v766, %v774
  %v783 = vsub.f32 %v767, %v775
  %v784 = vsub.f32 %v768, %v776
  %v785 = vsub.f32 %v769, %v777
  %v786 = vsub.f32 %v770, %v778
  %v787 = vsub.f32 %v771, %v779
  %v788 = vsub.f32 %v772, %v780
  %v789 = vsub.f32 %v676, %v717
  %v790 = vsub.f32 %v677, %v717
  %v791 = vsub.f32 %v678, %v718
  %v792 = vsub.f32 %v679, %v718
  %v793 = vsub.f32 %v680, %v719
  %v794 = vsub.f32 %v681, %v719
  %v795 = vsub.f32 %v682, %v720
  %v796 = vsub.f32 %v683, %v720
  %v797 = vsub.f32 %v684, %v721
  %v798 = vsub.f32 %v685, %v721
  %v799 = vsub.f32 %v686, %v722
  %v800 = vsub.f32 %v687, %v722
  %v801 = vsub.f32 %v688, %v723
  %v802 = vsub.f32 %v689, %v723
  %v803 = vsub.f32 %v690, %v724
  %v804 = vsub.f32 %v691, %v724
  %v805 = vadd.f32 %v781, 1e-05
  %v806 = vadd.f32 %v782, 1e-05
  %v807 = vadd.f32 %v783, 1e-05
  %v808 = vadd.f32 %v784, 1e-05
  %v809 = vadd.f32 %v785, 1e-05
  %v810 = vadd.f32 %v786, 1e-05
  %v811 = vadd.f32 %v787, 1e-05
  %v812 = vadd.f32 %v788, 1e-05
  %v813 = vrsqrt.pop %v805
  %v814 = vrsqrt.pop %v806
  %v815 = vrsqrt.pop %v807
  %v816 = vrsqrt.pop %v808
  %v817 = vrsqrt.pop %v809
  %v818 = vrsqrt.pop %v810
  %v819 = vrsqrt.pop %v811
  %v820 = vrsqrt.pop %v812
  %v821 = vmul.f32 %v789, %v813
  %v822 = vmul.f32 %v790, %v813
  %v823 = vmul.f32 %v791, %v814
  %v824 = vmul.f32 %v792, %v814
  %v825 = vmul.f32 %v793, %v815
  %v826 = vmul.f32 %v794, %v815
  %v827 = vmul.f32 %v795, %v816
  %v828 = vmul.f32 %v796, %v816
  %v829 = vmul.f32 %v797, %v817
  %v830 = vmul.f32 %v798, %v817
  %v831 = vmul.f32 %v799, %v818
  %v832 = vmul.f32 %v800, %v818
  %v833 = vmul.f32 %v801, %v819
  %v834 = vmul.f32 %v802, %v819
  %v835 = vmul.f32 %v803, %v820
  %v836 = vmul.f32 %v804, %v820
  %v837 = vld [vmem:[%s5] sm:$0xff]
  %v838 = vld [vmem:[%s5 + $0x8] sm:$0xff]
  %v839 = vld [vmem:[%s5 + $0x10] sm:$0xff]
  %v840 = vld [vmem:[%s5 + $0x18] sm:$0xff]
  %v841 = vld [vmem:[%s5 + $0x20] sm:$0xff]
  %v842 = vld [vmem:[%s5 + $0x28] sm:$0xff]
  %v843 = vld [vmem:[%s5 + $0x30] sm:$0xff]
  %v844 = vld [vmem:[%s5 + $0x38] sm:$0xff]
  %846 = vset.pattern.permute.xlu0 0
  %847 = vperm.xlu0 %846, %v837
  %v848 = vpop.permute.xlu0 %847
  %851 = vset.pattern.permute.xlu0 0
  %852 = vperm.xlu0 %851, %v838
  %v853 = vpop.permute.xlu0 %852
  %856 = vset.pattern.permute.xlu0 0
  %857 = vperm.xlu0 %856, %v839
  %v858 = vpop.permute.xlu0 %857
  %861 = vset.pattern.permute.xlu0 0
  %862 = vperm.xlu0 %861, %v840
  %v863 = vpop.permute.xlu0 %862
  %866 = vset.pattern.permute.xlu0 0
  %867 = vperm.xlu0 %866, %v841
  %v868 = vpop.permute.xlu0 %867
  %871 = vset.pattern.permute.xlu0 0
  %872 = vperm.xlu0 %871, %v842
  %v873 = vpop.permute.xlu0 %872
  %876 = vset.pattern.permute.xlu0 0
  %877 = vperm.xlu0 %876, %v843
  %v878 = vpop.permute.xlu0 %877
  %881 = vset.pattern.permute.xlu0 0
  %882 = vperm.xlu0 %881, %v844
  %v883 = vpop.permute.xlu0 %882
  %v885 = vmul.f32 %v821, %v848
  %v886 = vmul.f32 %v822, %v848
  %v887 = vmul.f32 %v823, %v853
  %v888 = vmul.f32 %v824, %v853
  %v889 = vmul.f32 %v825, %v858
  %v890 = vmul.f32 %v826, %v858
  %v891 = vmul.f32 %v827, %v863
  %v892 = vmul.f32 %v828, %v863
  %v893 = vmul.f32 %v829, %v868
  %v894 = vmul.f32 %v830, %v868
  %v895 = vmul.f32 %v831, %v873
  %v896 = vmul.f32 %v832, %v873
  %v897 = vmul.f32 %v833, %v878
  %v898 = vmul.f32 %v834, %v878
  %v899 = vmul.f32 %v835, %v883
  %v900 = vmul.f32 %v836, %v883
  %v901 = vld [vmem:[%s6] sm:$0xff]
  %v902 = vld [vmem:[%s6 + $0x8] sm:$0xff]
  %v903 = vld [vmem:[%s6 + $0x10] sm:$0xff]
  %v904 = vld [vmem:[%s6 + $0x18] sm:$0xff]
  %v905 = vld [vmem:[%s6 + $0x20] sm:$0xff]
  %v906 = vld [vmem:[%s6 + $0x28] sm:$0xff]
  %v907 = vld [vmem:[%s6 + $0x30] sm:$0xff]
  %v908 = vld [vmem:[%s6 + $0x38] sm:$0xff]
  %910 = vset.pattern.permute.xlu0 0
  %911 = vperm.xlu0 %910, %v901
  %v912 = vpop.permute.xlu0 %911
  %915 = vset.pattern.permute.xlu0 0
  %916 = vperm.xlu0 %915, %v902
  %v917 = vpop.permute.xlu0 %916
  %920 = vset.pattern.permute.xlu0 0
  %921 = vperm.xlu0 %920, %v903
  %v922 = vpop.permute.xlu0 %921
  %925 = vset.pattern.permute.xlu0 0
  %926 = vperm.xlu0 %925, %v904
  %v927 = vpop.permute.xlu0 %926
  %930 = vset.pattern.permute.xlu0 0
  %931 = vperm.xlu0 %930, %v905
  %v932 = vpop.permute.xlu0 %931
  %935 = vset.pattern.permute.xlu0 0
  %936 = vperm.xlu0 %935, %v906
  %v937 = vpop.permute.xlu0 %936
  %940 = vset.pattern.permute.xlu0 0
  %941 = vperm.xlu0 %940, %v907
  %v942 = vpop.permute.xlu0 %941
  %945 = vset.pattern.permute.xlu0 0
  %946 = vperm.xlu0 %945, %v908
  %v947 = vpop.permute.xlu0 %946
  %v949 = vadd.f32 %v885, %v912
  %v950 = vadd.f32 %v886, %v912
  %v951 = vadd.f32 %v887, %v917
  %v952 = vadd.f32 %v888, %v917
  %v953 = vadd.f32 %v889, %v922
  %v954 = vadd.f32 %v890, %v922
  %v955 = vadd.f32 %v891, %v927
  %v956 = vadd.f32 %v892, %v927
  %v957 = vadd.f32 %v893, %v932
  %v958 = vadd.f32 %v894, %v932
  %v959 = vadd.f32 %v895, %v937
  %v960 = vadd.f32 %v896, %v937
  %v961 = vadd.f32 %v897, %v942
  %v962 = vadd.f32 %v898, %v942
  %v963 = vadd.f32 %v899, %v947
  %v964 = vadd.f32 %v900, %v947
  %965 = vrot.lane.b32.xlu0 %v39, 17
  %v966 = vpop.permute.xlu0 %965
  %967 = vrot.lane.b32.xlu0 %v41, 17
  %v968 = vpop.permute.xlu0 %967
  %969 = vrot.lane.b32.xlu0 %v43, 17
  %v970 = vpop.permute.xlu0 %969
  %971 = vrot.lane.b32.xlu0 %v45, 17
  %v972 = vpop.permute.xlu0 %971
  %973 = vrot.lane.b32.xlu0 %v47, 17
  %v974 = vpop.permute.xlu0 %973
  %975 = vrot.lane.b32.xlu0 %v49, 17
  %v976 = vpop.permute.xlu0 %975
  %977 = vrot.lane.b32.xlu0 %v51, 17
  %v978 = vpop.permute.xlu0 %977
  %979 = vrot.lane.b32.xlu0 %v53, 17
  %v980 = vpop.permute.xlu0 %979
  %981 = vrot.lane.b32.xlu0 %v40, 17
  %v982 = vpop.permute.xlu0 %981
  %983 = vrot.lane.b32.xlu0 %v42, 17
  %v984 = vpop.permute.xlu0 %983
  %985 = vrot.lane.b32.xlu0 %v44, 17
  %v986 = vpop.permute.xlu0 %985
  %987 = vrot.lane.b32.xlu0 %v46, 17
  %v988 = vpop.permute.xlu0 %987
  %989 = vrot.lane.b32.xlu0 %v48, 17
  %v990 = vpop.permute.xlu0 %989
  %991 = vrot.lane.b32.xlu0 %v50, 17
  %v992 = vpop.permute.xlu0 %991
  %993 = vrot.lane.b32.xlu0 %v52, 17
  %v994 = vpop.permute.xlu0 %993
  %995 = vrot.lane.b32.xlu0 %v54, 17
  %v996 = vpop.permute.xlu0 %995
  %v997 = vlaneseq
  %v998 = vand.u32 %v997, 127
  %vm999 = vcmp.lt.s32.totalorder %v998, 17
  %v1000 = vsel %vm999, %v966, %v982
  %v1001 = vsel %vm999, %v968, %v984
  %v1002 = vsel %vm999, %v970, %v986
  %v1003 = vsel %vm999, %v972, %v988
  %v1004 = vsel %vm999, %v974, %v990
  %v1005 = vsel %vm999, %v976, %v992
  %v1006 = vsel %vm999, %v978, %v994
  %v1007 = vsel %vm999, %v980, %v996
  %v1008 = vsel %vm999, %v982, %v966
  %v1009 = vsel %vm999, %v984, %v968
  %v1010 = vsel %vm999, %v986, %v970
  %v1011 = vsel %vm999, %v988, %v972
  %v1012 = vsel %vm999, %v990, %v974
  %v1013 = vsel %vm999, %v992, %v976
  %v1014 = vsel %vm999, %v994, %v978
  %v1015 = vsel %vm999, %v996, %v980
  %v1016 = vlaneseq
  %v1017 = vshrl.u32 %v1016, 7
  %v1018 = vsub.s32 0, %v1017
  %v1019 = vrot.slane %v71, %v1018
  %v1020 = vlaneseq
  %v1021 = vshrl.u32 %v1020, 7
  %v1022 = vsub.s32 0, %v1021
  %v1023 = vrot.slane %v72, %v1022
  %v1024 = vmul.f32 %v1008, %v1019
  %v1025 = vmul.f32 %v1000, %v1023
  %v1026 = vmul.f32 %v1009, %v1019
  %v1027 = vmul.f32 %v1001, %v1023
  %v1028 = vmul.f32 %v1010, %v1019
  %v1029 = vmul.f32 %v1002, %v1023
  %v1030 = vmul.f32 %v1011, %v1019
  %v1031 = vmul.f32 %v1003, %v1023
  %v1032 = vmul.f32 %v1012, %v1019
  %v1033 = vmul.f32 %v1004, %v1023
  %v1034 = vmul.f32 %v1013, %v1019
  %v1035 = vmul.f32 %v1005, %v1023
  %v1036 = vmul.f32 %v1014, %v1019
  %v1037 = vmul.f32 %v1006, %v1023
  %v1038 = vmul.f32 %v1015, %v1019
  %v1039 = vmul.f32 %v1007, %v1023
  %v1040 = vpack.c.bf16 %v1026, %v1024
  %v1041 = vpack.c.bf16 %v1027, %v1025
  %v1042 = vpack.c.bf16 %v1030, %v1028
  %v1043 = vpack.c.bf16 %v1031, %v1029
  %v1044 = vpack.c.bf16 %v1034, %v1032
  %v1045 = vpack.c.bf16 %v1035, %v1033
  %v1046 = vpack.c.bf16 %v1038, %v1036
  %v1047 = vpack.c.bf16 %v1039, %v1037
  %1048 = vrot.lane.b32.xlu0 %v39, 16
  %v1049 = vpop.permute.xlu0 %1048
  %1050 = vrot.lane.b32.xlu0 %v41, 16
  %v1051 = vpop.permute.xlu0 %1050
  %1052 = vrot.lane.b32.xlu0 %v43, 16
  %v1053 = vpop.permute.xlu0 %1052
  %1054 = vrot.lane.b32.xlu0 %v45, 16
  %v1055 = vpop.permute.xlu0 %1054
  %1056 = vrot.lane.b32.xlu0 %v47, 16
  %v1057 = vpop.permute.xlu0 %1056
  %1058 = vrot.lane.b32.xlu0 %v49, 16
  %v1059 = vpop.permute.xlu0 %1058
  %1060 = vrot.lane.b32.xlu0 %v51, 16
  %v1061 = vpop.permute.xlu0 %1060
  %1062 = vrot.lane.b32.xlu0 %v53, 16
  %v1063 = vpop.permute.xlu0 %1062
  %1064 = vrot.lane.b32.xlu0 %v40, 16
  %v1065 = vpop.permute.xlu0 %1064
  %1066 = vrot.lane.b32.xlu0 %v42, 16
  %v1067 = vpop.permute.xlu0 %1066
  %1068 = vrot.lane.b32.xlu0 %v44, 16
  %v1069 = vpop.permute.xlu0 %1068
  %1070 = vrot.lane.b32.xlu0 %v46, 16
  %v1071 = vpop.permute.xlu0 %1070
  %1072 = vrot.lane.b32.xlu0 %v48, 16
  %v1073 = vpop.permute.xlu0 %1072
  %1074 = vrot.lane.b32.xlu0 %v50, 16
  %v1075 = vpop.permute.xlu0 %1074
  %1076 = vrot.lane.b32.xlu0 %v52, 16
  %v1077 = vpop.permute.xlu0 %1076
  %1078 = vrot.lane.b32.xlu0 %v54, 16
  %v1079 = vpop.permute.xlu0 %1078
  %vm1080 = vcmp.lt.s32.totalorder %v998, 16
  %v1081 = vsel %vm1080, %v1049, %v1065
  %v1082 = vsel %vm1080, %v1051, %v1067
  %v1083 = vsel %vm1080, %v1053, %v1069
  %v1084 = vsel %vm1080, %v1055, %v1071
  %v1085 = vsel %vm1080, %v1057, %v1073
  %v1086 = vsel %vm1080, %v1059, %v1075
  %v1087 = vsel %vm1080, %v1061, %v1077
  %v1088 = vsel %vm1080, %v1063, %v1079
  %v1089 = vsel %vm1080, %v1065, %v1049
  %v1090 = vsel %vm1080, %v1067, %v1051
  %v1091 = vsel %vm1080, %v1069, %v1053
  %v1092 = vsel %vm1080, %v1071, %v1055
  %v1093 = vsel %vm1080, %v1073, %v1057
  %v1094 = vsel %vm1080, %v1075, %v1059
  %v1095 = vsel %vm1080, %v1077, %v1061
  %v1096 = vsel %vm1080, %v1079, %v1063
  %v1097 = vlaneseq
  %v1098 = vshrl.u32 %v1097, 7
  %v1099 = vsub.s32 1, %v1098
  %v1100 = vrot.slane %v71, %v1099
  %v1101 = vlaneseq
  %v1102 = vshrl.u32 %v1101, 7
  %v1103 = vsub.s32 1, %v1102
  %v1104 = vrot.slane %v72, %v1103
  %v1105 = vmul.f32 %v1089, %v1100
  %v1106 = vmul.f32 %v1081, %v1104
  %v1107 = vmul.f32 %v1090, %v1100
  %v1108 = vmul.f32 %v1082, %v1104
  %v1109 = vmul.f32 %v1091, %v1100
  %v1110 = vmul.f32 %v1083, %v1104
  %v1111 = vmul.f32 %v1092, %v1100
  %v1112 = vmul.f32 %v1084, %v1104
  %v1113 = vmul.f32 %v1093, %v1100
  %v1114 = vmul.f32 %v1085, %v1104
  %v1115 = vmul.f32 %v1094, %v1100
  %v1116 = vmul.f32 %v1086, %v1104
  %v1117 = vmul.f32 %v1095, %v1100
  %v1118 = vmul.f32 %v1087, %v1104
  %v1119 = vmul.f32 %v1096, %v1100
  %v1120 = vmul.f32 %v1088, %v1104
  %v1121 = vpack.c.bf16 %v1107, %v1105
  %v1122 = vpack.c.bf16 %v1108, %v1106
  %v1123 = vpack.c.bf16 %v1111, %v1109
  %v1124 = vpack.c.bf16 %v1112, %v1110
  %v1125 = vpack.c.bf16 %v1115, %v1113
  %v1126 = vpack.c.bf16 %v1116, %v1114
  %v1127 = vpack.c.bf16 %v1119, %v1117
  %v1128 = vpack.c.bf16 %v1120, %v1118
  %1129 = vrot.lane.b32.xlu0 %v39, 15
  %v1130 = vpop.permute.xlu0 %1129
  %1131 = vrot.lane.b32.xlu0 %v41, 15
  %v1132 = vpop.permute.xlu0 %1131
  %1133 = vrot.lane.b32.xlu0 %v43, 15
  %v1134 = vpop.permute.xlu0 %1133
  %1135 = vrot.lane.b32.xlu0 %v45, 15
  %v1136 = vpop.permute.xlu0 %1135
  %1137 = vrot.lane.b32.xlu0 %v47, 15
  %v1138 = vpop.permute.xlu0 %1137
  %1139 = vrot.lane.b32.xlu0 %v49, 15
  %v1140 = vpop.permute.xlu0 %1139
  %1141 = vrot.lane.b32.xlu0 %v51, 15
  %v1142 = vpop.permute.xlu0 %1141
  %1143 = vrot.lane.b32.xlu0 %v53, 15
  %v1144 = vpop.permute.xlu0 %1143
  %1145 = vrot.lane.b32.xlu0 %v40, 15
  %v1146 = vpop.permute.xlu0 %1145
  %1147 = vrot.lane.b32.xlu0 %v42, 15
  %v1148 = vpop.permute.xlu0 %1147
  %1149 = vrot.lane.b32.xlu0 %v44, 15
  %v1150 = vpop.permute.xlu0 %1149
  %1151 = vrot.lane.b32.xlu0 %v46, 15
  %v1152 = vpop.permute.xlu0 %1151
  %1153 = vrot.lane.b32.xlu0 %v48, 15
  %v1154 = vpop.permute.xlu0 %1153
  %1155 = vrot.lane.b32.xlu0 %v50, 15
  %v1156 = vpop.permute.xlu0 %1155
  %1157 = vrot.lane.b32.xlu0 %v52, 15
  %v1158 = vpop.permute.xlu0 %1157
  %1159 = vrot.lane.b32.xlu0 %v54, 15
  %v1160 = vpop.permute.xlu0 %1159
  %vm1161 = vcmp.lt.s32.totalorder %v998, 15
  %v1162 = vsel %vm1161, %v1130, %v1146
  %v1163 = vsel %vm1161, %v1132, %v1148
  %v1164 = vsel %vm1161, %v1134, %v1150
  %v1165 = vsel %vm1161, %v1136, %v1152
  %v1166 = vsel %vm1161, %v1138, %v1154
  %v1167 = vsel %vm1161, %v1140, %v1156
  %v1168 = vsel %vm1161, %v1142, %v1158
  %v1169 = vsel %vm1161, %v1144, %v1160
  %v1170 = vsel %vm1161, %v1146, %v1130
  %v1171 = vsel %vm1161, %v1148, %v1132
  %v1172 = vsel %vm1161, %v1150, %v1134
  %v1173 = vsel %vm1161, %v1152, %v1136
  %v1174 = vsel %vm1161, %v1154, %v1138
  %v1175 = vsel %vm1161, %v1156, %v1140
  %v1176 = vsel %vm1161, %v1158, %v1142
  %v1177 = vsel %vm1161, %v1160, %v1144
  %v1178 = vlaneseq
  %v1179 = vshrl.u32 %v1178, 7
  %v1180 = vsub.s32 2, %v1179
  %v1181 = vrot.slane %v71, %v1180
  %v1182 = vlaneseq
  %v1183 = vshrl.u32 %v1182, 7
  %v1184 = vsub.s32 2, %v1183
  %v1185 = vrot.slane %v72, %v1184
  %v1186 = vmul.f32 %v1170, %v1181
  %v1187 = vmul.f32 %v1162, %v1185
  %v1188 = vmul.f32 %v1171, %v1181
  %v1189 = vmul.f32 %v1163, %v1185
  %v1190 = vmul.f32 %v1172, %v1181
  %v1191 = vmul.f32 %v1164, %v1185
  %v1192 = vmul.f32 %v1173, %v1181
  %v1193 = vmul.f32 %v1165, %v1185
  %v1194 = vmul.f32 %v1174, %v1181
  %v1195 = vmul.f32 %v1166, %v1185
  %v1196 = vmul.f32 %v1175, %v1181
  %v1197 = vmul.f32 %v1167, %v1185
  %v1198 = vmul.f32 %v1176, %v1181
  %v1199 = vmul.f32 %v1168, %v1185
  %v1200 = vmul.f32 %v1177, %v1181
  %v1201 = vmul.f32 %v1169, %v1185
  %v1202 = vpack.c.bf16 %v1188, %v1186
  %v1203 = vpack.c.bf16 %v1189, %v1187
  %v1204 = vpack.c.bf16 %v1192, %v1190
  %v1205 = vpack.c.bf16 %v1193, %v1191
  %v1206 = vpack.c.bf16 %v1196, %v1194
  %v1207 = vpack.c.bf16 %v1197, %v1195
  %v1208 = vpack.c.bf16 %v1200, %v1198
  %v1209 = vpack.c.bf16 %v1201, %v1199
  %1210 = vrot.lane.b32.xlu0 %v39, 1
  %v1211 = vpop.permute.xlu0 %1210
  %1212 = vrot.lane.b32.xlu0 %v41, 1
  %v1213 = vpop.permute.xlu0 %1212
  %1214 = vrot.lane.b32.xlu0 %v43, 1
  %v1215 = vpop.permute.xlu0 %1214
  %1216 = vrot.lane.b32.xlu0 %v45, 1
  %v1217 = vpop.permute.xlu0 %1216
  %1218 = vrot.lane.b32.xlu0 %v47, 1
  %v1219 = vpop.permute.xlu0 %1218
  %1220 = vrot.lane.b32.xlu0 %v49, 1
  %v1221 = vpop.permute.xlu0 %1220
  %1222 = vrot.lane.b32.xlu0 %v51, 1
  %v1223 = vpop.permute.xlu0 %1222
  %1224 = vrot.lane.b32.xlu0 %v53, 1
  %v1225 = vpop.permute.xlu0 %1224
  %1226 = vrot.lane.b32.xlu0 %v40, 1
  %v1227 = vpop.permute.xlu0 %1226
  %1228 = vrot.lane.b32.xlu0 %v42, 1
  %v1229 = vpop.permute.xlu0 %1228
  %1230 = vrot.lane.b32.xlu0 %v44, 1
  %v1231 = vpop.permute.xlu0 %1230
  %1232 = vrot.lane.b32.xlu0 %v46, 1
  %v1233 = vpop.permute.xlu0 %1232
  %1234 = vrot.lane.b32.xlu0 %v48, 1
  %v1235 = vpop.permute.xlu0 %1234
  %1236 = vrot.lane.b32.xlu0 %v50, 1
  %v1237 = vpop.permute.xlu0 %1236
  %1238 = vrot.lane.b32.xlu0 %v52, 1
  %v1239 = vpop.permute.xlu0 %1238
  %1240 = vrot.lane.b32.xlu0 %v54, 1
  %v1241 = vpop.permute.xlu0 %1240
  %vm1242 = vcmp.lt.s32.totalorder %v998, 1
  %v1243 = vsel %vm1242, %v1211, %v1227
  %v1244 = vsel %vm1242, %v1213, %v1229
  %v1245 = vsel %vm1242, %v1215, %v1231
  %v1246 = vsel %vm1242, %v1217, %v1233
  %v1247 = vsel %vm1242, %v1219, %v1235
  %v1248 = vsel %vm1242, %v1221, %v1237
  %v1249 = vsel %vm1242, %v1223, %v1239
  %v1250 = vsel %vm1242, %v1225, %v1241
  %v1251 = vsel %vm1242, %v1227, %v1211
  %v1252 = vsel %vm1242, %v1229, %v1213
  %v1253 = vsel %vm1242, %v1231, %v1215
  %v1254 = vsel %vm1242, %v1233, %v1217
  %v1255 = vsel %vm1242, %v1235, %v1219
  %v1256 = vsel %vm1242, %v1237, %v1221
  %v1257 = vsel %vm1242, %v1239, %v1223
  %v1258 = vsel %vm1242, %v1241, %v1225
  %v1259 = vlaneseq
  %v1260 = vshrl.u32 %v1259, 7
  %v1261 = vsub.s32 3, %v1260
  %v1262 = vrot.slane %v71, %v1261
  %v1263 = vlaneseq
  %v1264 = vshrl.u32 %v1263, 7
  %v1265 = vsub.s32 3, %v1264
  %v1266 = vrot.slane %v72, %v1265
  %v1267 = vmul.f32 %v1251, %v1262
  %v1268 = vmul.f32 %v1243, %v1266
  %v1269 = vmul.f32 %v1252, %v1262
  %v1270 = vmul.f32 %v1244, %v1266
  %v1271 = vmul.f32 %v1253, %v1262
  %v1272 = vmul.f32 %v1245, %v1266
  %v1273 = vmul.f32 %v1254, %v1262
  %v1274 = vmul.f32 %v1246, %v1266
  %v1275 = vmul.f32 %v1255, %v1262
  %v1276 = vmul.f32 %v1247, %v1266
  %v1277 = vmul.f32 %v1256, %v1262
  %v1278 = vmul.f32 %v1248, %v1266
  %v1279 = vmul.f32 %v1257, %v1262
  %v1280 = vmul.f32 %v1249, %v1266
  %v1281 = vmul.f32 %v1258, %v1262
  %v1282 = vmul.f32 %v1250, %v1266
  %v1283 = vpack.c.bf16 %v1269, %v1267
  %v1284 = vpack.c.bf16 %v1270, %v1268
  %v1285 = vpack.c.bf16 %v1273, %v1271
  %v1286 = vpack.c.bf16 %v1274, %v1272
  %v1287 = vpack.c.bf16 %v1277, %v1275
  %v1288 = vpack.c.bf16 %v1278, %v1276
  %v1289 = vpack.c.bf16 %v1281, %v1279
  %v1290 = vpack.c.bf16 %v1282, %v1280
  %v1291 = vlaneseq
  %v1292 = vshrl.u32 %v1291, 7
  %v1293 = vsub.s32 4, %v1292
  %v1294 = vrot.slane %v71, %v1293
  %v1295 = vlaneseq
  %v1296 = vshrl.u32 %v1295, 7
  %v1297 = vsub.s32 4, %v1296
  %v1298 = vrot.slane %v72, %v1297
  %v1299 = vmul.f32 %v39, %v1294
  %v1300 = vmul.f32 %v40, %v1298
  %v1301 = vmul.f32 %v41, %v1294
  %v1302 = vmul.f32 %v42, %v1298
  %v1303 = vmul.f32 %v43, %v1294
  %v1304 = vmul.f32 %v44, %v1298
  %v1305 = vmul.f32 %v45, %v1294
  %v1306 = vmul.f32 %v46, %v1298
  %v1307 = vmul.f32 %v47, %v1294
  %v1308 = vmul.f32 %v48, %v1298
  %v1309 = vmul.f32 %v49, %v1294
  %v1310 = vmul.f32 %v50, %v1298
  %v1311 = vmul.f32 %v51, %v1294
  %v1312 = vmul.f32 %v52, %v1298
  %v1313 = vmul.f32 %v53, %v1294
  %v1314 = vmul.f32 %v54, %v1298
  %v1315 = vpack.c.bf16 %v1301, %v1299
  %v1316 = vpack.c.bf16 %v1302, %v1300
  %v1317 = vpack.c.bf16 %v1305, %v1303
  %v1318 = vpack.c.bf16 %v1306, %v1304
  %v1319 = vpack.c.bf16 %v1309, %v1307
  %v1320 = vpack.c.bf16 %v1310, %v1308
  %v1321 = vpack.c.bf16 %v1313, %v1311
  %v1322 = vpack.c.bf16 %v1314, %v1312
  %1323 = vrot.lane.b32.xlu0 %v39, 127
  %v1324 = vpop.permute.xlu0 %1323
  %1325 = vrot.lane.b32.xlu0 %v41, 127
  %v1326 = vpop.permute.xlu0 %1325
  %1327 = vrot.lane.b32.xlu0 %v43, 127
  %v1328 = vpop.permute.xlu0 %1327
  %1329 = vrot.lane.b32.xlu0 %v45, 127
  %v1330 = vpop.permute.xlu0 %1329
  %1331 = vrot.lane.b32.xlu0 %v47, 127
  %v1332 = vpop.permute.xlu0 %1331
  %1333 = vrot.lane.b32.xlu0 %v49, 127
  %v1334 = vpop.permute.xlu0 %1333
  %1335 = vrot.lane.b32.xlu0 %v51, 127
  %v1336 = vpop.permute.xlu0 %1335
  %1337 = vrot.lane.b32.xlu0 %v53, 127
  %v1338 = vpop.permute.xlu0 %1337
  %1339 = vrot.lane.b32.xlu0 %v40, 127
  %v1340 = vpop.permute.xlu0 %1339
  %1341 = vrot.lane.b32.xlu0 %v42, 127
  %v1342 = vpop.permute.xlu0 %1341
  %1343 = vrot.lane.b32.xlu0 %v44, 127
  %v1344 = vpop.permute.xlu0 %1343
  %1345 = vrot.lane.b32.xlu0 %v46, 127
  %v1346 = vpop.permute.xlu0 %1345
  %1347 = vrot.lane.b32.xlu0 %v48, 127
  %v1348 = vpop.permute.xlu0 %1347
  %1349 = vrot.lane.b32.xlu0 %v50, 127
  %v1350 = vpop.permute.xlu0 %1349
  %1351 = vrot.lane.b32.xlu0 %v52, 127
  %v1352 = vpop.permute.xlu0 %1351
  %1353 = vrot.lane.b32.xlu0 %v54, 127
  %v1354 = vpop.permute.xlu0 %1353
  %vm1355 = vcmp.lt.s32.totalorder %v998, 127
  %v1356 = vsel %vm1355, %v1324, %v1340
  %v1357 = vsel %vm1355, %v1326, %v1342
  %v1358 = vsel %vm1355, %v1328, %v1344
  %v1359 = vsel %vm1355, %v1330, %v1346
  %v1360 = vsel %vm1355, %v1332, %v1348
  %v1361 = vsel %vm1355, %v1334, %v1350
  %v1362 = vsel %vm1355, %v1336, %v1352
  %v1363 = vsel %vm1355, %v1338, %v1354
  %v1364 = vsel %vm1355, %v1340, %v1324
  %v1365 = vsel %vm1355, %v1342, %v1326
  %v1366 = vsel %vm1355, %v1344, %v1328
  %v1367 = vsel %vm1355, %v1346, %v1330
  %v1368 = vsel %vm1355, %v1348, %v1332
  %v1369 = vsel %vm1355, %v1350, %v1334
  %v1370 = vsel %vm1355, %v1352, %v1336
  %v1371 = vsel %vm1355, %v1354, %v1338
  %v1372 = vlaneseq
  %v1373 = vshrl.u32 %v1372, 7
  %v1374 = vsub.s32 5, %v1373
  %v1375 = vrot.slane %v71, %v1374
  %v1376 = vlaneseq
  %v1377 = vshrl.u32 %v1376, 7
  %v1378 = vsub.s32 5, %v1377
  %v1379 = vrot.slane %v72, %v1378
  %v1380 = vmul.f32 %v1356, %v1375
  %v1381 = vmul.f32 %v1364, %v1379
  %v1382 = vmul.f32 %v1357, %v1375
  %v1383 = vmul.f32 %v1365, %v1379
  %v1384 = vmul.f32 %v1358, %v1375
  %v1385 = vmul.f32 %v1366, %v1379
  %v1386 = vmul.f32 %v1359, %v1375
  %v1387 = vmul.f32 %v1367, %v1379
  %v1388 = vmul.f32 %v1360, %v1375
  %v1389 = vmul.f32 %v1368, %v1379
  %v1390 = vmul.f32 %v1361, %v1375
  %v1391 = vmul.f32 %v1369, %v1379
  %v1392 = vmul.f32 %v1362, %v1375
  %v1393 = vmul.f32 %v1370, %v1379
  %v1394 = vmul.f32 %v1363, %v1375
  %v1395 = vmul.f32 %v1371, %v1379
  %v1396 = vpack.c.bf16 %v1382, %v1380
  %v1397 = vpack.c.bf16 %v1383, %v1381
  %v1398 = vpack.c.bf16 %v1386, %v1384
  %v1399 = vpack.c.bf16 %v1387, %v1385
  %v1400 = vpack.c.bf16 %v1390, %v1388
  %v1401 = vpack.c.bf16 %v1391, %v1389
  %v1402 = vpack.c.bf16 %v1394, %v1392
  %v1403 = vpack.c.bf16 %v1395, %v1393
  %1404 = vrot.lane.b32.xlu0 %v39, 113
  %v1405 = vpop.permute.xlu0 %1404
  %1406 = vrot.lane.b32.xlu0 %v41, 113
  %v1407 = vpop.permute.xlu0 %1406
  %1408 = vrot.lane.b32.xlu0 %v43, 113
  %v1409 = vpop.permute.xlu0 %1408
  %1410 = vrot.lane.b32.xlu0 %v45, 113
  %v1411 = vpop.permute.xlu0 %1410
  %1412 = vrot.lane.b32.xlu0 %v47, 113
  %v1413 = vpop.permute.xlu0 %1412
  %1414 = vrot.lane.b32.xlu0 %v49, 113
  %v1415 = vpop.permute.xlu0 %1414
  %1416 = vrot.lane.b32.xlu0 %v51, 113
  %v1417 = vpop.permute.xlu0 %1416
  %1418 = vrot.lane.b32.xlu0 %v53, 113
  %v1419 = vpop.permute.xlu0 %1418
  %1420 = vrot.lane.b32.xlu0 %v40, 113
  %v1421 = vpop.permute.xlu0 %1420
  %1422 = vrot.lane.b32.xlu0 %v42, 113
  %v1423 = vpop.permute.xlu0 %1422
  %1424 = vrot.lane.b32.xlu0 %v44, 113
  %v1425 = vpop.permute.xlu0 %1424
  %1426 = vrot.lane.b32.xlu0 %v46, 113
  %v1427 = vpop.permute.xlu0 %1426
  %1428 = vrot.lane.b32.xlu0 %v48, 113
  %v1429 = vpop.permute.xlu0 %1428
  %1430 = vrot.lane.b32.xlu0 %v50, 113
  %v1431 = vpop.permute.xlu0 %1430
  %1432 = vrot.lane.b32.xlu0 %v52, 113
  %v1433 = vpop.permute.xlu0 %1432
  %1434 = vrot.lane.b32.xlu0 %v54, 113
  %v1435 = vpop.permute.xlu0 %1434
  %vm1436 = vcmp.lt.s32.totalorder %v998, 113
  %v1437 = vsel %vm1436, %v1405, %v1421
  %v1438 = vsel %vm1436, %v1407, %v1423
  %v1439 = vsel %vm1436, %v1409, %v1425
  %v1440 = vsel %vm1436, %v1411, %v1427
  %v1441 = vsel %vm1436, %v1413, %v1429
  %v1442 = vsel %vm1436, %v1415, %v1431
  %v1443 = vsel %vm1436, %v1417, %v1433
  %v1444 = vsel %vm1436, %v1419, %v1435
  %v1445 = vsel %vm1436, %v1421, %v1405
  %v1446 = vsel %vm1436, %v1423, %v1407
  %v1447 = vsel %vm1436, %v1425, %v1409
  %v1448 = vsel %vm1436, %v1427, %v1411
  %v1449 = vsel %vm1436, %v1429, %v1413
  %v1450 = vsel %vm1436, %v1431, %v1415
  %v1451 = vsel %vm1436, %v1433, %v1417
  %v1452 = vsel %vm1436, %v1435, %v1419
  %v1453 = vlaneseq
  %v1454 = vshrl.u32 %v1453, 7
  %v1455 = vsub.s32 6, %v1454
  %v1456 = vrot.slane %v71, %v1455
  %v1457 = vlaneseq
  %v1458 = vshrl.u32 %v1457, 7
  %v1459 = vsub.s32 6, %v1458
  %v1460 = vrot.slane %v72, %v1459
  %v1461 = vmul.f32 %v1437, %v1456
  %v1462 = vmul.f32 %v1445, %v1460
  %v1463 = vmul.f32 %v1438, %v1456
  %v1464 = vmul.f32 %v1446, %v1460
  %v1465 = vmul.f32 %v1439, %v1456
  %v1466 = vmul.f32 %v1447, %v1460
  %v1467 = vmul.f32 %v1440, %v1456
  %v1468 = vmul.f32 %v1448, %v1460
  %v1469 = vmul.f32 %v1441, %v1456
  %v1470 = vmul.f32 %v1449, %v1460
  %v1471 = vmul.f32 %v1442, %v1456
  %v1472 = vmul.f32 %v1450, %v1460
  %v1473 = vmul.f32 %v1443, %v1456
  %v1474 = vmul.f32 %v1451, %v1460
  %v1475 = vmul.f32 %v1444, %v1456
  %v1476 = vmul.f32 %v1452, %v1460
  %v1477 = vpack.c.bf16 %v1463, %v1461
  %v1478 = vpack.c.bf16 %v1464, %v1462
  %v1479 = vpack.c.bf16 %v1467, %v1465
  %v1480 = vpack.c.bf16 %v1468, %v1466
  %v1481 = vpack.c.bf16 %v1471, %v1469
  %v1482 = vpack.c.bf16 %v1472, %v1470
  %v1483 = vpack.c.bf16 %v1475, %v1473
  %v1484 = vpack.c.bf16 %v1476, %v1474
  %1485 = vrot.lane.b32.xlu0 %v39, 112
  %v1486 = vpop.permute.xlu0 %1485
  %1487 = vrot.lane.b32.xlu0 %v41, 112
  %v1488 = vpop.permute.xlu0 %1487
  %1489 = vrot.lane.b32.xlu0 %v43, 112
  %v1490 = vpop.permute.xlu0 %1489
  %1491 = vrot.lane.b32.xlu0 %v45, 112
  %v1492 = vpop.permute.xlu0 %1491
  %1493 = vrot.lane.b32.xlu0 %v47, 112
  %v1494 = vpop.permute.xlu0 %1493
  %1495 = vrot.lane.b32.xlu0 %v49, 112
  %v1496 = vpop.permute.xlu0 %1495
  %1497 = vrot.lane.b32.xlu0 %v51, 112
  %v1498 = vpop.permute.xlu0 %1497
  %1499 = vrot.lane.b32.xlu0 %v53, 112
  %v1500 = vpop.permute.xlu0 %1499
  %1501 = vrot.lane.b32.xlu0 %v40, 112
  %v1502 = vpop.permute.xlu0 %1501
  %1503 = vrot.lane.b32.xlu0 %v42, 112
  %v1504 = vpop.permute.xlu0 %1503
  %1505 = vrot.lane.b32.xlu0 %v44, 112
  %v1506 = vpop.permute.xlu0 %1505
  %1507 = vrot.lane.b32.xlu0 %v46, 112
  %v1508 = vpop.permute.xlu0 %1507
  %1509 = vrot.lane.b32.xlu0 %v48, 112
  %v1510 = vpop.permute.xlu0 %1509
  %1511 = vrot.lane.b32.xlu0 %v50, 112
  %v1512 = vpop.permute.xlu0 %1511
  %1513 = vrot.lane.b32.xlu0 %v52, 112
  %v1514 = vpop.permute.xlu0 %1513
  %1515 = vrot.lane.b32.xlu0 %v54, 112
  %v1516 = vpop.permute.xlu0 %1515
  %vm1517 = vcmp.lt.s32.totalorder %v998, 112
  %v1518 = vsel %vm1517, %v1486, %v1502
  %v1519 = vsel %vm1517, %v1488, %v1504
  %v1520 = vsel %vm1517, %v1490, %v1506
  %v1521 = vsel %vm1517, %v1492, %v1508
  %v1522 = vsel %vm1517, %v1494, %v1510
  %v1523 = vsel %vm1517, %v1496, %v1512
  %v1524 = vsel %vm1517, %v1498, %v1514
  %v1525 = vsel %vm1517, %v1500, %v1516
  %v1526 = vsel %vm1517, %v1502, %v1486
  %v1527 = vsel %vm1517, %v1504, %v1488
  %v1528 = vsel %vm1517, %v1506, %v1490
  %v1529 = vsel %vm1517, %v1508, %v1492
  %v1530 = vsel %vm1517, %v1510, %v1494
  %v1531 = vsel %vm1517, %v1512, %v1496
  %v1532 = vsel %vm1517, %v1514, %v1498
  %v1533 = vsel %vm1517, %v1516, %v1500
  %v1534 = vlaneseq
  %v1535 = vshrl.u32 %v1534, 7
  %v1536 = vsub.s32 7, %v1535
  %v1537 = vrot.slane %v71, %v1536
  %v1538 = vlaneseq
  %v1539 = vshrl.u32 %v1538, 7
  %v1540 = vsub.s32 7, %v1539
  %v1541 = vrot.slane %v72, %v1540
  %v1542 = vmul.f32 %v1518, %v1537
  %v1543 = vmul.f32 %v1526, %v1541
  %v1544 = vmul.f32 %v1519, %v1537
  %v1545 = vmul.f32 %v1527, %v1541
  %v1546 = vmul.f32 %v1520, %v1537
  %v1547 = vmul.f32 %v1528, %v1541
  %v1548 = vmul.f32 %v1521, %v1537
  %v1549 = vmul.f32 %v1529, %v1541
  %v1550 = vmul.f32 %v1522, %v1537
  %v1551 = vmul.f32 %v1530, %v1541
  %v1552 = vmul.f32 %v1523, %v1537
  %v1553 = vmul.f32 %v1531, %v1541
  %v1554 = vmul.f32 %v1524, %v1537
  %v1555 = vmul.f32 %v1532, %v1541
  %v1556 = vmul.f32 %v1525, %v1537
  %v1557 = vmul.f32 %v1533, %v1541
  %v1558 = vpack.c.bf16 %v1544, %v1542
  %v1559 = vpack.c.bf16 %v1545, %v1543
  %v1560 = vpack.c.bf16 %v1548, %v1546
  %v1561 = vpack.c.bf16 %v1549, %v1547
  %v1562 = vpack.c.bf16 %v1552, %v1550
  %v1563 = vpack.c.bf16 %v1553, %v1551
  %v1564 = vpack.c.bf16 %v1556, %v1554
  %v1565 = vpack.c.bf16 %v1557, %v1555
  %1566 = vrot.lane.b32.xlu0 %v39, 111
  %v1567 = vpop.permute.xlu0 %1566
  %1568 = vrot.lane.b32.xlu0 %v41, 111
  %v1569 = vpop.permute.xlu0 %1568
  %1570 = vrot.lane.b32.xlu0 %v43, 111
  %v1571 = vpop.permute.xlu0 %1570
  %1572 = vrot.lane.b32.xlu0 %v45, 111
  %v1573 = vpop.permute.xlu0 %1572
  %1574 = vrot.lane.b32.xlu0 %v47, 111
  %v1575 = vpop.permute.xlu0 %1574
  %1576 = vrot.lane.b32.xlu0 %v49, 111
  %v1577 = vpop.permute.xlu0 %1576
  %1578 = vrot.lane.b32.xlu0 %v51, 111
  %v1579 = vpop.permute.xlu0 %1578
  %1580 = vrot.lane.b32.xlu0 %v53, 111
  %v1581 = vpop.permute.xlu0 %1580
  %1582 = vrot.lane.b32.xlu0 %v40, 111
  %v1583 = vpop.permute.xlu0 %1582
  %1584 = vrot.lane.b32.xlu0 %v42, 111
  %v1585 = vpop.permute.xlu0 %1584
  %1586 = vrot.lane.b32.xlu0 %v44, 111
  %v1587 = vpop.permute.xlu0 %1586
  %1588 = vrot.lane.b32.xlu0 %v46, 111
  %v1589 = vpop.permute.xlu0 %1588
  %1590 = vrot.lane.b32.xlu0 %v48, 111
  %v1591 = vpop.permute.xlu0 %1590
  %1592 = vrot.lane.b32.xlu0 %v50, 111
  %v1593 = vpop.permute.xlu0 %1592
  %1594 = vrot.lane.b32.xlu0 %v52, 111
  %v1595 = vpop.permute.xlu0 %1594
  %1596 = vrot.lane.b32.xlu0 %v54, 111
  %v1597 = vpop.permute.xlu0 %1596
  %vm1598 = vcmp.lt.s32.totalorder %v998, 111
  %v1599 = vsel %vm1598, %v1567, %v1583
  %v1600 = vsel %vm1598, %v1569, %v1585
  %v1601 = vsel %vm1598, %v1571, %v1587
  %v1602 = vsel %vm1598, %v1573, %v1589
  %v1603 = vsel %vm1598, %v1575, %v1591
  %v1604 = vsel %vm1598, %v1577, %v1593
  %v1605 = vsel %vm1598, %v1579, %v1595
  %v1606 = vsel %vm1598, %v1581, %v1597
  %v1607 = vsel %vm1598, %v1583, %v1567
  %v1608 = vsel %vm1598, %v1585, %v1569
  %v1609 = vsel %vm1598, %v1587, %v1571
  %v1610 = vsel %vm1598, %v1589, %v1573
  %v1611 = vsel %vm1598, %v1591, %v1575
  %v1612 = vsel %vm1598, %v1593, %v1577
  %v1613 = vsel %vm1598, %v1595, %v1579
  %v1614 = vsel %vm1598, %v1597, %v1581
  %v1615 = vlaneseq
  %v1616 = vshrl.u32 %v1615, 7
  %v1617 = vsub.s32 0, %v1616
  %v1618 = vrot.slane %v73, %v1617
  %v1619 = vlaneseq
  %v1620 = vshrl.u32 %v1619, 7
  %v1621 = vsub.s32 0, %v1620
  %v1622 = vrot.slane %v74, %v1621
  %v1623 = vmul.f32 %v1599, %v1618
  %v1624 = vmul.f32 %v1607, %v1622
  %v1625 = vmul.f32 %v1600, %v1618
  %v1626 = vmul.f32 %v1608, %v1622
  %v1627 = vmul.f32 %v1601, %v1618
  %v1628 = vmul.f32 %v1609, %v1622
  %v1629 = vmul.f32 %v1602, %v1618
  %v1630 = vmul.f32 %v1610, %v1622
  %v1631 = vmul.f32 %v1603, %v1618
  %v1632 = vmul.f32 %v1611, %v1622
  %v1633 = vmul.f32 %v1604, %v1618
  %v1634 = vmul.f32 %v1612, %v1622
  %v1635 = vmul.f32 %v1605, %v1618
  %v1636 = vmul.f32 %v1613, %v1622
  %v1637 = vmul.f32 %v1606, %v1618
  %v1638 = vmul.f32 %v1614, %v1622
  %v1639 = vpack.c.bf16 %v1625, %v1623
  %v1640 = vpack.c.bf16 %v1626, %v1624
  %v1641 = vpack.c.bf16 %v1629, %v1627
  %v1642 = vpack.c.bf16 %v1630, %v1628
  %v1643 = vpack.c.bf16 %v1633, %v1631
  %v1644 = vpack.c.bf16 %v1634, %v1632
  %v1645 = vpack.c.bf16 %v1637, %v1635
  %v1646 = vpack.c.bf16 %v1638, %v1636
  %v1647 = vld [vmem:[%s3] sm:$0xff]
  %v1648 = vld [vmem:[%s3 + $0x8] sm:$0xff]
  %v1649 = vld [vmem:[%s3 + $0x10] sm:$0xf]
  %v1650 = vld [vmem:[%s3 + $0x14] sm:$0xff]
  %v1651 = vld [vmem:[%s3 + $0x1c] sm:$0xff]
  %v1652 = vld [vmem:[%s3 + $0x24] sm:$0xf]
  %v1653 = vld [vmem:[%s3 + $0x28] sm:$0xff]
  %v1654 = vld [vmem:[%s3 + $0x30] sm:$0xff]
  %v1655 = vld [vmem:[%s3 + $0x38] sm:$0xf]
  %v1656 = vld [vmem:[%s3 + $0x3c] sm:$0xff]
  %v1657 = vld [vmem:[%s3 + $0x44] sm:$0xff]
  %v1658 = vld [vmem:[%s3 + $0x4c] sm:$0xf]
  %v1659 = vld [vmem:[%s3 + $0x50] sm:$0xff]
  %v1660 = vld [vmem:[%s3 + $0x58] sm:$0xff]
  %v1661 = vld [vmem:[%s3 + $0x60] sm:$0xf]
  %v1662 = vld [vmem:[%s3 + $0x64] sm:$0xff]
  %v1663 = vld [vmem:[%s3 + $0x6c] sm:$0xff]
  %v1664 = vld [vmem:[%s3 + $0x74] sm:$0xf]
  %v1665 = vld [vmem:[%s3 + $0x78] sm:$0xff]
  %v1666 = vld [vmem:[%s3 + $0x80] sm:$0xff]
  %v1667 = vld [vmem:[%s3 + $0x88] sm:$0xf]
  %v1668 = vld [vmem:[%s3 + $0x8c] sm:$0xff]
  %v1669 = vld [vmem:[%s3 + $0x94] sm:$0xff]
  %v1670 = vld [vmem:[%s3 + $0x9c] sm:$0xf]
  %v1671 = vld [vmem:[%s4] sm:$0xff]
  %v1672 = vld [vmem:[%s4 + $0x8] sm:$0xff]
  %v1673 = vld [vmem:[%s4 + $0x10] sm:$0xff]
  %v1674 = vld [vmem:[%s4 + $0x18] sm:$0xff]
  %v1675 = vld [vmem:[%s4 + $0x20] sm:$0xff]
  %v1676 = vld [vmem:[%s4 + $0x28] sm:$0xff]
  %v1677 = vld [vmem:[%s4 + $0x30] sm:$0xff]
  %v1678 = vld [vmem:[%s4 + $0x38] sm:$0xff]
  %1680 = vset.pattern.permute.xlu0 0
  %1681 = vperm.xlu0 %1680, %v1671
  %v1682 = vpop.permute.xlu0 %1681
  %1685 = vset.pattern.permute.xlu0 0
  %1686 = vperm.xlu0 %1685, %v1672
  %v1687 = vpop.permute.xlu0 %1686
  %1690 = vset.pattern.permute.xlu0 0
  %1691 = vperm.xlu0 %1690, %v1673
  %v1692 = vpop.permute.xlu0 %1691
  %1695 = vset.pattern.permute.xlu0 0
  %1696 = vperm.xlu0 %1695, %v1674
  %v1697 = vpop.permute.xlu0 %1696
  %1700 = vset.pattern.permute.xlu0 0
  %1701 = vperm.xlu0 %1700, %v1675
  %v1702 = vpop.permute.xlu0 %1701
  %1705 = vset.pattern.permute.xlu0 0
  %1706 = vperm.xlu0 %1705, %v1676
  %v1707 = vpop.permute.xlu0 %1706
  %1710 = vset.pattern.permute.xlu0 0
  %1711 = vperm.xlu0 %1710, %v1677
  %v1712 = vpop.permute.xlu0 %1711
  %1715 = vset.pattern.permute.xlu0 0
  %1716 = vperm.xlu0 %1715, %v1678
  %v1717 = vpop.permute.xlu0 %1716
  %v1743 = vunpack.c.l.b16 %v1647
  %v1744 = vunpack.c.h.b16 %v1647
  %v1745 = vunpack.c.l.b16 %v1648
  %v1746 = vunpack.c.h.b16 %v1648
  %v1747 = vunpack.c.l.b16 %v1649
  %v1748 = vunpack.c.l.b16 %v1650
  %v1749 = vunpack.c.h.b16 %v1650
  %v1750 = vunpack.c.l.b16 %v1651
  %v1751 = vunpack.c.h.b16 %v1651
  %v1752 = vunpack.c.l.b16 %v1652
  %v1753 = vunpack.c.l.b16 %v1653
  %v1754 = vunpack.c.h.b16 %v1653
  %v1755 = vunpack.c.l.b16 %v1654
  %v1756 = vunpack.c.h.b16 %v1654
  %v1757 = vunpack.c.l.b16 %v1655
  %v1758 = vunpack.c.l.b16 %v1656
  %v1759 = vunpack.c.h.b16 %v1656
  %v1760 = vunpack.c.l.b16 %v1657
  %v1761 = vunpack.c.h.b16 %v1657
  %v1762 = vunpack.c.l.b16 %v1658
  %v1763 = vunpack.c.l.b16 %v1659
  %v1764 = vunpack.c.h.b16 %v1659
  %v1765 = vunpack.c.l.b16 %v1660
  %v1766 = vunpack.c.h.b16 %v1660
  %v1767 = vunpack.c.l.b16 %v1661
  %v1768 = vunpack.c.l.b16 %v1662
  %v1769 = vunpack.c.h.b16 %v1662
  %v1770 = vunpack.c.l.b16 %v1663
  %v1771 = vunpack.c.h.b16 %v1663
  %v1772 = vunpack.c.l.b16 %v1664
  %v1773 = vunpack.c.l.b16 %v1665
  %v1774 = vunpack.c.h.b16 %v1665
  %v1775 = vunpack.c.l.b16 %v1666
  %v1776 = vunpack.c.h.b16 %v1666
  %v1777 = vunpack.c.l.b16 %v1667
  %v1778 = vunpack.c.l.b16 %v1668
  %v1779 = vunpack.c.h.b16 %v1668
  %v1780 = vunpack.c.l.b16 %v1669
  %v1781 = vunpack.c.h.b16 %v1669
  %v1782 = vunpack.c.l.b16 %v1670
  %v1783 = vpack.c.b16 %v1748, %v1743
  %v1784 = vpack.c.b16 %v1749, %v1744
  %v1785 = vpack.c.b16 %v1750, %v1745
  %v1786 = vpack.c.b16 %v1751, %v1746
  %v1787 = vpack.c.b16 %v1752, %v1747
  %v1788 = vpack.c.b16 %v1758, %v1753
  %v1789 = vpack.c.b16 %v1759, %v1754
  %v1790 = vpack.c.b16 %v1760, %v1755
  %v1791 = vpack.c.b16 %v1761, %v1756
  %v1792 = vpack.c.b16 %v1762, %v1757
  %v1793 = vpack.c.b16 %v1768, %v1763
  %v1794 = vpack.c.b16 %v1769, %v1764
  %v1795 = vpack.c.b16 %v1770, %v1765
  %v1796 = vpack.c.b16 %v1771, %v1766
  %v1797 = vpack.c.b16 %v1772, %v1767
  %v1798 = vpack.c.b16 %v1778, %v1773
  %v1799 = vpack.c.b16 %v1779, %v1774
  %v1800 = vpack.c.b16 %v1780, %v1775
  %v1801 = vpack.c.b16 %v1781, %v1776
  %v1802 = vpack.c.b16 %v1782, %v1777
  %v1820 = vsel %vm260, %v1787, 0
  %v1823 = vsel %vm260, %v1792, 0
  %v1826 = vsel %vm260, %v1797, 0
  %v1829 = vsel %vm260, %v1802, 0
  %1831 = vmatprep.subr.bf16.mxu0 %v1128
  %1832 = vmatpush1.bf16.msra.mxu0 %v1127
  %1833 = vmatprep.subr.bf16.mxu0 %v1126
  %1834 = vmatpush1.bf16.msra.mxu0 %v1125
  %1835 = vmatprep.subr.bf16.mxu0 %v1124
  %1836 = vmatpush1.bf16.msra.mxu0 %v1123
  %1837 = vmatprep.subr.bf16.mxu0 %v1122
  %1838 = vmatpush1.bf16.msra.mxu0 %v1121
  %1839 = vmatprep.subr.bf16.mxu0 %v1047
  %1840 = vmatpush1.bf16.msra.mxu0 %v1046
  %1841 = vmatprep.subr.bf16.mxu0 %v1045
  %1842 = vmatpush1.bf16.msra.mxu0 %v1044
  %1843 = vmatprep.subr.bf16.mxu0 %v1043
  %1844 = vmatpush1.bf16.msra.mxu0 %v1042
  %1845 = vmatprep.subr.bf16.mxu0 %v1041
  %1846 = vmatpush1.bf16.msra.mxu0 %v1040
  %1847 = vmatprep.subr.bf16.mxu0 %v1290
  %1848 = vmatpush2.bf16.msra.mxu0 %v1289
  %1849 = vmatprep.subr.bf16.mxu0 %v1288
  %1850 = vmatpush2.bf16.msra.mxu0 %v1287
  %1851 = vmatprep.subr.bf16.mxu0 %v1286
  %1852 = vmatpush2.bf16.msra.mxu0 %v1285
  %1853 = vmatprep.subr.bf16.mxu0 %v1284
  %1854 = vmatpush2.bf16.msra.mxu0 %v1283
  %1855 = vmatprep.subr.bf16.mxu0 %v1209
  %1856 = vmatpush2.bf16.msra.mxu0 %v1208
  %1857 = vmatprep.subr.bf16.mxu0 %v1207
  %1858 = vmatpush2.bf16.msra.mxu0 %v1206
  %1859 = vmatprep.subr.bf16.mxu0 %v1205
  %1860 = vmatpush2.bf16.msra.mxu0 %v1204
  %1861 = vmatprep.subr.bf16.mxu0 %v1203
  %1862 = vmatpush2.bf16.msra.mxu0 %v1202
  %1863 = vmatprep.mubr.bf16.mxu0 %v1784
  %1864 = vmatmul.mubr.bf16.gmra.mxu0 %v1783
  %v1865 = vpop.f32.mrf.mxu0
  %v1866 = vadd.f32 %v1682, %v1865
  %v1867 = vpop.f32.mrf.mxu0
  %v1868 = vadd.f32 %v1682, %v1867
  %v1869 = vpop.f32.mrf.mxu0
  %v1870 = vadd.f32 %v1687, %v1869
  %v1871 = vpop.f32.mrf.mxu0
  %v1872 = vadd.f32 %v1687, %v1871
  %1873 = vmatprep.mubr.bf16.mxu0 %v1789
  %1874 = vmatmul.mubr.bf16.gmra.mxu0 %v1788
  %v1875 = vpop.f32.mrf.mxu0
  %v1876 = vadd.f32 %v1692, %v1875
  %v1877 = vpop.f32.mrf.mxu0
  %v1878 = vadd.f32 %v1692, %v1877
  %v1879 = vpop.f32.mrf.mxu0
  %v1880 = vadd.f32 %v1697, %v1879
  %v1881 = vpop.f32.mrf.mxu0
  %v1882 = vadd.f32 %v1697, %v1881
  %1883 = vmatprep.mubr.bf16.mxu0 %v1794
  %1884 = vmatmul.mubr.bf16.gmra.mxu0 %v1793
  %v1885 = vpop.f32.mrf.mxu0
  %v1886 = vadd.f32 %v1702, %v1885
  %v1887 = vpop.f32.mrf.mxu0
  %v1888 = vadd.f32 %v1702, %v1887
  %v1889 = vpop.f32.mrf.mxu0
  %v1890 = vadd.f32 %v1707, %v1889
  %v1891 = vpop.f32.mrf.mxu0
  %v1892 = vadd.f32 %v1707, %v1891
  %1893 = vmatprep.mubr.bf16.mxu0 %v1799
  %1894 = vmatmul.mubr.bf16.gmra.mxu0 %v1798
  %v1895 = vpop.f32.mrf.mxu0
  %v1896 = vadd.f32 %v1712, %v1895
  %v1897 = vpop.f32.mrf.mxu0
  %v1898 = vadd.f32 %v1712, %v1897
  %v1899 = vpop.f32.mrf.mxu0
  %v1900 = vadd.f32 %v1717, %v1899
  %v1901 = vpop.f32.mrf.mxu0
  %v1902 = vadd.f32 %v1717, %v1901
  %1903 = vdwg.mxu0
  %1904 = vmatprep.subr.bf16.mxu0 %v1403
  %1905 = vmatpush1.bf16.msra.mxu0 %v1402
  %1906 = vmatprep.subr.bf16.mxu0 %v1401
  %1907 = vmatpush1.bf16.msra.mxu0 %v1400
  %1908 = vmatprep.subr.bf16.mxu0 %v1399
  %1909 = vmatpush1.bf16.msra.mxu0 %v1398
  %1910 = vmatprep.subr.bf16.mxu0 %v1397
  %1911 = vmatpush1.bf16.msra.mxu0 %v1396
  %1912 = vmatprep.subr.bf16.mxu0 %v1322
  %1913 = vmatpush1.bf16.msra.mxu0 %v1321
  %1914 = vmatprep.subr.bf16.mxu0 %v1320
  %1915 = vmatpush1.bf16.msra.mxu0 %v1319
  %1916 = vmatprep.subr.bf16.mxu0 %v1318
  %1917 = vmatpush1.bf16.msra.mxu0 %v1317
  %1918 = vmatprep.subr.bf16.mxu0 %v1316
  %1919 = vmatpush1.bf16.msra.mxu0 %v1315
  %1920 = vmatprep.subr.bf16.mxu0 %v1565
  %1921 = vmatpush2.bf16.msra.mxu0 %v1564
  %1922 = vmatprep.subr.bf16.mxu0 %v1563
  %1923 = vmatpush2.bf16.msra.mxu0 %v1562
  %1924 = vmatprep.subr.bf16.mxu0 %v1561
  %1925 = vmatpush2.bf16.msra.mxu0 %v1560
  %1926 = vmatprep.subr.bf16.mxu0 %v1559
  %1927 = vmatpush2.bf16.msra.mxu0 %v1558
  %1928 = vmatprep.subr.bf16.mxu0 %v1484
  %1929 = vmatpush2.bf16.msra.mxu0 %v1483
  %1930 = vmatprep.subr.bf16.mxu0 %v1482
  %1931 = vmatpush2.bf16.msra.mxu0 %v1481
  %1932 = vmatprep.subr.bf16.mxu0 %v1480
  %1933 = vmatpush2.bf16.msra.mxu0 %v1479
  %1934 = vmatprep.subr.bf16.mxu0 %v1478
  %1935 = vmatpush2.bf16.msra.mxu0 %v1477
  %1936 = vmatprep.mubr.bf16.mxu0 %v1786
  %1937 = vmatmul.mubr.bf16.gmra.mxu0 %v1785
  %v1938 = vpop.f32.mrf.mxu0
  %v1939 = vadd.f32 %v1866, %v1938
  %v1940 = vpop.f32.mrf.mxu0
  %v1941 = vadd.f32 %v1868, %v1940
  %v1942 = vpop.f32.mrf.mxu0
  %v1943 = vadd.f32 %v1870, %v1942
  %v1944 = vpop.f32.mrf.mxu0
  %v1945 = vadd.f32 %v1872, %v1944
  %1946 = vmatprep.mubr.bf16.mxu0 %v1791
  %1947 = vmatmul.mubr.bf16.gmra.mxu0 %v1790
  %v1948 = vpop.f32.mrf.mxu0
  %v1949 = vadd.f32 %v1876, %v1948
  %v1950 = vpop.f32.mrf.mxu0
  %v1951 = vadd.f32 %v1878, %v1950
  %v1952 = vpop.f32.mrf.mxu0
  %v1953 = vadd.f32 %v1880, %v1952
  %v1954 = vpop.f32.mrf.mxu0
  %v1955 = vadd.f32 %v1882, %v1954
  %1956 = vmatprep.mubr.bf16.mxu0 %v1796
  %1957 = vmatmul.mubr.bf16.gmra.mxu0 %v1795
  %v1958 = vpop.f32.mrf.mxu0
  %v1959 = vadd.f32 %v1886, %v1958
  %v1960 = vpop.f32.mrf.mxu0
  %v1961 = vadd.f32 %v1888, %v1960
  %v1962 = vpop.f32.mrf.mxu0
  %v1963 = vadd.f32 %v1890, %v1962
  %v1964 = vpop.f32.mrf.mxu0
  %v1965 = vadd.f32 %v1892, %v1964
  %1966 = vmatprep.mubr.bf16.mxu0 %v1801
  %1967 = vmatmul.mubr.bf16.gmra.mxu0 %v1800
  %v1968 = vpop.f32.mrf.mxu0
  %v1969 = vadd.f32 %v1896, %v1968
  %v1970 = vpop.f32.mrf.mxu0
  %v1971 = vadd.f32 %v1898, %v1970
  %v1972 = vpop.f32.mrf.mxu0
  %v1973 = vadd.f32 %v1900, %v1972
  %v1974 = vpop.f32.mrf.mxu0
  %v1975 = vadd.f32 %v1902, %v1974
  %1976 = vdwg.mxu0
  %1977 = vmatprep.subr.bf16.mxu0 0
  %1978 = vmatpush1.bf16.msra.mxu0 0
  %1979 = vmatprep.subr.bf16.mxu0 0
  %1980 = vmatpush1.bf16.msra.mxu0 0
  %1981 = vmatprep.subr.bf16.mxu0 0
  %1982 = vmatpush1.bf16.msra.mxu0 0
  %1983 = vmatprep.subr.bf16.mxu0 0
  %1984 = vmatpush1.bf16.msra.mxu0 0
  %1985 = vmatprep.subr.bf16.mxu0 %v1646
  %1986 = vmatpush1.bf16.msra.mxu0 %v1645
  %1987 = vmatprep.subr.bf16.mxu0 %v1644
  %1988 = vmatpush1.bf16.msra.mxu0 %v1643
  %1989 = vmatprep.subr.bf16.mxu0 %v1642
  %1990 = vmatpush1.bf16.msra.mxu0 %v1641
  %1991 = vmatprep.subr.bf16.mxu0 %v1640
  %1992 = vmatpush1.bf16.msra.mxu0 %v1639
  %1993 = vmatprep.subr.bf16.mxu0 0
  %1994 = vmatpush2.bf16.msra.mxu0 0
  %1995 = vmatprep.subr.bf16.mxu0 0
  %1996 = vmatpush2.bf16.msra.mxu0 0
  %1997 = vmatprep.subr.bf16.mxu0 0
  %1998 = vmatpush2.bf16.msra.mxu0 0
  %1999 = vmatprep.subr.bf16.mxu0 0
  %2000 = vmatpush2.bf16.msra.mxu0 0
  %2001 = vmatprep.subr.bf16.mxu0 0
  %2002 = vmatpush2.bf16.msra.mxu0 0
  %2003 = vmatprep.subr.bf16.mxu0 0
  %2004 = vmatpush2.bf16.msra.mxu0 0
  %2005 = vmatprep.subr.bf16.mxu0 0
  %2006 = vmatpush2.bf16.msra.mxu0 0
  %2007 = vmatprep.subr.bf16.mxu0 0
  %2008 = vmatpush2.bf16.msra.mxu0 0
  %2009 = vmatprep.mubr.bf16.mxu0 0
  %2010 = vmatmul.mubr.bf16.gmra.mxu0 %v1820
  %v2011 = vpop.f32.mrf.mxu0
  %v2012 = vadd.f32 %v1939, %v2011
  %v2013 = vpop.f32.mrf.mxu0
  %v2014 = vadd.f32 %v1941, %v2013
  %v2015 = vpop.f32.mrf.mxu0
  %v2016 = vadd.f32 %v1943, %v2015
  %v2017 = vpop.f32.mrf.mxu0
  %v2018 = vadd.f32 %v1945, %v2017
  %2019 = vmatprep.mubr.bf16.mxu0 0
  %2020 = vmatmul.mubr.bf16.gmra.mxu0 %v1823
  %v2021 = vpop.f32.mrf.mxu0
  %v2022 = vadd.f32 %v1949, %v2021
  %v2023 = vpop.f32.mrf.mxu0
  %v2024 = vadd.f32 %v1951, %v2023
  %v2025 = vpop.f32.mrf.mxu0
  %v2026 = vadd.f32 %v1953, %v2025
  %v2027 = vpop.f32.mrf.mxu0
  %v2028 = vadd.f32 %v1955, %v2027
  %2029 = vmatprep.mubr.bf16.mxu0 0
  %2030 = vmatmul.mubr.bf16.gmra.mxu0 %v1826
  %v2031 = vpop.f32.mrf.mxu0
  %v2032 = vadd.f32 %v1959, %v2031
  %v2033 = vpop.f32.mrf.mxu0
  %v2034 = vadd.f32 %v1961, %v2033
  %v2035 = vpop.f32.mrf.mxu0
  %v2036 = vadd.f32 %v1963, %v2035
  %v2037 = vpop.f32.mrf.mxu0
  %v2038 = vadd.f32 %v1965, %v2037
  %2039 = vmatprep.mubr.bf16.mxu0 0
  %2040 = vmatmul.mubr.bf16.gmra.mxu0 %v1829
  %v2041 = vpop.f32.mrf.mxu0
  %v2042 = vadd.f32 %v1969, %v2041
  %v2043 = vpop.f32.mrf.mxu0
  %v2044 = vadd.f32 %v1971, %v2043
  %v2045 = vpop.f32.mrf.mxu0
  %v2046 = vadd.f32 %v1973, %v2045
  %v2047 = vpop.f32.mrf.mxu0
  %v2048 = vadd.f32 %v1975, %v2047
  %2049 = vdwg.mxu0
  %v2050 = vxor.u32 %v2012, 2147483648
  %v2051 = vxor.u32 %v2014, 2147483648
  %v2052 = vxor.u32 %v2016, 2147483648
  %v2053 = vxor.u32 %v2018, 2147483648
  %v2054 = vxor.u32 %v2022, 2147483648
  %v2055 = vxor.u32 %v2024, 2147483648
  %v2056 = vxor.u32 %v2026, 2147483648
  %v2057 = vxor.u32 %v2028, 2147483648
  %v2058 = vxor.u32 %v2032, 2147483648
  %v2059 = vxor.u32 %v2034, 2147483648
  %v2060 = vxor.u32 %v2036, 2147483648
  %v2061 = vxor.u32 %v2038, 2147483648
  %v2062 = vxor.u32 %v2042, 2147483648
  %v2063 = vxor.u32 %v2044, 2147483648
  %v2064 = vxor.u32 %v2046, 2147483648
  %v2065 = vxor.u32 %v2048, 2147483648
  %v2066 = vmul.f32 %v2050, 1.442695
  %v2067 = vpow.pop %v2066
  %v2068 = vmul.f32 %v2051, 1.442695
  %v2069 = vpow.pop %v2068
  %v2070 = vmul.f32 %v2052, 1.442695
  %v2071 = vpow.pop %v2070
  %v2072 = vmul.f32 %v2053, 1.442695
  %v2073 = vpow.pop %v2072
  %v2074 = vmul.f32 %v2054, 1.442695
  %v2075 = vpow.pop %v2074
  %v2076 = vmul.f32 %v2055, 1.442695
  %v2077 = vpow.pop %v2076
  %v2078 = vmul.f32 %v2056, 1.442695
  %v2079 = vpow.pop %v2078
  %v2080 = vmul.f32 %v2057, 1.442695
  %v2081 = vpow.pop %v2080
  %v2082 = vmul.f32 %v2058, 1.442695
  %v2083 = vpow.pop %v2082
  %v2084 = vmul.f32 %v2059, 1.442695
  %v2085 = vpow.pop %v2084
  %v2086 = vmul.f32 %v2060, 1.442695
  %v2087 = vpow.pop %v2086
  %v2088 = vmul.f32 %v2061, 1.442695
  %v2089 = vpow.pop %v2088
  %v2090 = vmul.f32 %v2062, 1.442695
  %v2091 = vpow.pop %v2090
  %v2092 = vmul.f32 %v2063, 1.442695
  %v2093 = vpow.pop %v2092
  %v2094 = vmul.f32 %v2064, 1.442695
  %v2095 = vpow.pop %v2094
  %v2096 = vmul.f32 %v2065, 1.442695
  %v2097 = vpow.pop %v2096
  %v2098 = vadd.f32 %v2067, 1.0
  %v2099 = vadd.f32 %v2069, 1.0
  %v2100 = vadd.f32 %v2071, 1.0
  %v2101 = vadd.f32 %v2073, 1.0
  %v2102 = vadd.f32 %v2075, 1.0
  %v2103 = vadd.f32 %v2077, 1.0
  %v2104 = vadd.f32 %v2079, 1.0
  %v2105 = vadd.f32 %v2081, 1.0
  %v2106 = vadd.f32 %v2083, 1.0
  %v2107 = vadd.f32 %v2085, 1.0
  %v2108 = vadd.f32 %v2087, 1.0
  %v2109 = vadd.f32 %v2089, 1.0
  %v2110 = vadd.f32 %v2091, 1.0
  %v2111 = vadd.f32 %v2093, 1.0
  %v2112 = vadd.f32 %v2095, 1.0
  %v2113 = vadd.f32 %v2097, 1.0
  %v2114 = vrcp.pop %v2098
  %v2115 = vmul.f32 1.0, %v2114
  %v2116 = vrcp.pop %v2099
  %v2117 = vmul.f32 1.0, %v2116
  %v2118 = vrcp.pop %v2100
  %v2119 = vmul.f32 1.0, %v2118
  %v2120 = vrcp.pop %v2101
  %v2121 = vmul.f32 1.0, %v2120
  %v2122 = vrcp.pop %v2102
  %v2123 = vmul.f32 1.0, %v2122
  %v2124 = vrcp.pop %v2103
  %v2125 = vmul.f32 1.0, %v2124
  %v2126 = vrcp.pop %v2104
  %v2127 = vmul.f32 1.0, %v2126
  %v2128 = vrcp.pop %v2105
  %v2129 = vmul.f32 1.0, %v2128
  %v2130 = vrcp.pop %v2106
  %v2131 = vmul.f32 1.0, %v2130
  %v2132 = vrcp.pop %v2107
  %v2133 = vmul.f32 1.0, %v2132
  %v2134 = vrcp.pop %v2108
  %v2135 = vmul.f32 1.0, %v2134
  %v2136 = vrcp.pop %v2109
  %v2137 = vmul.f32 1.0, %v2136
  %v2138 = vrcp.pop %v2110
  %v2139 = vmul.f32 1.0, %v2138
  %v2140 = vrcp.pop %v2111
  %v2141 = vmul.f32 1.0, %v2140
  %v2142 = vrcp.pop %v2112
  %v2143 = vmul.f32 1.0, %v2142
  %v2144 = vrcp.pop %v2113
  %v2145 = vmul.f32 1.0, %v2144
  %v2146 = vmul.f32 %v2012, %v2115
  %v2147 = vmul.f32 %v2014, %v2117
  %v2148 = vmul.f32 %v2016, %v2119
  %v2149 = vmul.f32 %v2018, %v2121
  %v2150 = vmul.f32 %v2022, %v2123
  %v2151 = vmul.f32 %v2024, %v2125
  %v2152 = vmul.f32 %v2026, %v2127
  %v2153 = vmul.f32 %v2028, %v2129
  %v2154 = vmul.f32 %v2032, %v2131
  %v2155 = vmul.f32 %v2034, %v2133
  %v2156 = vmul.f32 %v2036, %v2135
  %v2157 = vmul.f32 %v2038, %v2137
  %v2158 = vmul.f32 %v2042, %v2139
  %v2159 = vmul.f32 %v2044, %v2141
  %v2160 = vmul.f32 %v2046, %v2143
  %v2161 = vmul.f32 %v2048, %v2145
  %v2162 = vadd.f32 %v949, %v950
  %2163 = vadd.xlane.f32.xlu0 %v2162
  %v2164 = vpop.xlane.xlu0 %2163
  %v2165 = vadd.f32 %v951, %v952
  %2166 = vadd.xlane.f32.xlu0 %v2165
  %v2167 = vpop.xlane.xlu0 %2166
  %v2168 = vadd.f32 %v953, %v954
  %2169 = vadd.xlane.f32.xlu0 %v2168
  %v2170 = vpop.xlane.xlu0 %2169
  %v2171 = vadd.f32 %v955, %v956
  %2172 = vadd.xlane.f32.xlu0 %v2171
  %v2173 = vpop.xlane.xlu0 %2172
  %v2174 = vadd.f32 %v957, %v958
  %2175 = vadd.xlane.f32.xlu0 %v2174
  %v2176 = vpop.xlane.xlu0 %2175
  %v2177 = vadd.f32 %v959, %v960
  %2178 = vadd.xlane.f32.xlu0 %v2177
  %v2179 = vpop.xlane.xlu0 %2178
  %v2180 = vadd.f32 %v961, %v962
  %2181 = vadd.xlane.f32.xlu0 %v2180
  %v2182 = vpop.xlane.xlu0 %2181
  %v2183 = vadd.f32 %v963, %v964
  %2184 = vadd.xlane.f32.xlu0 %v2183
  %v2185 = vpop.xlane.xlu0 %2184
  %v2186 = vmul.f32 %v2164, %v716
  %v2187 = vmul.f32 %v2167, %v716
  %v2188 = vmul.f32 %v2170, %v716
  %v2189 = vmul.f32 %v2173, %v716
  %v2190 = vmul.f32 %v2176, %v716
  %v2191 = vmul.f32 %v2179, %v716
  %v2192 = vmul.f32 %v2182, %v716
  %v2193 = vmul.f32 %v2185, %v716
  %v2194 = vmax.f32 %v2186, %v2190
  %v2195 = vmax.f32 %v2187, %v2191
  %v2196 = vmax.f32 %v2188, %v2192
  %v2197 = vmax.f32 %v2189, %v2193
  %v2198 = vmax.f32 %v2194, %v2195
  %v2199 = vmax.f32 %v2196, %v2197
  %v2200 = vmax.f32 %v2198, %v2199
  %v2201 = vrot.slane %v2200, 4
  %v2202 = vmax.f32 %v2200, %v2201
  %v2203 = vrot.slane %v2202, 2
  %v2204 = vmax.f32 %v2202, %v2203
  %v2205 = vrot.slane %v2204, 1
  %v2206 = vmax.f32 %v2204, %v2205
  %v2207 = vsub.f32 %v2186, %v2206
  %v2208 = vsub.f32 %v2187, %v2206
  %v2209 = vsub.f32 %v2188, %v2206
  %v2210 = vsub.f32 %v2189, %v2206
  %v2211 = vsub.f32 %v2190, %v2206
  %v2212 = vsub.f32 %v2191, %v2206
  %v2213 = vsub.f32 %v2192, %v2206
  %v2214 = vsub.f32 %v2193, %v2206
  %v2215 = vmul.f32 %v2207, 1.442695
  %v2216 = vpow.pop %v2215
  %v2217 = vmul.f32 %v2208, 1.442695
  %v2218 = vpow.pop %v2217
  %v2219 = vmul.f32 %v2209, 1.442695
  %v2220 = vpow.pop %v2219
  %v2221 = vmul.f32 %v2210, 1.442695
  %v2222 = vpow.pop %v2221
  %v2223 = vmul.f32 %v2211, 1.442695
  %v2224 = vpow.pop %v2223
  %v2225 = vmul.f32 %v2212, 1.442695
  %v2226 = vpow.pop %v2225
  %v2227 = vmul.f32 %v2213, 1.442695
  %v2228 = vpow.pop %v2227
  %v2229 = vmul.f32 %v2214, 1.442695
  %v2230 = vpow.pop %v2229
  %v2231 = vmul.f32 %v2216, %v949
  %v2232 = vmul.f32 %v2216, %v950
  %v2233 = vmul.f32 %v2218, %v951
  %v2234 = vmul.f32 %v2218, %v952
  %v2235 = vmul.f32 %v2220, %v953
  %v2236 = vmul.f32 %v2220, %v954
  %v2237 = vmul.f32 %v2222, %v955
  %v2238 = vmul.f32 %v2222, %v956
  %v2239 = vmul.f32 %v2224, %v957
  %v2240 = vmul.f32 %v2224, %v958
  %v2241 = vmul.f32 %v2226, %v959
  %v2242 = vmul.f32 %v2226, %v960
  %v2243 = vmul.f32 %v2228, %v961
  %v2244 = vmul.f32 %v2228, %v962
  %v2245 = vmul.f32 %v2230, %v963
  %v2246 = vmul.f32 %v2230, %v964
  %v2248 = vsel %vm260, %v63, 0
  %v2251 = vsel %vm260, %v64, 0
  %v2254 = vsel %vm260, %v65, 0
  %v2257 = vsel %vm260, %v66, 0
  %v2260 = vsel %vm260, %v67, 0
  %v2263 = vsel %vm260, %v68, 0
  %v2266 = vsel %vm260, %v69, 0
  %v2269 = vsel %vm260, %v70, 0
  %2271 = vmatprep.subr.mxu0 0.0
  %2272 = vmatpush1.msra.mxu0 0.0
  %2273 = vmatprep.subr.mxu0 0.0
  %2274 = vmatpush1.msra.mxu0 0.0
  %2275 = vmatprep.subr.mxu0 0.0
  %2276 = vmatpush1.msra.mxu0 0.0
  %2277 = vmatprep.subr.mxu0 0.0
  %2278 = vmatpush1.msra.mxu0 0.0
  %2279 = vmatprep.subr.mxu0 0.0
  %2280 = vmatpush1.msra.mxu0 0.0
  %2281 = vmatprep.subr.mxu0 0.0
  %2282 = vmatpush1.msra.mxu0 0.0
  %2283 = vmatprep.subr.mxu0 0.0
  %2284 = vmatpush1.msra.mxu0 0.0
  %2285 = vmatprep.subr.mxu0 0.0
  %2286 = vmatpush1.msra.mxu0 0.0
  %2287 = vmatprep.subr.mxu0 %v2246
  %2288 = vmatpush1.msra.mxu0 %v2245
  %2289 = vmatprep.subr.mxu0 %v2244
  %2290 = vmatpush1.msra.mxu0 %v2243
  %2291 = vmatprep.subr.mxu0 %v2242
  %2292 = vmatpush1.msra.mxu0 %v2241
  %2293 = vmatprep.subr.mxu0 %v2240
  %2294 = vmatpush1.msra.mxu0 %v2239
  %2295 = vmatprep.subr.mxu0 %v2238
  %2296 = vmatpush1.msra.mxu0 %v2237
  %2297 = vmatprep.subr.mxu0 %v2236
  %2298 = vmatpush1.msra.mxu0 %v2235
  %2299 = vmatprep.subr.mxu0 %v2234
  %2300 = vmatpush1.msra.mxu0 %v2233
  %2301 = vmatprep.subr.mxu0 %v2232
  %2302 = vmatpush1.msra.mxu0 %v2231
  %2303 = vmatprep.subr.mxu0 0.0
  %2304 = vmatpush2.msra.mxu0 0.0
  %2305 = vmatprep.subr.mxu0 0.0
  %2306 = vmatpush2.msra.mxu0 0.0
  %2307 = vmatprep.subr.mxu0 0.0
  %2308 = vmatpush2.msra.mxu0 0.0
  %2309 = vmatprep.subr.mxu0 0.0
  %2310 = vmatpush2.msra.mxu0 0.0
  %2311 = vmatprep.subr.mxu0 0.0
  %2312 = vmatpush2.msra.mxu0 0.0
  %2313 = vmatprep.subr.mxu0 0.0
  %2314 = vmatpush2.msra.mxu0 0.0
  %2315 = vmatprep.subr.mxu0 0.0
  %2316 = vmatpush2.msra.mxu0 0.0
  %2317 = vmatprep.subr.mxu0 0.0
  %2318 = vmatpush2.msra.mxu0 0.0
  %2319 = vmatprep.subr.mxu0 0.0
  %2320 = vmatpush2.msra.mxu0 0.0
  %2321 = vmatprep.subr.mxu0 0.0
  %2322 = vmatpush2.msra.mxu0 0.0
  %2323 = vmatprep.subr.mxu0 0.0
  %2324 = vmatpush2.msra.mxu0 0.0
  %2325 = vmatprep.subr.mxu0 0.0
  %2326 = vmatpush2.msra.mxu0 0.0
  %2327 = vmatprep.subr.mxu0 0.0
  %2328 = vmatpush2.msra.mxu0 0.0
  %2329 = vmatprep.subr.mxu0 0.0
  %2330 = vmatpush2.msra.mxu0 0.0
  %2331 = vmatprep.subr.mxu0 0.0
  %2332 = vmatpush2.msra.mxu0 0.0
  %2333 = vmatprep.subr.mxu0 0.0
  %2334 = vmatpush2.msra.mxu0 0.0
  %2335 = vmatprep.mubr.f32.mxu0 0.0
  %2336 = vmatmul.mubr.f32.gmra.mxu0 %v2248
  %v2337 = vpop.f32.mrf.mxu0
  %v2338 = vadd.f32 0.0, %v2337
  %v2339 = vpop.f32.mrf.mxu0
  %v2340 = vadd.f32 0.0, %v2339
  %2341 = vmatprep.mubr.f32.mxu0 0.0
  %2342 = vmatmul.mubr.f32.gmra.mxu0 %v2251
  %v2343 = vpop.f32.mrf.mxu0
  %v2344 = vadd.f32 0.0, %v2343
  %v2345 = vpop.f32.mrf.mxu0
  %v2346 = vadd.f32 0.0, %v2345
  %2347 = vmatprep.mubr.f32.mxu0 0.0
  %2348 = vmatmul.mubr.f32.gmra.mxu0 %v2254
  %v2349 = vpop.f32.mrf.mxu0
  %v2350 = vadd.f32 0.0, %v2349
  %v2351 = vpop.f32.mrf.mxu0
  %v2352 = vadd.f32 0.0, %v2351
  %2353 = vmatprep.mubr.f32.mxu0 0.0
  %2354 = vmatmul.mubr.f32.gmra.mxu0 %v2257
  %v2355 = vpop.f32.mrf.mxu0
  %v2356 = vadd.f32 0.0, %v2355
  %v2357 = vpop.f32.mrf.mxu0
  %v2358 = vadd.f32 0.0, %v2357
  %2359 = vmatprep.mubr.f32.mxu0 0.0
  %2360 = vmatmul.mubr.f32.gmra.mxu0 %v2260
  %v2361 = vpop.f32.mrf.mxu0
  %v2362 = vadd.f32 0.0, %v2361
  %v2363 = vpop.f32.mrf.mxu0
  %v2364 = vadd.f32 0.0, %v2363
  %2365 = vmatprep.mubr.f32.mxu0 0.0
  %2366 = vmatmul.mubr.f32.gmra.mxu0 %v2263
  %v2367 = vpop.f32.mrf.mxu0
  %v2368 = vadd.f32 0.0, %v2367
  %v2369 = vpop.f32.mrf.mxu0
  %v2370 = vadd.f32 0.0, %v2369
  %2371 = vmatprep.mubr.f32.mxu0 0.0
  %2372 = vmatmul.mubr.f32.gmra.mxu0 %v2266
  %v2373 = vpop.f32.mrf.mxu0
  %v2374 = vadd.f32 0.0, %v2373
  %v2375 = vpop.f32.mrf.mxu0
  %v2376 = vadd.f32 0.0, %v2375
  %2377 = vmatprep.mubr.f32.mxu0 0.0
  %2378 = vmatmul.mubr.f32.gmra.mxu0 %v2269
  %v2379 = vpop.f32.mrf.mxu0
  %v2380 = vadd.f32 0.0, %v2379
  %v2381 = vpop.f32.mrf.mxu0
  %v2382 = vadd.f32 0.0, %v2381
  %2383 = vdwg.mxu0
  %2384 = vmatprep.subr.mxu0 0.0
  %2385 = vmatpush1.msra.mxu0 0.0
  %2386 = vmatprep.subr.mxu0 0.0
  %2387 = vmatpush1.msra.mxu0 0.0
  %2388 = vmatprep.subr.mxu0 0.0
  %2389 = vmatpush1.msra.mxu0 0.0
  %2390 = vmatprep.subr.mxu0 0.0
  %2391 = vmatpush1.msra.mxu0 0.0
  %2392 = vmatprep.subr.mxu0 0.0
  %2393 = vmatpush1.msra.mxu0 0.0
  %2394 = vmatprep.subr.mxu0 0.0
  %2395 = vmatpush1.msra.mxu0 0.0
  %2396 = vmatprep.subr.mxu0 0.0
  %2397 = vmatpush1.msra.mxu0 0.0
  %2398 = vmatprep.subr.mxu0 0.0
  %2399 = vmatpush1.msra.mxu0 0.0
  %2400 = vmatprep.subr.mxu0 0.0
  %2401 = vmatpush1.msra.mxu0 %v2230
  %2402 = vmatprep.subr.mxu0 0.0
  %2403 = vmatpush1.msra.mxu0 %v2228
  %2404 = vmatprep.subr.mxu0 0.0
  %2405 = vmatpush1.msra.mxu0 %v2226
  %2406 = vmatprep.subr.mxu0 0.0
  %2407 = vmatpush1.msra.mxu0 %v2224
  %2408 = vmatprep.subr.mxu0 0.0
  %2409 = vmatpush1.msra.mxu0 %v2222
  %2410 = vmatprep.subr.mxu0 0.0
  %2411 = vmatpush1.msra.mxu0 %v2220
  %2412 = vmatprep.subr.mxu0 0.0
  %2413 = vmatpush1.msra.mxu0 %v2218
  %2414 = vmatprep.subr.mxu0 0.0
  %2415 = vmatpush1.msra.mxu0 %v2216
  %2416 = vmatprep.subr.mxu0 0.0
  %2417 = vmatpush2.msra.mxu0 0.0
  %2418 = vmatprep.subr.mxu0 0.0
  %2419 = vmatpush2.msra.mxu0 0.0
  %2420 = vmatprep.subr.mxu0 0.0
  %2421 = vmatpush2.msra.mxu0 0.0
  %2422 = vmatprep.subr.mxu0 0.0
  %2423 = vmatpush2.msra.mxu0 0.0
  %2424 = vmatprep.subr.mxu0 0.0
  %2425 = vmatpush2.msra.mxu0 0.0
  %2426 = vmatprep.subr.mxu0 0.0
  %2427 = vmatpush2.msra.mxu0 0.0
  %2428 = vmatprep.subr.mxu0 0.0
  %2429 = vmatpush2.msra.mxu0 0.0
  %2430 = vmatprep.subr.mxu0 0.0
  %2431 = vmatpush2.msra.mxu0 0.0
  %2432 = vmatprep.subr.mxu0 0.0
  %2433 = vmatpush2.msra.mxu0 0.0
  %2434 = vmatprep.subr.mxu0 0.0
  %2435 = vmatpush2.msra.mxu0 0.0
  %2436 = vmatprep.subr.mxu0 0.0
  %2437 = vmatpush2.msra.mxu0 0.0
  %2438 = vmatprep.subr.mxu0 0.0
  %2439 = vmatpush2.msra.mxu0 0.0
  %2440 = vmatprep.subr.mxu0 0.0
  %2441 = vmatpush2.msra.mxu0 0.0
  %2442 = vmatprep.subr.mxu0 0.0
  %2443 = vmatpush2.msra.mxu0 0.0
  %2444 = vmatprep.subr.mxu0 0.0
  %2445 = vmatpush2.msra.mxu0 0.0
  %2446 = vmatprep.subr.mxu0 0.0
  %2447 = vmatpush2.msra.mxu0 0.0
  %2448 = vmatprep.mubr.f32.mxu0 0.0
  %2449 = vmatmul.mubr.f32.gmra.mxu0 %v2248
  %v2450 = vpop.f32.mrf.mxu0
  %v2451 = vadd.f32 0.0, %v2450
  %v2452 = vpop.f32.mrf.mxu0
  %2453 = vmatprep.mubr.f32.mxu0 0.0
  %2454 = vmatmul.mubr.f32.gmra.mxu0 %v2251
  %v2455 = vpop.f32.mrf.mxu0
  %v2456 = vadd.f32 0.0, %v2455
  %v2457 = vpop.f32.mrf.mxu0
  %2458 = vmatprep.mubr.f32.mxu0 0.0
  %2459 = vmatmul.mubr.f32.gmra.mxu0 %v2254
  %v2460 = vpop.f32.mrf.mxu0
  %v2461 = vadd.f32 0.0, %v2460
  %v2462 = vpop.f32.mrf.mxu0
  %2463 = vmatprep.mubr.f32.mxu0 0.0
  %2464 = vmatmul.mubr.f32.gmra.mxu0 %v2257
  %v2465 = vpop.f32.mrf.mxu0
  %v2466 = vadd.f32 0.0, %v2465
  %v2467 = vpop.f32.mrf.mxu0
  %2468 = vmatprep.mubr.f32.mxu0 0.0
  %2469 = vmatmul.mubr.f32.gmra.mxu0 %v2260
  %v2470 = vpop.f32.mrf.mxu0
  %v2471 = vadd.f32 0.0, %v2470
  %v2472 = vpop.f32.mrf.mxu0
  %2473 = vmatprep.mubr.f32.mxu0 0.0
  %2474 = vmatmul.mubr.f32.gmra.mxu0 %v2263
  %v2475 = vpop.f32.mrf.mxu0
  %v2476 = vadd.f32 0.0, %v2475
  %v2477 = vpop.f32.mrf.mxu0
  %2478 = vmatprep.mubr.f32.mxu0 0.0
  %2479 = vmatmul.mubr.f32.gmra.mxu0 %v2266
  %v2480 = vpop.f32.mrf.mxu0
  %v2481 = vadd.f32 0.0, %v2480
  %v2482 = vpop.f32.mrf.mxu0
  %2483 = vmatprep.mubr.f32.mxu0 0.0
  %2484 = vmatmul.mubr.f32.gmra.mxu0 %v2269
  %v2485 = vpop.f32.mrf.mxu0
  %v2486 = vadd.f32 0.0, %v2485
  %v2487 = vpop.f32.mrf.mxu0
  %2488 = vdwg.mxu0
  %v2489 = vrcp.pop %v2451
  %v2490 = vrcp.pop %v2456
  %v2491 = vrcp.pop %v2461
  %v2492 = vrcp.pop %v2466
  %v2493 = vrcp.pop %v2471
  %v2494 = vrcp.pop %v2476
  %v2495 = vrcp.pop %v2481
  %v2496 = vrcp.pop %v2486
  %2498 = vset.pattern.permute.xlu0 0
  %2499 = vperm.xlu0 %2498, %v2489
  %v2500 = vpop.permute.xlu0 %2499
  %2503 = vset.pattern.permute.xlu0 0
  %2504 = vperm.xlu0 %2503, %v2490
  %v2505 = vpop.permute.xlu0 %2504
  %2508 = vset.pattern.permute.xlu0 0
  %2509 = vperm.xlu0 %2508, %v2491
  %v2510 = vpop.permute.xlu0 %2509
  %2513 = vset.pattern.permute.xlu0 0
  %2514 = vperm.xlu0 %2513, %v2492
  %v2515 = vpop.permute.xlu0 %2514
  %2518 = vset.pattern.permute.xlu0 0
  %2519 = vperm.xlu0 %2518, %v2493
  %v2520 = vpop.permute.xlu0 %2519
  %2523 = vset.pattern.permute.xlu0 0
  %2524 = vperm.xlu0 %2523, %v2494
  %v2525 = vpop.permute.xlu0 %2524
  %2528 = vset.pattern.permute.xlu0 0
  %2529 = vperm.xlu0 %2528, %v2495
  %v2530 = vpop.permute.xlu0 %2529
  %2533 = vset.pattern.permute.xlu0 0
  %2534 = vperm.xlu0 %2533, %v2496
  %v2535 = vpop.permute.xlu0 %2534
  %v2537 = vmul.f32 %v2338, %v2500
  %v2538 = vmul.f32 %v2340, %v2500
  %v2539 = vmul.f32 %v2344, %v2505
  %v2540 = vmul.f32 %v2346, %v2505
  %v2541 = vmul.f32 %v2350, %v2510
  %v2542 = vmul.f32 %v2352, %v2510
  %v2543 = vmul.f32 %v2356, %v2515
  %v2544 = vmul.f32 %v2358, %v2515
  %v2545 = vmul.f32 %v2362, %v2520
  %v2546 = vmul.f32 %v2364, %v2520
  %v2547 = vmul.f32 %v2368, %v2525
  %v2548 = vmul.f32 %v2370, %v2525
  %v2549 = vmul.f32 %v2374, %v2530
  %v2550 = vmul.f32 %v2376, %v2530
  %v2551 = vmul.f32 %v2380, %v2535
  %v2552 = vmul.f32 %v2382, %v2535
  %v2553 = vadd.f32 %v2146, %v2147
  %2554 = vadd.xlane.f32.xlu0 %v2553
  %v2555 = vpop.xlane.xlu0 %2554
  %v2556 = vadd.f32 %v2148, %v2149
  %2557 = vadd.xlane.f32.xlu0 %v2556
  %v2558 = vpop.xlane.xlu0 %2557
  %v2559 = vadd.f32 %v2150, %v2151
  %2560 = vadd.xlane.f32.xlu0 %v2559
  %v2561 = vpop.xlane.xlu0 %2560
  %v2562 = vadd.f32 %v2152, %v2153
  %2563 = vadd.xlane.f32.xlu0 %v2562
  %v2564 = vpop.xlane.xlu0 %2563
  %v2565 = vadd.f32 %v2154, %v2155
  %2566 = vadd.xlane.f32.xlu0 %v2565
  %v2567 = vpop.xlane.xlu0 %2566
  %v2568 = vadd.f32 %v2156, %v2157
  %2569 = vadd.xlane.f32.xlu0 %v2568
  %v2570 = vpop.xlane.xlu0 %2569
  %v2571 = vadd.f32 %v2158, %v2159
  %2572 = vadd.xlane.f32.xlu0 %v2571
  %v2573 = vpop.xlane.xlu0 %2572
  %v2574 = vadd.f32 %v2160, %v2161
  %2575 = vadd.xlane.f32.xlu0 %v2574
  %v2576 = vpop.xlane.xlu0 %2575
  %v2577 = vmul.f32 %v2555, %v716
  %v2578 = vmul.f32 %v2558, %v716
  %v2579 = vmul.f32 %v2561, %v716
  %v2580 = vmul.f32 %v2564, %v716
  %v2581 = vmul.f32 %v2567, %v716
  %v2582 = vmul.f32 %v2570, %v716
  %v2583 = vmul.f32 %v2573, %v716
  %v2584 = vmul.f32 %v2576, %v716
  %v2585 = vmax.f32 %v2577, %v2581
  %v2586 = vmax.f32 %v2578, %v2582
  %v2587 = vmax.f32 %v2579, %v2583
  %v2588 = vmax.f32 %v2580, %v2584
  %v2589 = vmax.f32 %v2585, %v2586
  %v2590 = vmax.f32 %v2587, %v2588
  %v2591 = vmax.f32 %v2589, %v2590
  %v2592 = vrot.slane %v2591, 4
  %v2593 = vmax.f32 %v2591, %v2592
  %v2594 = vrot.slane %v2593, 2
  %v2595 = vmax.f32 %v2593, %v2594
  %v2596 = vrot.slane %v2595, 1
  %v2597 = vmax.f32 %v2595, %v2596
  %v2598 = vsub.f32 %v2577, %v2597
  %v2599 = vsub.f32 %v2578, %v2597
  %v2600 = vsub.f32 %v2579, %v2597
  %v2601 = vsub.f32 %v2580, %v2597
  %v2602 = vsub.f32 %v2581, %v2597
  %v2603 = vsub.f32 %v2582, %v2597
  %v2604 = vsub.f32 %v2583, %v2597
  %v2605 = vsub.f32 %v2584, %v2597
  %v2606 = vmul.f32 %v2598, 1.442695
  %v2607 = vpow.pop %v2606
  %v2608 = vmul.f32 %v2599, 1.442695
  %v2609 = vpow.pop %v2608
  %v2610 = vmul.f32 %v2600, 1.442695
  %v2611 = vpow.pop %v2610
  %v2612 = vmul.f32 %v2601, 1.442695
  %v2613 = vpow.pop %v2612
  %v2614 = vmul.f32 %v2602, 1.442695
  %v2615 = vpow.pop %v2614
  %v2616 = vmul.f32 %v2603, 1.442695
  %v2617 = vpow.pop %v2616
  %v2618 = vmul.f32 %v2604, 1.442695
  %v2619 = vpow.pop %v2618
  %v2620 = vmul.f32 %v2605, 1.442695
  %v2621 = vpow.pop %v2620
  %v2622 = vmul.f32 %v2607, %v2146
  %v2623 = vmul.f32 %v2607, %v2147
  %v2624 = vmul.f32 %v2609, %v2148
  %v2625 = vmul.f32 %v2609, %v2149
  %v2626 = vmul.f32 %v2611, %v2150
  %v2627 = vmul.f32 %v2611, %v2151
  %v2628 = vmul.f32 %v2613, %v2152
  %v2629 = vmul.f32 %v2613, %v2153
  %v2630 = vmul.f32 %v2615, %v2154
  %v2631 = vmul.f32 %v2615, %v2155
  %v2632 = vmul.f32 %v2617, %v2156
  %v2633 = vmul.f32 %v2617, %v2157
  %v2634 = vmul.f32 %v2619, %v2158
  %v2635 = vmul.f32 %v2619, %v2159
  %v2636 = vmul.f32 %v2621, %v2160
  %v2637 = vmul.f32 %v2621, %v2161
  %2638 = vmatprep.subr.mxu0 0.0
  %2639 = vmatpush1.msra.mxu0 0.0
  %2640 = vmatprep.subr.mxu0 0.0
  %2641 = vmatpush1.msra.mxu0 0.0
  %2642 = vmatprep.subr.mxu0 0.0
  %2643 = vmatpush1.msra.mxu0 0.0
  %2644 = vmatprep.subr.mxu0 0.0
  %2645 = vmatpush1.msra.mxu0 0.0
  %2646 = vmatprep.subr.mxu0 0.0
  %2647 = vmatpush1.msra.mxu0 0.0
  %2648 = vmatprep.subr.mxu0 0.0
  %2649 = vmatpush1.msra.mxu0 0.0
  %2650 = vmatprep.subr.mxu0 0.0
  %2651 = vmatpush1.msra.mxu0 0.0
  %2652 = vmatprep.subr.mxu0 0.0
  %2653 = vmatpush1.msra.mxu0 0.0
  %2654 = vmatprep.subr.mxu0 %v2637
  %2655 = vmatpush1.msra.mxu0 %v2636
  %2656 = vmatprep.subr.mxu0 %v2635
  %2657 = vmatpush1.msra.mxu0 %v2634
  %2658 = vmatprep.subr.mxu0 %v2633
  %2659 = vmatpush1.msra.mxu0 %v2632
  %2660 = vmatprep.subr.mxu0 %v2631
  %2661 = vmatpush1.msra.mxu0 %v2630
  %2662 = vmatprep.subr.mxu0 %v2629
  %2663 = vmatpush1.msra.mxu0 %v2628
  %2664 = vmatprep.subr.mxu0 %v2627
  %2665 = vmatpush1.msra.mxu0 %v2626
  %2666 = vmatprep.subr.mxu0 %v2625
  %2667 = vmatpush1.msra.mxu0 %v2624
  %2668 = vmatprep.subr.mxu0 %v2623
  %2669 = vmatpush1.msra.mxu0 %v2622
  %2670 = vmatprep.subr.mxu0 0.0
  %2671 = vmatpush2.msra.mxu0 0.0
  %2672 = vmatprep.subr.mxu0 0.0
  %2673 = vmatpush2.msra.mxu0 0.0
  %2674 = vmatprep.subr.mxu0 0.0
  %2675 = vmatpush2.msra.mxu0 0.0
  %2676 = vmatprep.subr.mxu0 0.0
  %2677 = vmatpush2.msra.mxu0 0.0
  %2678 = vmatprep.subr.mxu0 0.0
  %2679 = vmatpush2.msra.mxu0 0.0
  %2680 = vmatprep.subr.mxu0 0.0
  %2681 = vmatpush2.msra.mxu0 0.0
  %2682 = vmatprep.subr.mxu0 0.0
  %2683 = vmatpush2.msra.mxu0 0.0
  %2684 = vmatprep.subr.mxu0 0.0
  %2685 = vmatpush2.msra.mxu0 0.0
  %2686 = vmatprep.subr.mxu0 0.0
  %2687 = vmatpush2.msra.mxu0 0.0
  %2688 = vmatprep.subr.mxu0 0.0
  %2689 = vmatpush2.msra.mxu0 0.0
  %2690 = vmatprep.subr.mxu0 0.0
  %2691 = vmatpush2.msra.mxu0 0.0
  %2692 = vmatprep.subr.mxu0 0.0
  %2693 = vmatpush2.msra.mxu0 0.0
  %2694 = vmatprep.subr.mxu0 0.0
  %2695 = vmatpush2.msra.mxu0 0.0
  %2696 = vmatprep.subr.mxu0 0.0
  %2697 = vmatpush2.msra.mxu0 0.0
  %2698 = vmatprep.subr.mxu0 0.0
  %2699 = vmatpush2.msra.mxu0 0.0
  %2700 = vmatprep.subr.mxu0 0.0
  %2701 = vmatpush2.msra.mxu0 0.0
  %2702 = vmatprep.mubr.f32.mxu0 0.0
  %2703 = vmatmul.mubr.f32.gmra.mxu0 %v2248
  %v2704 = vpop.f32.mrf.mxu0
  %v2705 = vadd.f32 0.0, %v2704
  %v2706 = vpop.f32.mrf.mxu0
  %v2707 = vadd.f32 0.0, %v2706
  %2708 = vmatprep.mubr.f32.mxu0 0.0
  %2709 = vmatmul.mubr.f32.gmra.mxu0 %v2251
  %v2710 = vpop.f32.mrf.mxu0
  %v2711 = vadd.f32 0.0, %v2710
  %v2712 = vpop.f32.mrf.mxu0
  %v2713 = vadd.f32 0.0, %v2712
  %2714 = vmatprep.mubr.f32.mxu0 0.0
  %2715 = vmatmul.mubr.f32.gmra.mxu0 %v2254
  %v2716 = vpop.f32.mrf.mxu0
  %v2717 = vadd.f32 0.0, %v2716
  %v2718 = vpop.f32.mrf.mxu0
  %v2719 = vadd.f32 0.0, %v2718
  %2720 = vmatprep.mubr.f32.mxu0 0.0
  %2721 = vmatmul.mubr.f32.gmra.mxu0 %v2257
  %v2722 = vpop.f32.mrf.mxu0
  %v2723 = vadd.f32 0.0, %v2722
  %v2724 = vpop.f32.mrf.mxu0
  %v2725 = vadd.f32 0.0, %v2724
  %2726 = vmatprep.mubr.f32.mxu0 0.0
  %2727 = vmatmul.mubr.f32.gmra.mxu0 %v2260
  %v2728 = vpop.f32.mrf.mxu0
  %v2729 = vadd.f32 0.0, %v2728
  %v2730 = vpop.f32.mrf.mxu0
  %v2731 = vadd.f32 0.0, %v2730
  %2732 = vmatprep.mubr.f32.mxu0 0.0
  %2733 = vmatmul.mubr.f32.gmra.mxu0 %v2263
  %v2734 = vpop.f32.mrf.mxu0
  %v2735 = vadd.f32 0.0, %v2734
  %v2736 = vpop.f32.mrf.mxu0
  %v2737 = vadd.f32 0.0, %v2736
  %2738 = vmatprep.mubr.f32.mxu0 0.0
  %2739 = vmatmul.mubr.f32.gmra.mxu0 %v2266
  %v2740 = vpop.f32.mrf.mxu0
  %v2741 = vadd.f32 0.0, %v2740
  %v2742 = vpop.f32.mrf.mxu0
  %v2743 = vadd.f32 0.0, %v2742
  %2744 = vmatprep.mubr.f32.mxu0 0.0
  %2745 = vmatmul.mubr.f32.gmra.mxu0 %v2269
  %v2746 = vpop.f32.mrf.mxu0
  %v2747 = vadd.f32 0.0, %v2746
  %v2748 = vpop.f32.mrf.mxu0
  %v2749 = vadd.f32 0.0, %v2748
  %2750 = vdwg.mxu0
  %2751 = vmatprep.subr.mxu0 0.0
  %2752 = vmatpush1.msra.mxu0 0.0
  %2753 = vmatprep.subr.mxu0 0.0
  %2754 = vmatpush1.msra.mxu0 0.0
  %2755 = vmatprep.subr.mxu0 0.0
  %2756 = vmatpush1.msra.mxu0 0.0
  %2757 = vmatprep.subr.mxu0 0.0
  %2758 = vmatpush1.msra.mxu0 0.0
  %2759 = vmatprep.subr.mxu0 0.0
  %2760 = vmatpush1.msra.mxu0 0.0
  %2761 = vmatprep.subr.mxu0 0.0
  %2762 = vmatpush1.msra.mxu0 0.0
  %2763 = vmatprep.subr.mxu0 0.0
  %2764 = vmatpush1.msra.mxu0 0.0
  %2765 = vmatprep.subr.mxu0 0.0
  %2766 = vmatpush1.msra.mxu0 0.0
  %2767 = vmatprep.subr.mxu0 0.0
  %2768 = vmatpush1.msra.mxu0 %v2621
  %2769 = vmatprep.subr.mxu0 0.0
  %2770 = vmatpush1.msra.mxu0 %v2619
  %2771 = vmatprep.subr.mxu0 0.0
  %2772 = vmatpush1.msra.mxu0 %v2617
  %2773 = vmatprep.subr.mxu0 0.0
  %2774 = vmatpush1.msra.mxu0 %v2615
  %2775 = vmatprep.subr.mxu0 0.0
  %2776 = vmatpush1.msra.mxu0 %v2613
  %2777 = vmatprep.subr.mxu0 0.0
  %2778 = vmatpush1.msra.mxu0 %v2611
  %2779 = vmatprep.subr.mxu0 0.0
  %2780 = vmatpush1.msra.mxu0 %v2609
  %2781 = vmatprep.subr.mxu0 0.0
  %2782 = vmatpush1.msra.mxu0 %v2607
  %2783 = vmatprep.subr.mxu0 0.0
  %2784 = vmatpush2.msra.mxu0 0.0
  %2785 = vmatprep.subr.mxu0 0.0
  %2786 = vmatpush2.msra.mxu0 0.0
  %2787 = vmatprep.subr.mxu0 0.0
  %2788 = vmatpush2.msra.mxu0 0.0
  %2789 = vmatprep.subr.mxu0 0.0
  %2790 = vmatpush2.msra.mxu0 0.0
  %2791 = vmatprep.subr.mxu0 0.0
  %2792 = vmatpush2.msra.mxu0 0.0
  %2793 = vmatprep.subr.mxu0 0.0
  %2794 = vmatpush2.msra.mxu0 0.0
  %2795 = vmatprep.subr.mxu0 0.0
  %2796 = vmatpush2.msra.mxu0 0.0
  %2797 = vmatprep.subr.mxu0 0.0
  %2798 = vmatpush2.msra.mxu0 0.0
  %2799 = vmatprep.subr.mxu0 0.0
  %2800 = vmatpush2.msra.mxu0 0.0
  %2801 = vmatprep.subr.mxu0 0.0
  %2802 = vmatpush2.msra.mxu0 0.0
  %2803 = vmatprep.subr.mxu0 0.0
  %2804 = vmatpush2.msra.mxu0 0.0
  %2805 = vmatprep.subr.mxu0 0.0
  %2806 = vmatpush2.msra.mxu0 0.0
  %2807 = vmatprep.subr.mxu0 0.0
  %2808 = vmatpush2.msra.mxu0 0.0
  %2809 = vmatprep.subr.mxu0 0.0
  %2810 = vmatpush2.msra.mxu0 0.0
  %2811 = vmatprep.subr.mxu0 0.0
  %2812 = vmatpush2.msra.mxu0 0.0
  %2813 = vmatprep.subr.mxu0 0.0
  %2814 = vmatpush2.msra.mxu0 0.0
  %2815 = vmatprep.mubr.f32.mxu0 0.0
  %2816 = vmatmul.mubr.f32.gmra.mxu0 %v2248
  %v2817 = vpop.f32.mrf.mxu0
  %v2818 = vadd.f32 0.0, %v2817
  %v2819 = vpop.f32.mrf.mxu0
  %2820 = vmatprep.mubr.f32.mxu0 0.0
  %2821 = vmatmul.mubr.f32.gmra.mxu0 %v2251
  %v2822 = vpop.f32.mrf.mxu0
  %v2823 = vadd.f32 0.0, %v2822
  %v2824 = vpop.f32.mrf.mxu0
  %2825 = vmatprep.mubr.f32.mxu0 0.0
  %2826 = vmatmul.mubr.f32.gmra.mxu0 %v2254
  %v2827 = vpop.f32.mrf.mxu0
  %v2828 = vadd.f32 0.0, %v2827
  %v2829 = vpop.f32.mrf.mxu0
  %2830 = vmatprep.mubr.f32.mxu0 0.0
  %2831 = vmatmul.mubr.f32.gmra.mxu0 %v2257
  %v2832 = vpop.f32.mrf.mxu0
  %v2833 = vadd.f32 0.0, %v2832
  %v2834 = vpop.f32.mrf.mxu0
  %2835 = vmatprep.mubr.f32.mxu0 0.0
  %2836 = vmatmul.mubr.f32.gmra.mxu0 %v2260
  %v2837 = vpop.f32.mrf.mxu0
  %v2838 = vadd.f32 0.0, %v2837
  %v2839 = vpop.f32.mrf.mxu0
  %2840 = vmatprep.mubr.f32.mxu0 0.0
  %2841 = vmatmul.mubr.f32.gmra.mxu0 %v2263
  %v2842 = vpop.f32.mrf.mxu0
  %v2843 = vadd.f32 0.0, %v2842
  %v2844 = vpop.f32.mrf.mxu0
  %2845 = vmatprep.mubr.f32.mxu0 0.0
  %2846 = vmatmul.mubr.f32.gmra.mxu0 %v2266
  %v2847 = vpop.f32.mrf.mxu0
  %v2848 = vadd.f32 0.0, %v2847
  %v2849 = vpop.f32.mrf.mxu0
  %2850 = vmatprep.mubr.f32.mxu0 0.0
  %2851 = vmatmul.mubr.f32.gmra.mxu0 %v2269
  %v2852 = vpop.f32.mrf.mxu0
  %v2853 = vadd.f32 0.0, %v2852
  %v2854 = vpop.f32.mrf.mxu0
  %2855 = vdwg.mxu0
  %v2856 = vrcp.pop %v2818
  %v2857 = vrcp.pop %v2823
  %v2858 = vrcp.pop %v2828
  %v2859 = vrcp.pop %v2833
  %v2860 = vrcp.pop %v2838
  %v2861 = vrcp.pop %v2843
  %v2862 = vrcp.pop %v2848
  %v2863 = vrcp.pop %v2853
  %2865 = vset.pattern.permute.xlu0 0
  %2866 = vperm.xlu0 %2865, %v2856
  %v2867 = vpop.permute.xlu0 %2866
  %2870 = vset.pattern.permute.xlu0 0
  %2871 = vperm.xlu0 %2870, %v2857
  %v2872 = vpop.permute.xlu0 %2871
  %2875 = vset.pattern.permute.xlu0 0
  %2876 = vperm.xlu0 %2875, %v2858
  %v2877 = vpop.permute.xlu0 %2876
  %2880 = vset.pattern.permute.xlu0 0
  %2881 = vperm.xlu0 %2880, %v2859
  %v2882 = vpop.permute.xlu0 %2881
  %2885 = vset.pattern.permute.xlu0 0
  %2886 = vperm.xlu0 %2885, %v2860
  %v2887 = vpop.permute.xlu0 %2886
  %2890 = vset.pattern.permute.xlu0 0
  %2891 = vperm.xlu0 %2890, %v2861
  %v2892 = vpop.permute.xlu0 %2891
  %2895 = vset.pattern.permute.xlu0 0
  %2896 = vperm.xlu0 %2895, %v2862
  %v2897 = vpop.permute.xlu0 %2896
  %2900 = vset.pattern.permute.xlu0 0
  %2901 = vperm.xlu0 %2900, %v2863
  %v2902 = vpop.permute.xlu0 %2901
  %v2904 = vmul.f32 %v2705, %v2867
  %v2905 = vmul.f32 %v2707, %v2867
  %v2906 = vmul.f32 %v2711, %v2872
  %v2907 = vmul.f32 %v2713, %v2872
  %v2908 = vmul.f32 %v2717, %v2877
  %v2909 = vmul.f32 %v2719, %v2877
  %v2910 = vmul.f32 %v2723, %v2882
  %v2911 = vmul.f32 %v2725, %v2882
  %v2912 = vmul.f32 %v2729, %v2887
  %v2913 = vmul.f32 %v2731, %v2887
  %v2914 = vmul.f32 %v2735, %v2892
  %v2915 = vmul.f32 %v2737, %v2892
  %v2916 = vmul.f32 %v2741, %v2897
  %v2917 = vmul.f32 %v2743, %v2897
  %v2918 = vmul.f32 %v2747, %v2902
  %v2919 = vmul.f32 %v2749, %v2902
  %v2920 = vadd.f32 %v2537, %v2904
  %v2921 = vadd.f32 %v2538, %v2905
  %v2922 = vadd.f32 %v2539, %v2906
  %v2923 = vadd.f32 %v2540, %v2907
  %v2924 = vadd.f32 %v2541, %v2908
  %v2925 = vadd.f32 %v2542, %v2909
  %v2926 = vadd.f32 %v2543, %v2910
  %v2927 = vadd.f32 %v2544, %v2911
  %v2928 = vadd.f32 %v2545, %v2912
  %v2929 = vadd.f32 %v2546, %v2913
  %v2930 = vadd.f32 %v2547, %v2914
  %v2931 = vadd.f32 %v2548, %v2915
  %v2932 = vadd.f32 %v2549, %v2916
  %v2933 = vadd.f32 %v2550, %v2917
  %v2934 = vadd.f32 %v2551, %v2918
  %v2935 = vadd.f32 %v2552, %v2919
  %v2936 = vxor.u32 %v2920, 2147483648
  %v2937 = vxor.u32 %v2921, 2147483648
  %v2938 = vxor.u32 %v2922, 2147483648
  %v2939 = vxor.u32 %v2923, 2147483648
  %v2940 = vxor.u32 %v2924, 2147483648
  %v2941 = vxor.u32 %v2925, 2147483648
  %v2942 = vxor.u32 %v2926, 2147483648
  %v2943 = vxor.u32 %v2927, 2147483648
  %v2944 = vxor.u32 %v2928, 2147483648
  %v2945 = vxor.u32 %v2929, 2147483648
  %v2946 = vxor.u32 %v2930, 2147483648
  %v2947 = vxor.u32 %v2931, 2147483648
  %v2948 = vxor.u32 %v2932, 2147483648
  %v2949 = vxor.u32 %v2933, 2147483648
  %v2950 = vxor.u32 %v2934, 2147483648
  %v2951 = vxor.u32 %v2935, 2147483648
  %v2952 = vmul.f32 %v2936, 1.442695
  %v2953 = vpow.pop %v2952
  %v2954 = vmul.f32 %v2937, 1.442695
  %v2955 = vpow.pop %v2954
  %v2956 = vmul.f32 %v2938, 1.442695
  %v2957 = vpow.pop %v2956
  %v2958 = vmul.f32 %v2939, 1.442695
  %v2959 = vpow.pop %v2958
  %v2960 = vmul.f32 %v2940, 1.442695
  %v2961 = vpow.pop %v2960
  %v2962 = vmul.f32 %v2941, 1.442695
  %v2963 = vpow.pop %v2962
  %v2964 = vmul.f32 %v2942, 1.442695
  %v2965 = vpow.pop %v2964
  %v2966 = vmul.f32 %v2943, 1.442695
  %v2967 = vpow.pop %v2966
  %v2968 = vmul.f32 %v2944, 1.442695
  %v2969 = vpow.pop %v2968
  %v2970 = vmul.f32 %v2945, 1.442695
  %v2971 = vpow.pop %v2970
  %v2972 = vmul.f32 %v2946, 1.442695
  %v2973 = vpow.pop %v2972
  %v2974 = vmul.f32 %v2947, 1.442695
  %v2975 = vpow.pop %v2974
  %v2976 = vmul.f32 %v2948, 1.442695
  %v2977 = vpow.pop %v2976
  %v2978 = vmul.f32 %v2949, 1.442695
  %v2979 = vpow.pop %v2978
  %v2980 = vmul.f32 %v2950, 1.442695
  %v2981 = vpow.pop %v2980
  %v2982 = vmul.f32 %v2951, 1.442695
  %v2983 = vpow.pop %v2982
  %v2984 = vadd.f32 %v2953, 1.0
  %v2985 = vadd.f32 %v2955, 1.0
  %v2986 = vadd.f32 %v2957, 1.0
  %v2987 = vadd.f32 %v2959, 1.0
  %v2988 = vadd.f32 %v2961, 1.0
  %v2989 = vadd.f32 %v2963, 1.0
  %v2990 = vadd.f32 %v2965, 1.0
  %v2991 = vadd.f32 %v2967, 1.0
  %v2992 = vadd.f32 %v2969, 1.0
  %v2993 = vadd.f32 %v2971, 1.0
  %v2994 = vadd.f32 %v2973, 1.0
  %v2995 = vadd.f32 %v2975, 1.0
  %v2996 = vadd.f32 %v2977, 1.0
  %v2997 = vadd.f32 %v2979, 1.0
  %v2998 = vadd.f32 %v2981, 1.0
  %v2999 = vadd.f32 %v2983, 1.0
  %v3000 = vrcp.pop %v2984
  %v3001 = vmul.f32 1.0, %v3000
  %v3002 = vrcp.pop %v2985
  %v3003 = vmul.f32 1.0, %v3002
  %v3004 = vrcp.pop %v2986
  %v3005 = vmul.f32 1.0, %v3004
  %v3006 = vrcp.pop %v2987
  %v3007 = vmul.f32 1.0, %v3006
  %v3008 = vrcp.pop %v2988
  %v3009 = vmul.f32 1.0, %v3008
  %v3010 = vrcp.pop %v2989
  %v3011 = vmul.f32 1.0, %v3010
  %v3012 = vrcp.pop %v2990
  %v3013 = vmul.f32 1.0, %v3012
  %v3014 = vrcp.pop %v2991
  %v3015 = vmul.f32 1.0, %v3014
  %v3016 = vrcp.pop %v2992
  %v3017 = vmul.f32 1.0, %v3016
  %v3018 = vrcp.pop %v2993
  %v3019 = vmul.f32 1.0, %v3018
  %v3020 = vrcp.pop %v2994
  %v3021 = vmul.f32 1.0, %v3020
  %v3022 = vrcp.pop %v2995
  %v3023 = vmul.f32 1.0, %v3022
  %v3024 = vrcp.pop %v2996
  %v3025 = vmul.f32 1.0, %v3024
  %v3026 = vrcp.pop %v2997
  %v3027 = vmul.f32 1.0, %v3026
  %v3028 = vrcp.pop %v2998
  %v3029 = vmul.f32 1.0, %v3028
  %v3030 = vrcp.pop %v2999
  %v3031 = vmul.f32 1.0, %v3030
  %v3032 = vmul.f32 %v39, %v3001
  %v3033 = vmul.f32 %v40, %v3003
  %v3034 = vmul.f32 %v41, %v3005
  %v3035 = vmul.f32 %v42, %v3007
  %v3036 = vmul.f32 %v43, %v3009
  %v3037 = vmul.f32 %v44, %v3011
  %v3038 = vmul.f32 %v45, %v3013
  %v3039 = vmul.f32 %v46, %v3015
  %v3040 = vmul.f32 %v47, %v3017
  %v3041 = vmul.f32 %v48, %v3019
  %v3042 = vmul.f32 %v49, %v3021
  %v3043 = vmul.f32 %v50, %v3023
  %v3044 = vmul.f32 %v51, %v3025
  %v3045 = vmul.f32 %v52, %v3027
  %v3046 = vmul.f32 %v53, %v3029
  %v3047 = vmul.f32 %v54, %v3031
  %v3048 = vadd.f32 %v3032, %v39
  %v3049 = vadd.f32 %v3033, %v40
  %v3050 = vadd.f32 %v3034, %v41
  %v3051 = vadd.f32 %v3035, %v42
  %v3052 = vadd.f32 %v3036, %v43
  %v3053 = vadd.f32 %v3037, %v44
  %v3054 = vadd.f32 %v3038, %v45
  %v3055 = vadd.f32 %v3039, %v46
  %v3056 = vadd.f32 %v3040, %v47
  %v3057 = vadd.f32 %v3041, %v48
  %v3058 = vadd.f32 %v3042, %v49
  %v3059 = vadd.f32 %v3043, %v50
  %v3060 = vadd.f32 %v3044, %v51
  %v3061 = vadd.f32 %v3045, %v52
  %v3062 = vadd.f32 %v3046, %v53
  %v3063 = vadd.f32 %v3047, %v54
  %3064 = vst [vmem:[%s11] sm:$0xff] %v3048
  %3065 = vst [vmem:[%s11 + $0x8] sm:$0xff] %v3049
  %3066 = vst [vmem:[%s11 + $0x10] sm:$0xff] %v3050
  %3067 = vst [vmem:[%s11 + $0x18] sm:$0xff] %v3051
  %3068 = vst [vmem:[%s11 + $0x20] sm:$0xff] %v3052
  %3069 = vst [vmem:[%s11 + $0x28] sm:$0xff] %v3053
  %3070 = vst [vmem:[%s11 + $0x30] sm:$0xff] %v3054
  %3071 = vst [vmem:[%s11 + $0x38] sm:$0xff] %v3055
  %3072 = vst [vmem:[%s11 + $0x40] sm:$0xff] %v3056
  %3073 = vst [vmem:[%s11 + $0x48] sm:$0xff] %v3057
  %3074 = vst [vmem:[%s11 + $0x50] sm:$0xff] %v3058
  %3075 = vst [vmem:[%s11 + $0x58] sm:$0xff] %v3059
  %3076 = vst [vmem:[%s11 + $0x60] sm:$0xff] %v3060
  %3077 = vst [vmem:[%s11 + $0x68] sm:$0xff] %v3061
  %3078 = vst [vmem:[%s11 + $0x70] sm:$0xff] %v3062
  %3079 = vst [vmem:[%s11 + $0x78] sm:$0xff] %v3063
  // Predicated region
  $region46: #{ema_pro_forward.1} parent=0 // pred_check
    _
  $region47: #{ema_pro_forward.1} parent=0 // pred_check_branch
    %3081 = sbr.rel (0) target = $region49
  $region48: #{ema_pro_forward.1} parent=0 // pred_region
    _
  $region49: #{ema_pro_forward.1} parent=0 // pred_fallthru
    _
  // Predicated region
  $region50: #{ema_pro_forward.1} parent=0 // pred_check
    _
  $region51: #{ema_pro_forward.1} parent=0 // pred_check_branch
    %3083 = sbr.rel (0) target = $region53
  $region52: #{ema_pro_forward.1} parent=0 // pred_region
    _
  $region53: #{ema_pro_forward.1} parent=0 // pred_fallthru
    _

</llo_original>
